<compile_context>
chip_gen: v7x
topology: tpu7x:2x2x1
jax: 0.10.0
libtpu: 0.0.40
codegen_flags: <defaults>
</compile_context>

<pallas_src>
import jax
import jax.numpy as jnp
from jax.experimental import pallas as pl
from jax.experimental.pallas import tpu as pltpu


def transformer_embedding_kernel(coef_ref, hs_s_ref, hs_e_ref,
                                 m_s_ref, m_e_ref, proj_ref, out_ref):
    """One grid step handles a tile of `tn` tokens for both start/end streams.

    Shapes seen by the kernel:
      coef_ref : (L,)              SMEM   gamma * softmax(mix_weights)
      hs_*_ref : (L, F, tn, H)     VMEM   bf16 per-layer hidden states
      m_*_ref  : (tn, F)           VMEM   float sub-token validity masks
      proj_ref : (H, O_pad)        VMEM   projection weight (lane-dense padded)
      out_ref  : (tn, O_pad)       VMEM
    """
    L = hs_s_ref.shape[0]
    F = hs_s_ref.shape[1]
    coefs = [coef_ref[k] for k in range(L)]   # scalar reads from SMEM

    def mix_pool(hs_ref, mask_ref):
        mask = mask_ref[...]                                   # (tn, F)
        acc = None
        # F-unrolled adds of dense (tn, H) slabs: layer mix then masked add.
        for f in range(F):
            mixed = coefs[0] * hs_ref[0, f].astype(jnp.float32)
            for k in range(1, L):
                mixed = mixed + coefs[k] * hs_ref[k, f].astype(jnp.float32)
            contrib = mixed * mask[:, f:f + 1]                 # (tn, H)
            acc = contrib if acc is None else acc + contrib
        # masked mean: divide by clamp(#valid sub-tokens, 1); divide on the EUP.
        lens = jnp.maximum(jnp.sum(mask, axis=1, keepdims=True), 1.0)
        return acc * pl.reciprocal(lens, approx=True)          # (tn, H)

    # embed = (pooled_end - pooled_start) @ W  -- one MXU matmul, exact by linearity.
    pooled = mix_pool(hs_e_ref, m_e_ref) - mix_pool(hs_s_ref, m_s_ref)
    out_ref[...] = jnp.dot(pooled, proj_ref[...],
                           preferred_element_type=jnp.float32).astype(out_ref.dtype)
    # TODO(synk): only the default pooling='mean' is implemented ('first'/'last'
    # branches of the module are simple slices/gathers and are omitted).


def transformer_embedding(hs_start, hs_end, mask_start, mask_end,
                          mix_weights, gamma, proj_w, *, tn=128,
                          vmem_limit_bytes=64 * 1024 * 1024):
    """hs_*: [L, N, F, H] (bf16 or f32); mask_*: [N, F]; proj_w: [H, O] -> [N, O] f32.

    For BERT-scale shapes, size `tn` by VMEM (≈2 streams × 2 buffers × L·tn·F·H·2B
    for bf16 hidden states): roughly tn≈48-64 on v7x (64 MiB VMEM), 96-128 on
    v6e/v5e with `vmem_limit_bytes` raised accordingly.
    """
    L, N, F, H = hs_start.shape
    O = proj_w.shape[1]

    # Fold gamma and the layer softmax into per-layer coefficients once.
    coef = (gamma[0] * jax.nn.softmax(mix_weights.astype(jnp.float32))
            ).astype(jnp.float32)
    # TODO(synk): mix_dropout on the softmax weights is identity at eval time
    # (default dropout=0.0) and is not implemented here.

    # Pad token axis to a multiple of tn, output width to a lane-dense 128-multiple.
    n_pad = pl.cdiv(N, tn) * tn
    o_pad = pl.cdiv(O, 128) * 128

    def prep_hs(hs):
        # [L, N, F, H] -> [L, F, N_pad, H]: dense (tn, H) trailing tiles,
        # F kept out of the sublane slot.
        hs = jnp.transpose(hs, (0, 2, 1, 3))
        return jnp.pad(hs, ((0, 0), (0, 0), (0, n_pad - N), (0, 0)))

    hs_start_p = prep_hs(hs_start)
    hs_end_p = prep_hs(hs_end)
    mask_start_p = jnp.pad(mask_start.astype(jnp.float32),
                           ((0, n_pad - N), (0, 0)))
    mask_end_p = jnp.pad(mask_end.astype(jnp.float32),
                         ((0, n_pad - N), (0, 0)))
    proj_w_p = jnp.pad(proj_w.astype(jnp.float32), ((0, 0), (0, o_pad - O)))

    smem_spec = pl.BlockSpec(memory_space=pltpu.MemorySpace.SMEM)

    out = pl.pallas_call(
        transformer_embedding_kernel,
        out_shape=jax.ShapeDtypeStruct((n_pad, o_pad), jnp.float32),
        grid_spec=pltpu.PrefetchScalarGridSpec(
            num_scalar_prefetch=0,
            grid=(n_pad // tn,),
            in_specs=[
                smem_spec,                                             # coef (L,)
                pl.BlockSpec((L, F, tn, H), lambda i: (0, 0, i, 0)),   # hs start
                pl.BlockSpec((L, F, tn, H), lambda i: (0, 0, i, 0)),   # hs end
                pl.BlockSpec((tn, F), lambda i: (i, 0)),               # mask start
                pl.BlockSpec((tn, F), lambda i: (i, 0)),               # mask end
                # Grid-invariant projection weight (never re-DMA'd).
                # TODO(synk): on v7x consider pipeline_mode=pl.Buffered(1) here
                # to reclaim the second (unused) weight buffer under 64 MiB VMEM.
                pl.BlockSpec((H, o_pad), lambda i: (0, 0)),
            ],
            out_specs=pl.BlockSpec((tn, o_pad), lambda i: (i, 0)),
        ),
        compiler_params=pltpu.CompilerParams(
            dimension_semantics=("parallel",),
            vmem_limit_bytes=vmem_limit_bytes),
    )(coef, hs_start_p, hs_end_p, mask_start_p, mask_end_p, proj_w_p)

    return out[:N, :O]


def reference(hs_s, hs_e, m_s, m_e, mix_w, gamma, proj_w):
    s = jax.nn.softmax(mix_w)

    def pool(hs, m):
        mix = gamma[0] * jnp.einsum('l,lnfh->nfh', s, hs.astype(jnp.float32))
        mix = mix * m[:, :, None]
        lens = jnp.maximum(m.sum(-1, keepdims=True), 1.0)
        return mix.sum(1) / lens

    return pool(hs_e, m_e) @ proj_w - pool(hs_s, m_s) @ proj_w


if __name__ == "__main__":
    # small shapes consistent with the module's forward
    batch, seq_len, fix_len = 2, 8, 4
    n_layers, hidden, n_out = 4, 32, 64
    N = batch * seq_len

    key = jax.random.PRNGKey(0)
    k_hs_s, k_hs_e, k_m_s, k_m_e, k_w, k_proj = jax.random.split(key, 6)

    # synthetic per-layer BERT hidden states (stand-in for self.bert(...)[-1]),
    # stored in bf16 in HBM (halves the dominant HBM traffic; kernel upcasts).
    hs_start = jax.random.normal(
        k_hs_s, (n_layers, N, fix_len, hidden), jnp.float32).astype(jnp.bfloat16)
    hs_end = jax.random.normal(
        k_hs_e, (n_layers, N, fix_len, hidden), jnp.float32).astype(jnp.bfloat16)

    # sub-token validity masks (first piece always valid)
    mask_start = (jax.random.uniform(k_m_s, (N, fix_len)) > 0.4).astype(jnp.float32)
    mask_end = (jax.random.uniform(k_m_e, (N, fix_len)) > 0.4).astype(jnp.float32)
    mask_start = mask_start.at[:, 0].set(1.0)
    mask_end = mask_end.at[:, 0].set(1.0)

    # parameters: ScalarMix weights/gamma, Linear(hidden, n_out, bias=False)
    mix_weights = 0.1 * jax.random.normal(k_w, (n_layers,), jnp.float32)
    gamma = jnp.array([1.0], jnp.float32)
    proj_w = (jax.random.normal(k_proj, (hidden, n_out), jnp.float32)
              / jnp.sqrt(hidden))

    out_flat = transformer_embedding(hs_start, hs_end, mask_start, mask_end,
                                     mix_weights, gamma, proj_w, tn=128)
    out = out_flat.reshape(batch, seq_len, n_out)
    jax.block_until_ready(out)

    ref = reference(hs_start, hs_end, mask_start, mask_end,
                    mix_weights, gamma, proj_w).reshape(batch, seq_len, n_out)
    assert out.shape == (batch, seq_len, n_out)
    assert jnp.allclose(out, ref, atol=2e-3, rtol=2e-3), "mismatch vs reference"
    print("KERNEL_OK")
</pallas_src>

<mosaic_0001>
module attributes {stable_mosaic.version = 11 : i64} {
  func.func @transformer_embedding_kernel(%arg0: i32, %arg1: memref<4xf32, #tpu.memory_space<smem>>, %arg2: memref<4x4x128x32xbf16, #tpu.memory_space<vmem>>, %arg3: memref<4x4x128x32xbf16, #tpu.memory_space<vmem>>, %arg4: memref<128x4xf32, #tpu.memory_space<vmem>>, %arg5: memref<128x4xf32, #tpu.memory_space<vmem>>, %arg6: memref<32x128xf32, #tpu.memory_space<vmem>>, %arg7: memref<128x128xf32, #tpu.memory_space<vmem>>) attributes {dimension_semantics = [#tpu.dimension_semantics<parallel>], iteration_bounds = array<i64: 1>, scalar_prefetch = 0 : i64, scratch_operands = 0 : i64, tpu.core_type = #tpu.core_type<tc>, window_params = [{transform_indices = @transform_0, window_bounds = array<i64: 4>}, {transform_indices = @transform_1, window_bounds = array<i64: 4, 4, 128, 32>}, {transform_indices = @transform_2, window_bounds = array<i64: 4, 4, 128, 32>}, {transform_indices = @transform_3, window_bounds = array<i64: 128, 4>}, {transform_indices = @transform_4, window_bounds = array<i64: 128, 4>}, {pipeline_mode = #tpu.pipeline_mode<synchronous>, transform_indices = @transform_5, window_bounds = array<i64: 32, 128>}, {transform_indices = @transform_6, window_bounds = array<i64: 128, 128>}]} {
    %c0 = arith.constant 0 : index
    %0 = memref.load %arg1[%c0] : memref<4xf32, #tpu.memory_space<smem>>
    %c1 = arith.constant 1 : index
    %1 = memref.load %arg1[%c1] : memref<4xf32, #tpu.memory_space<smem>>
    %c2 = arith.constant 2 : index
    %2 = memref.load %arg1[%c2] : memref<4xf32, #tpu.memory_space<smem>>
    %c3 = arith.constant 3 : index
    %3 = memref.load %arg1[%c3] : memref<4xf32, #tpu.memory_space<smem>>
    %c0_0 = arith.constant 0 : index
    %c0_1 = arith.constant 0 : index
    %4 = vector.load %arg5[%c0_0, %c0_1] : memref<128x4xf32, #tpu.memory_space<vmem>>, vector<128x4xf32>
    %c0_2 = arith.constant 0 : index
    %c0_3 = arith.constant 0 : index
    %c0_4 = arith.constant 0 : index
    %c0_5 = arith.constant 0 : index
    %5 = vector.load %arg3[%c0_2, %c0_3, %c0_4, %c0_5] : memref<4x4x128x32xbf16, #tpu.memory_space<vmem>>, vector<1x1x128x32xbf16>
    %6 = vector.shape_cast %5 : vector<1x1x128x32xbf16> to vector<128x32xbf16>
    %7 = arith.extf %6 : vector<128x32xbf16> to vector<128x32xf32>
    %8 = vector.broadcast %0 : f32 to vector<128x32xf32>
    %9 = arith.mulf %8, %7 : vector<128x32xf32>
    %c1_6 = arith.constant 1 : index
    %c0_7 = arith.constant 0 : index
    %c0_8 = arith.constant 0 : index
    %c0_9 = arith.constant 0 : index
    %10 = vector.load %arg3[%c1_6, %c0_7, %c0_8, %c0_9] : memref<4x4x128x32xbf16, #tpu.memory_space<vmem>>, vector<1x1x128x32xbf16>
    %11 = vector.shape_cast %10 : vector<1x1x128x32xbf16> to vector<128x32xbf16>
    %12 = arith.extf %11 : vector<128x32xbf16> to vector<128x32xf32>
    %13 = vector.broadcast %1 : f32 to vector<128x32xf32>
    %14 = arith.mulf %13, %12 : vector<128x32xf32>
    %15 = arith.addf %9, %14 : vector<128x32xf32>
    %c2_10 = arith.constant 2 : index
    %c0_11 = arith.constant 0 : index
    %c0_12 = arith.constant 0 : index
    %c0_13 = arith.constant 0 : index
    %16 = vector.load %arg3[%c2_10, %c0_11, %c0_12, %c0_13] : memref<4x4x128x32xbf16, #tpu.memory_space<vmem>>, vector<1x1x128x32xbf16>
    %17 = vector.shape_cast %16 : vector<1x1x128x32xbf16> to vector<128x32xbf16>
    %18 = arith.extf %17 : vector<128x32xbf16> to vector<128x32xf32>
    %19 = vector.broadcast %2 : f32 to vector<128x32xf32>
    %20 = arith.mulf %19, %18 : vector<128x32xf32>
    %21 = arith.addf %15, %20 : vector<128x32xf32>
    %c3_14 = arith.constant 3 : index
    %c0_15 = arith.constant 0 : index
    %c0_16 = arith.constant 0 : index
    %c0_17 = arith.constant 0 : index
    %22 = vector.load %arg3[%c3_14, %c0_15, %c0_16, %c0_17] : memref<4x4x128x32xbf16, #tpu.memory_space<vmem>>, vector<1x1x128x32xbf16>
    %23 = vector.shape_cast %22 : vector<1x1x128x32xbf16> to vector<128x32xbf16>
    %24 = arith.extf %23 : vector<128x32xbf16> to vector<128x32xf32>
    %25 = vector.broadcast %3 : f32 to vector<128x32xf32>
    %26 = arith.mulf %25, %24 : vector<128x32xf32>
    %27 = arith.addf %21, %26 : vector<128x32xf32>
    %28 = vector.extract_strided_slice %4 {offsets = [0, 0], sizes = [128, 1], strides = [1, 1]} : vector<128x4xf32> to vector<128x1xf32>
    %29 = vector.broadcast %28 : vector<128x1xf32> to vector<128x32xf32>
    %30 = arith.mulf %27, %29 : vector<128x32xf32>
    %c0_18 = arith.constant 0 : index
    %c1_19 = arith.constant 1 : index
    %c0_20 = arith.constant 0 : index
    %c0_21 = arith.constant 0 : index
    %31 = vector.load %arg3[%c0_18, %c1_19, %c0_20, %c0_21] : memref<4x4x128x32xbf16, #tpu.memory_space<vmem>>, vector<1x1x128x32xbf16>
    %32 = vector.shape_cast %31 : vector<1x1x128x32xbf16> to vector<128x32xbf16>
    %33 = arith.extf %32 : vector<128x32xbf16> to vector<128x32xf32>
    %34 = vector.broadcast %0 : f32 to vector<128x32xf32>
    %35 = arith.mulf %34, %33 : vector<128x32xf32>
    %c1_22 = arith.constant 1 : index
    %c1_23 = arith.constant 1 : index
    %c0_24 = arith.constant 0 : index
    %c0_25 = arith.constant 0 : index
    %36 = vector.load %arg3[%c1_22, %c1_23, %c0_24, %c0_25] : memref<4x4x128x32xbf16, #tpu.memory_space<vmem>>, vector<1x1x128x32xbf16>
    %37 = vector.shape_cast %36 : vector<1x1x128x32xbf16> to vector<128x32xbf16>
    %38 = arith.extf %37 : vector<128x32xbf16> to vector<128x32xf32>
    %39 = vector.broadcast %1 : f32 to vector<128x32xf32>
    %40 = arith.mulf %39, %38 : vector<128x32xf32>
    %41 = arith.addf %35, %40 : vector<128x32xf32>
    %c2_26 = arith.constant 2 : index
    %c1_27 = arith.constant 1 : index
    %c0_28 = arith.constant 0 : index
    %c0_29 = arith.constant 0 : index
    %42 = vector.load %arg3[%c2_26, %c1_27, %c0_28, %c0_29] : memref<4x4x128x32xbf16, #tpu.memory_space<vmem>>, vector<1x1x128x32xbf16>
    %43 = vector.shape_cast %42 : vector<1x1x128x32xbf16> to vector<128x32xbf16>
    %44 = arith.extf %43 : vector<128x32xbf16> to vector<128x32xf32>
    %45 = vector.broadcast %2 : f32 to vector<128x32xf32>
    %46 = arith.mulf %45, %44 : vector<128x32xf32>
    %47 = arith.addf %41, %46 : vector<128x32xf32>
    %c3_30 = arith.constant 3 : index
    %c1_31 = arith.constant 1 : index
    %c0_32 = arith.constant 0 : index
    %c0_33 = arith.constant 0 : index
    %48 = vector.load %arg3[%c3_30, %c1_31, %c0_32, %c0_33] : memref<4x4x128x32xbf16, #tpu.memory_space<vmem>>, vector<1x1x128x32xbf16>
    %49 = vector.shape_cast %48 : vector<1x1x128x32xbf16> to vector<128x32xbf16>
    %50 = arith.extf %49 : vector<128x32xbf16> to vector<128x32xf32>
    %51 = vector.broadcast %3 : f32 to vector<128x32xf32>
    %52 = arith.mulf %51, %50 : vector<128x32xf32>
    %53 = arith.addf %47, %52 : vector<128x32xf32>
    %54 = vector.extract_strided_slice %4 {offsets = [0, 1], sizes = [128, 1], strides = [1, 1]} : vector<128x4xf32> to vector<128x1xf32>
    %55 = vector.broadcast %54 : vector<128x1xf32> to vector<128x32xf32>
    %56 = arith.mulf %53, %55 : vector<128x32xf32>
    %57 = arith.addf %30, %56 : vector<128x32xf32>
    %c0_34 = arith.constant 0 : index
    %c2_35 = arith.constant 2 : index
    %c0_36 = arith.constant 0 : index
    %c0_37 = arith.constant 0 : index
    %58 = vector.load %arg3[%c0_34, %c2_35, %c0_36, %c0_37] : memref<4x4x128x32xbf16, #tpu.memory_space<vmem>>, vector<1x1x128x32xbf16>
    %59 = vector.shape_cast %58 : vector<1x1x128x32xbf16> to vector<128x32xbf16>
    %60 = arith.extf %59 : vector<128x32xbf16> to vector<128x32xf32>
    %61 = vector.broadcast %0 : f32 to vector<128x32xf32>
    %62 = arith.mulf %61, %60 : vector<128x32xf32>
    %c1_38 = arith.constant 1 : index
    %c2_39 = arith.constant 2 : index
    %c0_40 = arith.constant 0 : index
    %c0_41 = arith.constant 0 : index
    %63 = vector.load %arg3[%c1_38, %c2_39, %c0_40, %c0_41] : memref<4x4x128x32xbf16, #tpu.memory_space<vmem>>, vector<1x1x128x32xbf16>
    %64 = vector.shape_cast %63 : vector<1x1x128x32xbf16> to vector<128x32xbf16>
    %65 = arith.extf %64 : vector<128x32xbf16> to vector<128x32xf32>
    %66 = vector.broadcast %1 : f32 to vector<128x32xf32>
    %67 = arith.mulf %66, %65 : vector<128x32xf32>
    %68 = arith.addf %62, %67 : vector<128x32xf32>
    %c2_42 = arith.constant 2 : index
    %c2_43 = arith.constant 2 : index
    %c0_44 = arith.constant 0 : index
    %c0_45 = arith.constant 0 : index
    %69 = vector.load %arg3[%c2_42, %c2_43, %c0_44, %c0_45] : memref<4x4x128x32xbf16, #tpu.memory_space<vmem>>, vector<1x1x128x32xbf16>
    %70 = vector.shape_cast %69 : vector<1x1x128x32xbf16> to vector<128x32xbf16>
    %71 = arith.extf %70 : vector<128x32xbf16> to vector<128x32xf32>
    %72 = vector.broadcast %2 : f32 to vector<128x32xf32>
    %73 = arith.mulf %72, %71 : vector<128x32xf32>
    %74 = arith.addf %68, %73 : vector<128x32xf32>
    %c3_46 = arith.constant 3 : index
    %c2_47 = arith.constant 2 : index
    %c0_48 = arith.constant 0 : index
    %c0_49 = arith.constant 0 : index
    %75 = vector.load %arg3[%c3_46, %c2_47, %c0_48, %c0_49] : memref<4x4x128x32xbf16, #tpu.memory_space<vmem>>, vector<1x1x128x32xbf16>
    %76 = vector.shape_cast %75 : vector<1x1x128x32xbf16> to vector<128x32xbf16>
    %77 = arith.extf %76 : vector<128x32xbf16> to vector<128x32xf32>
    %78 = vector.broadcast %3 : f32 to vector<128x32xf32>
    %79 = arith.mulf %78, %77 : vector<128x32xf32>
    %80 = arith.addf %74, %79 : vector<128x32xf32>
    %81 = vector.extract_strided_slice %4 {offsets = [0, 2], sizes = [128, 1], strides = [1, 1]} : vector<128x4xf32> to vector<128x1xf32>
    %82 = vector.broadcast %81 : vector<128x1xf32> to vector<128x32xf32>
    %83 = arith.mulf %80, %82 : vector<128x32xf32>
    %84 = arith.addf %57, %83 : vector<128x32xf32>
    %c0_50 = arith.constant 0 : index
    %c3_51 = arith.constant 3 : index
    %c0_52 = arith.constant 0 : index
    %c0_53 = arith.constant 0 : index
    %85 = vector.load %arg3[%c0_50, %c3_51, %c0_52, %c0_53] : memref<4x4x128x32xbf16, #tpu.memory_space<vmem>>, vector<1x1x128x32xbf16>
    %86 = vector.shape_cast %85 : vector<1x1x128x32xbf16> to vector<128x32xbf16>
    %87 = arith.extf %86 : vector<128x32xbf16> to vector<128x32xf32>
    %88 = vector.broadcast %0 : f32 to vector<128x32xf32>
    %89 = arith.mulf %88, %87 : vector<128x32xf32>
    %c1_54 = arith.constant 1 : index
    %c3_55 = arith.constant 3 : index
    %c0_56 = arith.constant 0 : index
    %c0_57 = arith.constant 0 : index
    %90 = vector.load %arg3[%c1_54, %c3_55, %c0_56, %c0_57] : memref<4x4x128x32xbf16, #tpu.memory_space<vmem>>, vector<1x1x128x32xbf16>
    %91 = vector.shape_cast %90 : vector<1x1x128x32xbf16> to vector<128x32xbf16>
    %92 = arith.extf %91 : vector<128x32xbf16> to vector<128x32xf32>
    %93 = vector.broadcast %1 : f32 to vector<128x32xf32>
    %94 = arith.mulf %93, %92 : vector<128x32xf32>
    %95 = arith.addf %89, %94 : vector<128x32xf32>
    %c2_58 = arith.constant 2 : index
    %c3_59 = arith.constant 3 : index
    %c0_60 = arith.constant 0 : index
    %c0_61 = arith.constant 0 : index
    %96 = vector.load %arg3[%c2_58, %c3_59, %c0_60, %c0_61] : memref<4x4x128x32xbf16, #tpu.memory_space<vmem>>, vector<1x1x128x32xbf16>
    %97 = vector.shape_cast %96 : vector<1x1x128x32xbf16> to vector<128x32xbf16>
    %98 = arith.extf %97 : vector<128x32xbf16> to vector<128x32xf32>
    %99 = vector.broadcast %2 : f32 to vector<128x32xf32>
    %100 = arith.mulf %99, %98 : vector<128x32xf32>
    %101 = arith.addf %95, %100 : vector<128x32xf32>
    %c3_62 = arith.constant 3 : index
    %c3_63 = arith.constant 3 : index
    %c0_64 = arith.constant 0 : index
    %c0_65 = arith.constant 0 : index
    %102 = vector.load %arg3[%c3_62, %c3_63, %c0_64, %c0_65] : memref<4x4x128x32xbf16, #tpu.memory_space<vmem>>, vector<1x1x128x32xbf16>
    %103 = vector.shape_cast %102 : vector<1x1x128x32xbf16> to vector<128x32xbf16>
    %104 = arith.extf %103 : vector<128x32xbf16> to vector<128x32xf32>
    %105 = vector.broadcast %3 : f32 to vector<128x32xf32>
    %106 = arith.mulf %105, %104 : vector<128x32xf32>
    %107 = arith.addf %101, %106 : vector<128x32xf32>
    %108 = vector.extract_strided_slice %4 {offsets = [0, 3], sizes = [128, 1], strides = [1, 1]} : vector<128x4xf32> to vector<128x1xf32>
    %109 = vector.broadcast %108 : vector<128x1xf32> to vector<128x32xf32>
    %110 = arith.mulf %107, %109 : vector<128x32xf32>
    %111 = arith.addf %84, %110 : vector<128x32xf32>
    %cst = arith.constant dense<0.000000e+00> : vector<128xf32>
    %112 = vector.multi_reduction <add>, %4, %cst [1] : vector<128x4xf32> to vector<128xf32>
    %113 = vector.shape_cast %112 : vector<128xf32> to vector<128x1xf32>
    %cst_66 = arith.constant 1.000000e+00 : f32
    %114 = vector.broadcast %cst_66 : f32 to vector<128x1xf32>
    %115 = arith.maximumf %113, %114 : vector<128x1xf32>
    %116 = tpu.reciprocal %115 {approx = true} : vector<128x1xf32> -> vector<128x1xf32>
    %117 = vector.broadcast %116 : vector<128x1xf32> to vector<128x32xf32>
    %118 = arith.mulf %111, %117 : vector<128x32xf32>
    %c0_67 = arith.constant 0 : index
    %c0_68 = arith.constant 0 : index
    %119 = vector.load %arg4[%c0_67, %c0_68] : memref<128x4xf32, #tpu.memory_space<vmem>>, vector<128x4xf32>
    %c0_69 = arith.constant 0 : index
    %c0_70 = arith.constant 0 : index
    %c0_71 = arith.constant 0 : index
    %c0_72 = arith.constant 0 : index
    %120 = vector.load %arg2[%c0_69, %c0_70, %c0_71, %c0_72] : memref<4x4x128x32xbf16, #tpu.memory_space<vmem>>, vector<1x1x128x32xbf16>
    %121 = vector.shape_cast %120 : vector<1x1x128x32xbf16> to vector<128x32xbf16>
    %122 = arith.extf %121 : vector<128x32xbf16> to vector<128x32xf32>
    %123 = vector.broadcast %0 : f32 to vector<128x32xf32>
    %124 = arith.mulf %123, %122 : vector<128x32xf32>
    %c1_73 = arith.constant 1 : index
    %c0_74 = arith.constant 0 : index
    %c0_75 = arith.constant 0 : index
    %c0_76 = arith.constant 0 : index
    %125 = vector.load %arg2[%c1_73, %c0_74, %c0_75, %c0_76] : memref<4x4x128x32xbf16, #tpu.memory_space<vmem>>, vector<1x1x128x32xbf16>
    %126 = vector.shape_cast %125 : vector<1x1x128x32xbf16> to vector<128x32xbf16>
    %127 = arith.extf %126 : vector<128x32xbf16> to vector<128x32xf32>
    %128 = vector.broadcast %1 : f32 to vector<128x32xf32>
    %129 = arith.mulf %128, %127 : vector<128x32xf32>
    %130 = arith.addf %124, %129 : vector<128x32xf32>
    %c2_77 = arith.constant 2 : index
    %c0_78 = arith.constant 0 : index
    %c0_79 = arith.constant 0 : index
    %c0_80 = arith.constant 0 : index
    %131 = vector.load %arg2[%c2_77, %c0_78, %c0_79, %c0_80] : memref<4x4x128x32xbf16, #tpu.memory_space<vmem>>, vector<1x1x128x32xbf16>
    %132 = vector.shape_cast %131 : vector<1x1x128x32xbf16> to vector<128x32xbf16>
    %133 = arith.extf %132 : vector<128x32xbf16> to vector<128x32xf32>
    %134 = vector.broadcast %2 : f32 to vector<128x32xf32>
    %135 = arith.mulf %134, %133 : vector<128x32xf32>
    %136 = arith.addf %130, %135 : vector<128x32xf32>
    %c3_81 = arith.constant 3 : index
    %c0_82 = arith.constant 0 : index
    %c0_83 = arith.constant 0 : index
    %c0_84 = arith.constant 0 : index
    %137 = vector.load %arg2[%c3_81, %c0_82, %c0_83, %c0_84] : memref<4x4x128x32xbf16, #tpu.memory_space<vmem>>, vector<1x1x128x32xbf16>
    %138 = vector.shape_cast %137 : vector<1x1x128x32xbf16> to vector<128x32xbf16>
    %139 = arith.extf %138 : vector<128x32xbf16> to vector<128x32xf32>
    %140 = vector.broadcast %3 : f32 to vector<128x32xf32>
    %141 = arith.mulf %140, %139 : vector<128x32xf32>
    %142 = arith.addf %136, %141 : vector<128x32xf32>
    %143 = vector.extract_strided_slice %119 {offsets = [0, 0], sizes = [128, 1], strides = [1, 1]} : vector<128x4xf32> to vector<128x1xf32>
    %144 = vector.broadcast %143 : vector<128x1xf32> to vector<128x32xf32>
    %145 = arith.mulf %142, %144 : vector<128x32xf32>
    %c0_85 = arith.constant 0 : index
    %c1_86 = arith.constant 1 : index
    %c0_87 = arith.constant 0 : index
    %c0_88 = arith.constant 0 : index
    %146 = vector.load %arg2[%c0_85, %c1_86, %c0_87, %c0_88] : memref<4x4x128x32xbf16, #tpu.memory_space<vmem>>, vector<1x1x128x32xbf16>
    %147 = vector.shape_cast %146 : vector<1x1x128x32xbf16> to vector<128x32xbf16>
    %148 = arith.extf %147 : vector<128x32xbf16> to vector<128x32xf32>
    %149 = vector.broadcast %0 : f32 to vector<128x32xf32>
    %150 = arith.mulf %149, %148 : vector<128x32xf32>
    %c1_89 = arith.constant 1 : index
    %c1_90 = arith.constant 1 : index
    %c0_91 = arith.constant 0 : index
    %c0_92 = arith.constant 0 : index
    %151 = vector.load %arg2[%c1_89, %c1_90, %c0_91, %c0_92] : memref<4x4x128x32xbf16, #tpu.memory_space<vmem>>, vector<1x1x128x32xbf16>
    %152 = vector.shape_cast %151 : vector<1x1x128x32xbf16> to vector<128x32xbf16>
    %153 = arith.extf %152 : vector<128x32xbf16> to vector<128x32xf32>
    %154 = vector.broadcast %1 : f32 to vector<128x32xf32>
    %155 = arith.mulf %154, %153 : vector<128x32xf32>
    %156 = arith.addf %150, %155 : vector<128x32xf32>
    %c2_93 = arith.constant 2 : index
    %c1_94 = arith.constant 1 : index
    %c0_95 = arith.constant 0 : index
    %c0_96 = arith.constant 0 : index
    %157 = vector.load %arg2[%c2_93, %c1_94, %c0_95, %c0_96] : memref<4x4x128x32xbf16, #tpu.memory_space<vmem>>, vector<1x1x128x32xbf16>
    %158 = vector.shape_cast %157 : vector<1x1x128x32xbf16> to vector<128x32xbf16>
    %159 = arith.extf %158 : vector<128x32xbf16> to vector<128x32xf32>
    %160 = vector.broadcast %2 : f32 to vector<128x32xf32>
    %161 = arith.mulf %160, %159 : vector<128x32xf32>
    %162 = arith.addf %156, %161 : vector<128x32xf32>
    %c3_97 = arith.constant 3 : index
    %c1_98 = arith.constant 1 : index
    %c0_99 = arith.constant 0 : index
    %c0_100 = arith.constant 0 : index
    %163 = vector.load %arg2[%c3_97, %c1_98, %c0_99, %c0_100] : memref<4x4x128x32xbf16, #tpu.memory_space<vmem>>, vector<1x1x128x32xbf16>
    %164 = vector.shape_cast %163 : vector<1x1x128x32xbf16> to vector<128x32xbf16>
    %165 = arith.extf %164 : vector<128x32xbf16> to vector<128x32xf32>
    %166 = vector.broadcast %3 : f32 to vector<128x32xf32>
    %167 = arith.mulf %166, %165 : vector<128x32xf32>
    %168 = arith.addf %162, %167 : vector<128x32xf32>
    %169 = vector.extract_strided_slice %119 {offsets = [0, 1], sizes = [128, 1], strides = [1, 1]} : vector<128x4xf32> to vector<128x1xf32>
    %170 = vector.broadcast %169 : vector<128x1xf32> to vector<128x32xf32>
    %171 = arith.mulf %168, %170 : vector<128x32xf32>
    %172 = arith.addf %145, %171 : vector<128x32xf32>
    %c0_101 = arith.constant 0 : index
    %c2_102 = arith.constant 2 : index
    %c0_103 = arith.constant 0 : index
    %c0_104 = arith.constant 0 : index
    %173 = vector.load %arg2[%c0_101, %c2_102, %c0_103, %c0_104] : memref<4x4x128x32xbf16, #tpu.memory_space<vmem>>, vector<1x1x128x32xbf16>
    %174 = vector.shape_cast %173 : vector<1x1x128x32xbf16> to vector<128x32xbf16>
    %175 = arith.extf %174 : vector<128x32xbf16> to vector<128x32xf32>
    %176 = vector.broadcast %0 : f32 to vector<128x32xf32>
    %177 = arith.mulf %176, %175 : vector<128x32xf32>
    %c1_105 = arith.constant 1 : index
    %c2_106 = arith.constant 2 : index
    %c0_107 = arith.constant 0 : index
    %c0_108 = arith.constant 0 : index
    %178 = vector.load %arg2[%c1_105, %c2_106, %c0_107, %c0_108] : memref<4x4x128x32xbf16, #tpu.memory_space<vmem>>, vector<1x1x128x32xbf16>
    %179 = vector.shape_cast %178 : vector<1x1x128x32xbf16> to vector<128x32xbf16>
    %180 = arith.extf %179 : vector<128x32xbf16> to vector<128x32xf32>
    %181 = vector.broadcast %1 : f32 to vector<128x32xf32>
    %182 = arith.mulf %181, %180 : vector<128x32xf32>
    %183 = arith.addf %177, %182 : vector<128x32xf32>
    %c2_109 = arith.constant 2 : index
    %c2_110 = arith.constant 2 : index
    %c0_111 = arith.constant 0 : index
    %c0_112 = arith.constant 0 : index
    %184 = vector.load %arg2[%c2_109, %c2_110, %c0_111, %c0_112] : memref<4x4x128x32xbf16, #tpu.memory_space<vmem>>, vector<1x1x128x32xbf16>
    %185 = vector.shape_cast %184 : vector<1x1x128x32xbf16> to vector<128x32xbf16>
    %186 = arith.extf %185 : vector<128x32xbf16> to vector<128x32xf32>
    %187 = vector.broadcast %2 : f32 to vector<128x32xf32>
    %188 = arith.mulf %187, %186 : vector<128x32xf32>
    %189 = arith.addf %183, %188 : vector<128x32xf32>
    %c3_113 = arith.constant 3 : index
    %c2_114 = arith.constant 2 : index
    %c0_115 = arith.constant 0 : index
    %c0_116 = arith.constant 0 : index
    %190 = vector.load %arg2[%c3_113, %c2_114, %c0_115, %c0_116] : memref<4x4x128x32xbf16, #tpu.memory_space<vmem>>, vector<1x1x128x32xbf16>
    %191 = vector.shape_cast %190 : vector<1x1x128x32xbf16> to vector<128x32xbf16>
    %192 = arith.extf %191 : vector<128x32xbf16> to vector<128x32xf32>
    %193 = vector.broadcast %3 : f32 to vector<128x32xf32>
    %194 = arith.mulf %193, %192 : vector<128x32xf32>
    %195 = arith.addf %189, %194 : vector<128x32xf32>
    %196 = vector.extract_strided_slice %119 {offsets = [0, 2], sizes = [128, 1], strides = [1, 1]} : vector<128x4xf32> to vector<128x1xf32>
    %197 = vector.broadcast %196 : vector<128x1xf32> to vector<128x32xf32>
    %198 = arith.mulf %195, %197 : vector<128x32xf32>
    %199 = arith.addf %172, %198 : vector<128x32xf32>
    %c0_117 = arith.constant 0 : index
    %c3_118 = arith.constant 3 : index
    %c0_119 = arith.constant 0 : index
    %c0_120 = arith.constant 0 : index
    %200 = vector.load %arg2[%c0_117, %c3_118, %c0_119, %c0_120] : memref<4x4x128x32xbf16, #tpu.memory_space<vmem>>, vector<1x1x128x32xbf16>
    %201 = vector.shape_cast %200 : vector<1x1x128x32xbf16> to vector<128x32xbf16>
    %202 = arith.extf %201 : vector<128x32xbf16> to vector<128x32xf32>
    %203 = vector.broadcast %0 : f32 to vector<128x32xf32>
    %204 = arith.mulf %203, %202 : vector<128x32xf32>
    %c1_121 = arith.constant 1 : index
    %c3_122 = arith.constant 3 : index
    %c0_123 = arith.constant 0 : index
    %c0_124 = arith.constant 0 : index
    %205 = vector.load %arg2[%c1_121, %c3_122, %c0_123, %c0_124] : memref<4x4x128x32xbf16, #tpu.memory_space<vmem>>, vector<1x1x128x32xbf16>
    %206 = vector.shape_cast %205 : vector<1x1x128x32xbf16> to vector<128x32xbf16>
    %207 = arith.extf %206 : vector<128x32xbf16> to vector<128x32xf32>
    %208 = vector.broadcast %1 : f32 to vector<128x32xf32>
    %209 = arith.mulf %208, %207 : vector<128x32xf32>
    %210 = arith.addf %204, %209 : vector<128x32xf32>
    %c2_125 = arith.constant 2 : index
    %c3_126 = arith.constant 3 : index
    %c0_127 = arith.constant 0 : index
    %c0_128 = arith.constant 0 : index
    %211 = vector.load %arg2[%c2_125, %c3_126, %c0_127, %c0_128] : memref<4x4x128x32xbf16, #tpu.memory_space<vmem>>, vector<1x1x128x32xbf16>
    %212 = vector.shape_cast %211 : vector<1x1x128x32xbf16> to vector<128x32xbf16>
    %213 = arith.extf %212 : vector<128x32xbf16> to vector<128x32xf32>
    %214 = vector.broadcast %2 : f32 to vector<128x32xf32>
    %215 = arith.mulf %214, %213 : vector<128x32xf32>
    %216 = arith.addf %210, %215 : vector<128x32xf32>
    %c3_129 = arith.constant 3 : index
    %c3_130 = arith.constant 3 : index
    %c0_131 = arith.constant 0 : index
    %c0_132 = arith.constant 0 : index
    %217 = vector.load %arg2[%c3_129, %c3_130, %c0_131, %c0_132] : memref<4x4x128x32xbf16, #tpu.memory_space<vmem>>, vector<1x1x128x32xbf16>
    %218 = vector.shape_cast %217 : vector<1x1x128x32xbf16> to vector<128x32xbf16>
    %219 = arith.extf %218 : vector<128x32xbf16> to vector<128x32xf32>
    %220 = vector.broadcast %3 : f32 to vector<128x32xf32>
    %221 = arith.mulf %220, %219 : vector<128x32xf32>
    %222 = arith.addf %216, %221 : vector<128x32xf32>
    %223 = vector.extract_strided_slice %119 {offsets = [0, 3], sizes = [128, 1], strides = [1, 1]} : vector<128x4xf32> to vector<128x1xf32>
    %224 = vector.broadcast %223 : vector<128x1xf32> to vector<128x32xf32>
    %225 = arith.mulf %222, %224 : vector<128x32xf32>
    %226 = arith.addf %199, %225 : vector<128x32xf32>
    %cst_133 = arith.constant dense<0.000000e+00> : vector<128xf32>
    %227 = vector.multi_reduction <add>, %119, %cst_133 [1] : vector<128x4xf32> to vector<128xf32>
    %228 = vector.shape_cast %227 : vector<128xf32> to vector<128x1xf32>
    %cst_134 = arith.constant 1.000000e+00 : f32
    %229 = vector.broadcast %cst_134 : f32 to vector<128x1xf32>
    %230 = arith.maximumf %228, %229 : vector<128x1xf32>
    %231 = tpu.reciprocal %230 {approx = true} : vector<128x1xf32> -> vector<128x1xf32>
    %232 = vector.broadcast %231 : vector<128x1xf32> to vector<128x32xf32>
    %233 = arith.mulf %226, %232 : vector<128x32xf32>
    %234 = arith.subf %118, %233 : vector<128x32xf32>
    %c0_135 = arith.constant 0 : index
    %c0_136 = arith.constant 0 : index
    %235 = vector.load %arg6[%c0_135, %c0_136] : memref<32x128xf32, #tpu.memory_space<vmem>>, vector<32x128xf32>
    %cst_137 = arith.constant dense<0.000000e+00> : vector<128x128xf32>
    %236 = tpu.matmul %234, %235, %cst_137 {dimension_numbers = #tpu.dot_dimension_numbers<[1], [0], [0], [1], [0, 0, 1, 1], [], []>} : vector<128x32xf32>, vector<32x128xf32>, vector<128x128xf32> -> vector<128x128xf32>
    %c0_138 = arith.constant 0 : index
    %c0_139 = arith.constant 0 : index
    %237 = vector.load %arg7[%c0_138, %c0_139] : memref<128x128xf32, #tpu.memory_space<vmem>>, vector<128x128xf32>
    tpu.vector_store %arg7[%c0_138, %c0_139], %236 {strides = array<i32>} : memref<128x128xf32, #tpu.memory_space<vmem>>, vector<128x128xf32>,
    return
  }
  func.func @transform_0(%arg0: i32) -> i32 {
    %c0_i32 = arith.constant 0 : i32
    %c0_i32_0 = arith.constant 0 : i32
    return %c0_i32 : i32
  }
  func.func @transform_1(%arg0: i32) -> (i32, i32, i32, i32) {
    %c0_i32 = arith.constant 0 : i32
    %c0_i32_0 = arith.constant 0 : i32
    %c0_i32_1 = arith.constant 0 : i32
    %c0_i32_2 = arith.constant 0 : i32
    return %c0_i32, %c0_i32_0, %arg0, %c0_i32_1 : i32, i32, i32, i32
  }
  func.func @transform_2(%arg0: i32) -> (i32, i32, i32, i32) {
    %c0_i32 = arith.constant 0 : i32
    %c0_i32_0 = arith.constant 0 : i32
    %c0_i32_1 = arith.constant 0 : i32
    %c0_i32_2 = arith.constant 0 : i32
    return %c0_i32, %c0_i32_0, %arg0, %c0_i32_1 : i32, i32, i32, i32
  }
  func.func @transform_3(%arg0: i32) -> (i32, i32) {
    %c0_i32 = arith.constant 0 : i32
    %c0_i32_0 = arith.constant 0 : i32
    return %arg0, %c0_i32 : i32, i32
  }
  func.func @transform_4(%arg0: i32) -> (i32, i32) {
    %c0_i32 = arith.constant 0 : i32
    %c0_i32_0 = arith.constant 0 : i32
    return %arg0, %c0_i32 : i32, i32
  }
  func.func @transform_5(%arg0: i32) -> (i32, i32) {
    %c0_i32 = arith.constant 0 : i32
    %c0_i32_0 = arith.constant 0 : i32
    %c0_i32_1 = arith.constant 0 : i32
    return %c0_i32, %c0_i32_0 : i32, i32
  }
  func.func @transform_6(%arg0: i32) -> (i32, i32) {
    %c0_i32 = arith.constant 0 : i32
    %c0_i32_0 = arith.constant 0 : i32
    return %arg0, %c0_i32 : i32, i32
  }
}

</mosaic_0001>

<llo_original>
// kernel: tpu_custom_call.1
$region0: #{tpu_custom_call.1}
  #allocation0 [shape = 'u32[]', space=smem, size = 0x4, offset = 0x4, fixed_abs, tag = 'smem constant byte address 0x4 - core index']
  #allocation1 [shape = 'u32[144,128]{1,0:T(1,128)}', space=vmem, size = 0x12000, scoped, tag = 'internal scratch']
  %s0 = inlined_call_operand.hbm [shape: f32[4], index: 0, kind: input, shape index: {}]
  %s1 = inlined_call_operand.hbm [shape: bf16[4,4,128,32], index: 1, kind: input, shape index: {}]
  %s2 = inlined_call_operand.hbm [shape: bf16[4,4,128,32], index: 2, kind: input, shape index: {}]
  %s3 = inlined_call_operand.hbm [shape: f32[128,4], index: 3, kind: input, shape index: {}]
  %s4 = inlined_call_operand.hbm [shape: f32[128,4], index: 4, kind: input, shape index: {}]
  %s5 = inlined_call_operand.hbm [shape: f32[32,128], index: 5, kind: input, shape index: {}]
  %s6 = inlined_call_operand.hbm [shape: f32[128,128], index: 6, kind: output, shape index: {}]
  %s7 = sld [smem:[#allocation0]]
  $region58: #{tpu_custom_call.1} parent=0
    _
  %s9 = ssub.s32 1, %s7
  %s10 = scalar_select 0, %s9, %s7
  $region1: #{tpu_custom_call.1} parent=0
    #allocation2 [shape = 'u8[512]{0}', space=smem, size = 0x200, scoped, tag = 'input window, operand 0, single buffered']
    #allocation3 [shape = 's32[1]{0}', space=sflag, size = 0x4, scoped, tag = 'scoped memory for tpu_custom_call.1']
    #allocation4 [shape = 's32[1]{0}', space=sflag, size = 0x4, scoped, tag = 'scoped memory for tpu_custom_call.1']
    #allocation5 [shape = 's32[1]{0}', space=sflag, size = 0x4, scoped, tag = 'scoped memory for tpu_custom_call.1']
    #allocation6 [shape = 'u8[524288]{0}', space=vmem, size = 0x80000, scoped, tag = 'input window, operand 1, single buffered']
    #allocation7 [shape = 'u8[524288]{0}', space=vmem, size = 0x80000, scoped, tag = 'input window, operand 2, single buffered']
    #allocation8 [shape = 's32[1]{0}', space=sflag, size = 0x4, scoped, tag = 'scoped memory for tpu_custom_call.1']
    #allocation9 [shape = 'u8[65536]{0}', space=vmem, size = 0x10000, scoped, tag = 'input window, operand 3, single buffered']
    #allocation10 [shape = 'u8[65536]{0}', space=vmem, size = 0x10000, scoped, tag = 'input window, operand 4, single buffered']
    #allocation11 [shape = 's32[1]{0}', space=sflag, size = 0x4, scoped, tag = 'scoped memory for tpu_custom_call.1']
    #allocation12 [shape = 'u8[16384]{0}', space=vmem, size = 0x4000, scoped, tag = 'input window, operand 5, single buffered']
    #allocation13 [shape = 'u8[65536]{0}', space=vmem, size = 0x10000, scoped, tag = 'output window, operand 0, single buffered']
    %11 = vsyncpa [#allocation5], 0
    %12 = vsyncpa [#allocation3], 0
    %13 = vsyncpa [#allocation8], 0
    %14 = vsyncpa [#allocation11], 0
    %15 = vsyncpa [#allocation4], 0
    // Predicated region
    $region2: #{tpu_custom_call.1} parent=1 // pred_check
      _
    $region3: #{tpu_custom_call.1} parent=1 // pred_check_branch
      %17 = sbr.rel (0) target = $region5
    $region4: #{tpu_custom_call.1} parent=1 // pred_region
      %s19 = ssub.s32 16, 16
      %20 = vsyncadd [#allocation5], %s19
      %23 = dma.hbm_to_smem %s0, 16, [#allocation2], [#allocation5]
    $region5: #{tpu_custom_call.1} parent=1 // pred_fallthru
      _
    // Predicated region
    $region6: #{tpu_custom_call.1} parent=1 // pred_check
      _
    $region7: #{tpu_custom_call.1} parent=1 // pred_check_branch
      %25 = sbr.rel (0) target = $region9
    $region8: #{tpu_custom_call.1} parent=1 // pred_region
      %s27 = ssub.s32 16384, 16384
      %28 = vsyncadd [#allocation3], %s27
      %s29 = sshll.u32 [#allocation6], 4
      %s30 = int_to_ptr.vmem [resolvable:$true] %s29
      %35 = dma.hbm_to_vmem [thread:$0]  %s1, 16384, %s30, [#allocation3], 64, 64, 4
    $region9: #{tpu_custom_call.1} parent=1 // pred_fallthru
      _
    // Predicated region
    $region10: #{tpu_custom_call.1} parent=1 // pred_check
      _
    $region11: #{tpu_custom_call.1} parent=1 // pred_check_branch
      %37 = sbr.rel (0) target = $region13
    $region12: #{tpu_custom_call.1} parent=1 // pred_region
      %s39 = ssub.s32 16384, 16384
      %40 = vsyncadd [#allocation8], %s39
      %s41 = sshll.u32 [#allocation7], 4
      %s42 = int_to_ptr.vmem [resolvable:$true] %s41
      %47 = dma.hbm_to_vmem [thread:$0]  %s2, 16384, %s42, [#allocation8], 64, 64, 4
    $region13: #{tpu_custom_call.1} parent=1 // pred_fallthru
      _
    // Predicated region
    $region14: #{tpu_custom_call.1} parent=1 // pred_check
      _
    $region15: #{tpu_custom_call.1} parent=1 // pred_check_branch
      %49 = sbr.rel (0) target = $region17
    $region16: #{tpu_custom_call.1} parent=1 // pred_region
      %s51 = ssub.s32 2048, 2048
      %52 = vsyncadd [#allocation8], %s51
      %s53 = sshll.u32 [#allocation9], 4
      %s54 = int_to_ptr.vmem [resolvable:$true] %s53
      %59 = dma.hbm_to_vmem [thread:$0]  %s3, 2048, %s54, [#allocation8], 128, 128, 8
    $region17: #{tpu_custom_call.1} parent=1 // pred_fallthru
      _
    // Predicated region
    $region18: #{tpu_custom_call.1} parent=1 // pred_check
      _
    $region19: #{tpu_custom_call.1} parent=1 // pred_check_branch
      %61 = sbr.rel (0) target = $region21
    $region20: #{tpu_custom_call.1} parent=1 // pred_region
      %s63 = ssub.s32 2048, 2048
      %64 = vsyncadd [#allocation11], %s63
      %s65 = sshll.u32 [#allocation10], 4
      %s66 = int_to_ptr.vmem [resolvable:$true] %s65
      %71 = dma.hbm_to_vmem [thread:$0]  %s4, 2048, %s66, [#allocation11], 128, 128, 8
    $region21: #{tpu_custom_call.1} parent=1 // pred_fallthru
      _
    // Predicated region
    $region22: #{tpu_custom_call.1} parent=1 // pred_check
      _
    $region23: #{tpu_custom_call.1} parent=1 // pred_check_branch
      %73 = sbr.rel (0) target = $region25
    $region24: #{tpu_custom_call.1} parent=1 // pred_region
      %s75 = ssub.s32 512, 512
      %76 = vsyncadd [#allocation11], %s75
      %s77 = sshll.u32 [#allocation12], 4
      %s78 = int_to_ptr.vmem [resolvable:$true] %s77
      %83 = dma.hbm_to_vmem [thread:$0]  %s5, 512, %s78, [#allocation11], 128, 128, 8
    $region25: #{tpu_custom_call.1} parent=1 // pred_fallthru
      _
    // Predicated region
    $region26: #{tpu_custom_call.1} parent=1 // pred_check
      _
    $region27: #{tpu_custom_call.1} parent=1 // pred_check_branch
      %85 = sbr.rel (0) target = $region29
    $region28: #{tpu_custom_call.1} parent=1 // pred_region
      %86 = dma.done [#allocation5], 16
    $region29: #{tpu_custom_call.1} parent=1 // pred_fallthru
      _
    // Predicated region
    $region30: #{tpu_custom_call.1} parent=1 // pred_check
      _
    $region31: #{tpu_custom_call.1} parent=1 // pred_check_branch
      %88 = sbr.rel (0) target = $region33
    $region32: #{tpu_custom_call.1} parent=1 // pred_region
      %89 = dma.done [#allocation3], 16384
    $region33: #{tpu_custom_call.1} parent=1 // pred_fallthru
      _
    // Predicated region
    $region34: #{tpu_custom_call.1} parent=1 // pred_check
      _
    $region35: #{tpu_custom_call.1} parent=1 // pred_check_branch
      %91 = sbr.rel (0) target = $region37
    $region36: #{tpu_custom_call.1} parent=1 // pred_region
      %92 = dma.done [#allocation8], 16384
    $region37: #{tpu_custom_call.1} parent=1 // pred_fallthru
      _
    // Predicated region
    $region38: #{tpu_custom_call.1} parent=1 // pred_check
      _
    $region39: #{tpu_custom_call.1} parent=1 // pred_check_branch
      %94 = sbr.rel (0) target = $region41
    $region40: #{tpu_custom_call.1} parent=1 // pred_region
      %95 = dma.done [#allocation8], 2048
    $region41: #{tpu_custom_call.1} parent=1 // pred_fallthru
      _
    // Predicated region
    $region42: #{tpu_custom_call.1} parent=1 // pred_check
      _
    $region43: #{tpu_custom_call.1} parent=1 // pred_check_branch
      %97 = sbr.rel (0) target = $region45
    $region44: #{tpu_custom_call.1} parent=1 // pred_region
      %98 = dma.done [#allocation11], 2048
    $region45: #{tpu_custom_call.1} parent=1 // pred_fallthru
      _
    // Predicated region
    $region46: #{tpu_custom_call.1} parent=1 // pred_check
      _
    $region47: #{tpu_custom_call.1} parent=1 // pred_check_branch
      %100 = sbr.rel (0) target = $region49
    $region48: #{tpu_custom_call.1} parent=1 // pred_region
      %101 = dma.done [#allocation11], 512
    $region49: #{tpu_custom_call.1} parent=1 // pred_fallthru
      _
    %102 = sfence
    %s103 = sld [smem:[#allocation2]]
    %s104 = sld [smem:[#allocation2 + $0x1]]
    %s105 = sld [smem:[#allocation2 + $0x2]]
    %s106 = sld [smem:[#allocation2 + $0x3]]
    %v107 = vld [vmem:[#allocation10] sm:$0xff]
    %v108 = vld [vmem:[#allocation10 + $0x8] sm:$0xff]
    %v109 = vld [vmem:[#allocation10 + $0x10] sm:$0xff]
    %v110 = vld [vmem:[#allocation10 + $0x18] sm:$0xff]
    %v111 = vld [vmem:[#allocation10 + $0x20] sm:$0xff]
    %v112 = vld [vmem:[#allocation10 + $0x28] sm:$0xff]
    %v113 = vld [vmem:[#allocation10 + $0x30] sm:$0xff]
    %v114 = vld [vmem:[#allocation10 + $0x38] sm:$0xff]
    %v115 = vld [vmem:[#allocation10 + $0x40] sm:$0xff]
    %v116 = vld [vmem:[#allocation10 + $0x48] sm:$0xff]
    %v117 = vld [vmem:[#allocation10 + $0x50] sm:$0xff]
    %v118 = vld [vmem:[#allocation10 + $0x58] sm:$0xff]
    %v119 = vld [vmem:[#allocation10 + $0x60] sm:$0xff]
    %v120 = vld [vmem:[#allocation10 + $0x68] sm:$0xff]
    %v121 = vld [vmem:[#allocation10 + $0x70] sm:$0xff]
    %v122 = vld [vmem:[#allocation10 + $0x78] sm:$0xff]
    %v123 = vld [vmem:[#allocation7] sm:$0xf]
    %v124 = vld [vmem:[#allocation7 + $0x4] sm:$0xf]
    %v125 = vld [vmem:[#allocation7 + $0x8] sm:$0xf]
    %v126 = vld [vmem:[#allocation7 + $0xc] sm:$0xf]
    %v127 = vld [vmem:[#allocation7 + $0x10] sm:$0xf]
    %v128 = vld [vmem:[#allocation7 + $0x14] sm:$0xf]
    %v129 = vld [vmem:[#allocation7 + $0x18] sm:$0xf]
    %v130 = vld [vmem:[#allocation7 + $0x1c] sm:$0xf]
    %v131 = vld [vmem:[#allocation7 + $0x20] sm:$0xf]
    %v132 = vld [vmem:[#allocation7 + $0x24] sm:$0xf]
    %v133 = vld [vmem:[#allocation7 + $0x28] sm:$0xf]
    %v134 = vld [vmem:[#allocation7 + $0x2c] sm:$0xf]
    %v135 = vld [vmem:[#allocation7 + $0x30] sm:$0xf]
    %v136 = vld [vmem:[#allocation7 + $0x34] sm:$0xf]
    %v137 = vld [vmem:[#allocation7 + $0x38] sm:$0xf]
    %v138 = vld [vmem:[#allocation7 + $0x3c] sm:$0xf]
    %v139 = vunpack.c.l.bf16 %v123
    %v140 = vunpack.c.l.bf16 %v124
    %v141 = vunpack.c.l.bf16 %v125
    %v142 = vunpack.c.l.bf16 %v126
    %v143 = vunpack.c.l.bf16 %v127
    %v144 = vunpack.c.l.bf16 %v128
    %v145 = vunpack.c.l.bf16 %v129
    %v146 = vunpack.c.l.bf16 %v130
    %v147 = vunpack.c.l.bf16 %v131
    %v148 = vunpack.c.l.bf16 %v132
    %v149 = vunpack.c.l.bf16 %v133
    %v150 = vunpack.c.l.bf16 %v134
    %v151 = vunpack.c.l.bf16 %v135
    %v152 = vunpack.c.l.bf16 %v136
    %v153 = vunpack.c.l.bf16 %v137
    %v154 = vunpack.c.l.bf16 %v138
    %v155 = vstv %s103
    %v156 = vmul.f32 %v155, %v139
    %v157 = vmul.f32 %v155, %v140
    %v158 = vmul.f32 %v155, %v141
    %v159 = vmul.f32 %v155, %v142
    %v160 = vmul.f32 %v155, %v143
    %v161 = vmul.f32 %v155, %v144
    %v162 = vmul.f32 %v155, %v145
    %v163 = vmul.f32 %v155, %v146
    %v164 = vmul.f32 %v155, %v147
    %v165 = vmul.f32 %v155, %v148
    %v166 = vmul.f32 %v155, %v149
    %v167 = vmul.f32 %v155, %v150
    %v168 = vmul.f32 %v155, %v151
    %v169 = vmul.f32 %v155, %v152
    %v170 = vmul.f32 %v155, %v153
    %v171 = vmul.f32 %v155, %v154
    %s172 = scalar_lea.vmem [#allocation7], 256
    %v173 = vld [vmem:[%s172] sm:$0xf]
    %v174 = vld [vmem:[%s172 + $0x4] sm:$0xf]
    %v175 = vld [vmem:[%s172 + $0x8] sm:$0xf]
    %v176 = vld [vmem:[%s172 + $0xc] sm:$0xf]
    %v177 = vld [vmem:[%s172 + $0x10] sm:$0xf]
    %v178 = vld [vmem:[%s172 + $0x14] sm:$0xf]
    %v179 = vld [vmem:[%s172 + $0x18] sm:$0xf]
    %v180 = vld [vmem:[%s172 + $0x1c] sm:$0xf]
    %v181 = vld [vmem:[%s172 + $0x20] sm:$0xf]
    %v182 = vld [vmem:[%s172 + $0x24] sm:$0xf]
    %v183 = vld [vmem:[%s172 + $0x28] sm:$0xf]
    %v184 = vld [vmem:[%s172 + $0x2c] sm:$0xf]
    %v185 = vld [vmem:[%s172 + $0x30] sm:$0xf]
    %v186 = vld [vmem:[%s172 + $0x34] sm:$0xf]
    %v187 = vld [vmem:[%s172 + $0x38] sm:$0xf]
    %v188 = vld [vmem:[%s172 + $0x3c] sm:$0xf]
    %v189 = vunpack.c.l.bf16 %v173
    %v190 = vunpack.c.l.bf16 %v174
    %v191 = vunpack.c.l.bf16 %v175
    %v192 = vunpack.c.l.bf16 %v176
    %v193 = vunpack.c.l.bf16 %v177
    %v194 = vunpack.c.l.bf16 %v178
    %v195 = vunpack.c.l.bf16 %v179
    %v196 = vunpack.c.l.bf16 %v180
    %v197 = vunpack.c.l.bf16 %v181
    %v198 = vunpack.c.l.bf16 %v182
    %v199 = vunpack.c.l.bf16 %v183
    %v200 = vunpack.c.l.bf16 %v184
    %v201 = vunpack.c.l.bf16 %v185
    %v202 = vunpack.c.l.bf16 %v186
    %v203 = vunpack.c.l.bf16 %v187
    %v204 = vunpack.c.l.bf16 %v188
    %v205 = vstv %s104
    %v206 = vmul.f32 %v205, %v189
    %v207 = vmul.f32 %v205, %v190
    %v208 = vmul.f32 %v205, %v191
    %v209 = vmul.f32 %v205, %v192
    %v210 = vmul.f32 %v205, %v193
    %v211 = vmul.f32 %v205, %v194
    %v212 = vmul.f32 %v205, %v195
    %v213 = vmul.f32 %v205, %v196
    %v214 = vmul.f32 %v205, %v197
    %v215 = vmul.f32 %v205, %v198
    %v216 = vmul.f32 %v205, %v199
    %v217 = vmul.f32 %v205, %v200
    %v218 = vmul.f32 %v205, %v201
    %v219 = vmul.f32 %v205, %v202
    %v220 = vmul.f32 %v205, %v203
    %v221 = vmul.f32 %v205, %v204
    %v222 = vadd.f32 %v156, %v206
    %v223 = vadd.f32 %v157, %v207
    %v224 = vadd.f32 %v158, %v208
    %v225 = vadd.f32 %v159, %v209
    %v226 = vadd.f32 %v160, %v210
    %v227 = vadd.f32 %v161, %v211
    %v228 = vadd.f32 %v162, %v212
    %v229 = vadd.f32 %v163, %v213
    %v230 = vadd.f32 %v164, %v214
    %v231 = vadd.f32 %v165, %v215
    %v232 = vadd.f32 %v166, %v216
    %v233 = vadd.f32 %v167, %v217
    %v234 = vadd.f32 %v168, %v218
    %v235 = vadd.f32 %v169, %v219
    %v236 = vadd.f32 %v170, %v220
    %v237 = vadd.f32 %v171, %v221
    %s238 = scalar_lea.vmem [#allocation7], 512
    %v239 = vld [vmem:[%s238] sm:$0xf]
    %v240 = vld [vmem:[%s238 + $0x4] sm:$0xf]
    %v241 = vld [vmem:[%s238 + $0x8] sm:$0xf]
    %v242 = vld [vmem:[%s238 + $0xc] sm:$0xf]
    %v243 = vld [vmem:[%s238 + $0x10] sm:$0xf]
    %v244 = vld [vmem:[%s238 + $0x14] sm:$0xf]
    %v245 = vld [vmem:[%s238 + $0x18] sm:$0xf]
    %v246 = vld [vmem:[%s238 + $0x1c] sm:$0xf]
    %v247 = vld [vmem:[%s238 + $0x20] sm:$0xf]
    %v248 = vld [vmem:[%s238 + $0x24] sm:$0xf]
    %v249 = vld [vmem:[%s238 + $0x28] sm:$0xf]
    %v250 = vld [vmem:[%s238 + $0x2c] sm:$0xf]
    %v251 = vld [vmem:[%s238 + $0x30] sm:$0xf]
    %v252 = vld [vmem:[%s238 + $0x34] sm:$0xf]
    %v253 = vld [vmem:[%s238 + $0x38] sm:$0xf]
    %v254 = vld [vmem:[%s238 + $0x3c] sm:$0xf]
    %v255 = vunpack.c.l.bf16 %v239
    %v256 = vunpack.c.l.bf16 %v240
    %v257 = vunpack.c.l.bf16 %v241
    %v258 = vunpack.c.l.bf16 %v242
    %v259 = vunpack.c.l.bf16 %v243
    %v260 = vunpack.c.l.bf16 %v244
    %v261 = vunpack.c.l.bf16 %v245
    %v262 = vunpack.c.l.bf16 %v246
    %v263 = vunpack.c.l.bf16 %v247
    %v264 = vunpack.c.l.bf16 %v248
    %v265 = vunpack.c.l.bf16 %v249
    %v266 = vunpack.c.l.bf16 %v250
    %v267 = vunpack.c.l.bf16 %v251
    %v268 = vunpack.c.l.bf16 %v252
    %v269 = vunpack.c.l.bf16 %v253
    %v270 = vunpack.c.l.bf16 %v254
    %v271 = vstv %s105
    %v272 = vmul.f32 %v271, %v255
    %v273 = vmul.f32 %v271, %v256
    %v274 = vmul.f32 %v271, %v257
    %v275 = vmul.f32 %v271, %v258
    %v276 = vmul.f32 %v271, %v259
    %v277 = vmul.f32 %v271, %v260
    %v278 = vmul.f32 %v271, %v261
    %v279 = vmul.f32 %v271, %v262
    %v280 = vmul.f32 %v271, %v263
    %v281 = vmul.f32 %v271, %v264
    %v282 = vmul.f32 %v271, %v265
    %v283 = vmul.f32 %v271, %v266
    %v284 = vmul.f32 %v271, %v267
    %v285 = vmul.f32 %v271, %v268
    %v286 = vmul.f32 %v271, %v269
    %v287 = vmul.f32 %v271, %v270
    %v288 = vadd.f32 %v222, %v272
    %v289 = vadd.f32 %v223, %v273
    %v290 = vadd.f32 %v224, %v274
    %v291 = vadd.f32 %v225, %v275
    %v292 = vadd.f32 %v226, %v276
    %v293 = vadd.f32 %v227, %v277
    %v294 = vadd.f32 %v228, %v278
    %v295 = vadd.f32 %v229, %v279
    %v296 = vadd.f32 %v230, %v280
    %v297 = vadd.f32 %v231, %v281
    %v298 = vadd.f32 %v232, %v282
    %v299 = vadd.f32 %v233, %v283
    %v300 = vadd.f32 %v234, %v284
    %v301 = vadd.f32 %v235, %v285
    %v302 = vadd.f32 %v236, %v286
    %v303 = vadd.f32 %v237, %v287
    %s304 = scalar_lea.vmem [#allocation7], 768
    %v305 = vld [vmem:[%s304] sm:$0xf]
    %v306 = vld [vmem:[%s304 + $0x4] sm:$0xf]
    %v307 = vld [vmem:[%s304 + $0x8] sm:$0xf]
    %v308 = vld [vmem:[%s304 + $0xc] sm:$0xf]
    %v309 = vld [vmem:[%s304 + $0x10] sm:$0xf]
    %v310 = vld [vmem:[%s304 + $0x14] sm:$0xf]
    %v311 = vld [vmem:[%s304 + $0x18] sm:$0xf]
    %v312 = vld [vmem:[%s304 + $0x1c] sm:$0xf]
    %v313 = vld [vmem:[%s304 + $0x20] sm:$0xf]
    %v314 = vld [vmem:[%s304 + $0x24] sm:$0xf]
    %v315 = vld [vmem:[%s304 + $0x28] sm:$0xf]
    %v316 = vld [vmem:[%s304 + $0x2c] sm:$0xf]
    %v317 = vld [vmem:[%s304 + $0x30] sm:$0xf]
    %v318 = vld [vmem:[%s304 + $0x34] sm:$0xf]
    %v319 = vld [vmem:[%s304 + $0x38] sm:$0xf]
    %v320 = vld [vmem:[%s304 + $0x3c] sm:$0xf]
    %v321 = vunpack.c.l.bf16 %v305
    %v322 = vunpack.c.l.bf16 %v306
    %v323 = vunpack.c.l.bf16 %v307
    %v324 = vunpack.c.l.bf16 %v308
    %v325 = vunpack.c.l.bf16 %v309
    %v326 = vunpack.c.l.bf16 %v310
    %v327 = vunpack.c.l.bf16 %v311
    %v328 = vunpack.c.l.bf16 %v312
    %v329 = vunpack.c.l.bf16 %v313
    %v330 = vunpack.c.l.bf16 %v314
    %v331 = vunpack.c.l.bf16 %v315
    %v332 = vunpack.c.l.bf16 %v316
    %v333 = vunpack.c.l.bf16 %v317
    %v334 = vunpack.c.l.bf16 %v318
    %v335 = vunpack.c.l.bf16 %v319
    %v336 = vunpack.c.l.bf16 %v320
    %v337 = vstv %s106
    %v338 = vmul.f32 %v337, %v321
    %v339 = vmul.f32 %v337, %v322
    %v340 = vmul.f32 %v337, %v323
    %v341 = vmul.f32 %v337, %v324
    %v342 = vmul.f32 %v337, %v325
    %v343 = vmul.f32 %v337, %v326
    %v344 = vmul.f32 %v337, %v327
    %v345 = vmul.f32 %v337, %v328
    %v346 = vmul.f32 %v337, %v329
    %v347 = vmul.f32 %v337, %v330
    %v348 = vmul.f32 %v337, %v331
    %v349 = vmul.f32 %v337, %v332
    %v350 = vmul.f32 %v337, %v333
    %v351 = vmul.f32 %v337, %v334
    %v352 = vmul.f32 %v337, %v335
    %v353 = vmul.f32 %v337, %v336
    %v354 = vadd.f32 %v288, %v338
    %v355 = vadd.f32 %v289, %v339
    %v356 = vadd.f32 %v290, %v340
    %v357 = vadd.f32 %v291, %v341
    %v358 = vadd.f32 %v292, %v342
    %v359 = vadd.f32 %v293, %v343
    %v360 = vadd.f32 %v294, %v344
    %v361 = vadd.f32 %v295, %v345
    %v362 = vadd.f32 %v296, %v346
    %v363 = vadd.f32 %v297, %v347
    %v364 = vadd.f32 %v298, %v348
    %v365 = vadd.f32 %v299, %v349
    %v366 = vadd.f32 %v300, %v350
    %v367 = vadd.f32 %v301, %v351
    %v368 = vadd.f32 %v302, %v352
    %v369 = vadd.f32 %v303, %v353
    %371 = vset.pattern.permute.xlu0 0
    %372 = vperm.xlu0 %371, %v107
    %v373 = vpop.permute.xlu0 %372
    %376 = vset.pattern.permute.xlu0 0
    %377 = vperm.xlu0 %376, %v108
    %v378 = vpop.permute.xlu0 %377
    %381 = vset.pattern.permute.xlu0 0
    %382 = vperm.xlu0 %381, %v109
    %v383 = vpop.permute.xlu0 %382
    %386 = vset.pattern.permute.xlu0 0
    %387 = vperm.xlu0 %386, %v110
    %v388 = vpop.permute.xlu0 %387
    %391 = vset.pattern.permute.xlu0 0
    %392 = vperm.xlu0 %391, %v111
    %v393 = vpop.permute.xlu0 %392
    %396 = vset.pattern.permute.xlu0 0
    %397 = vperm.xlu0 %396, %v112
    %v398 = vpop.permute.xlu0 %397
    %401 = vset.pattern.permute.xlu0 0
    %402 = vperm.xlu0 %401, %v113
    %v403 = vpop.permute.xlu0 %402
    %406 = vset.pattern.permute.xlu0 0
    %407 = vperm.xlu0 %406, %v114
    %v408 = vpop.permute.xlu0 %407
    %411 = vset.pattern.permute.xlu0 0
    %412 = vperm.xlu0 %411, %v115
    %v413 = vpop.permute.xlu0 %412
    %416 = vset.pattern.permute.xlu0 0
    %417 = vperm.xlu0 %416, %v116
    %v418 = vpop.permute.xlu0 %417
    %421 = vset.pattern.permute.xlu0 0
    %422 = vperm.xlu0 %421, %v117
    %v423 = vpop.permute.xlu0 %422
    %426 = vset.pattern.permute.xlu0 0
    %427 = vperm.xlu0 %426, %v118
    %v428 = vpop.permute.xlu0 %427
    %431 = vset.pattern.permute.xlu0 0
    %432 = vperm.xlu0 %431, %v119
    %v433 = vpop.permute.xlu0 %432
    %436 = vset.pattern.permute.xlu0 0
    %437 = vperm.xlu0 %436, %v120
    %v438 = vpop.permute.xlu0 %437
    %441 = vset.pattern.permute.xlu0 0
    %442 = vperm.xlu0 %441, %v121
    %v443 = vpop.permute.xlu0 %442
    %446 = vset.pattern.permute.xlu0 0
    %447 = vperm.xlu0 %446, %v122
    %v448 = vpop.permute.xlu0 %447
    %v450 = vmul.f32 %v354, %v373
    %v451 = vmul.f32 %v355, %v378
    %v452 = vmul.f32 %v356, %v383
    %v453 = vmul.f32 %v357, %v388
    %v454 = vmul.f32 %v358, %v393
    %v455 = vmul.f32 %v359, %v398
    %v456 = vmul.f32 %v360, %v403
    %v457 = vmul.f32 %v361, %v408
    %v458 = vmul.f32 %v362, %v413
    %v459 = vmul.f32 %v363, %v418
    %v460 = vmul.f32 %v364, %v423
    %v461 = vmul.f32 %v365, %v428
    %v462 = vmul.f32 %v366, %v433
    %v463 = vmul.f32 %v367, %v438
    %v464 = vmul.f32 %v368, %v443
    %v465 = vmul.f32 %v369, %v448
    %s466 = scalar_lea.vmem [#allocation7], 64
    %v467 = vld [vmem:[%s466] sm:$0xf]
    %v468 = vld [vmem:[%s466 + $0x4] sm:$0xf]
    %v469 = vld [vmem:[%s466 + $0x8] sm:$0xf]
    %v470 = vld [vmem:[%s466 + $0xc] sm:$0xf]
    %v471 = vld [vmem:[%s466 + $0x10] sm:$0xf]
    %v472 = vld [vmem:[%s466 + $0x14] sm:$0xf]
    %v473 = vld [vmem:[%s466 + $0x18] sm:$0xf]
    %v474 = vld [vmem:[%s466 + $0x1c] sm:$0xf]
    %v475 = vld [vmem:[%s466 + $0x20] sm:$0xf]
    %v476 = vld [vmem:[%s466 + $0x24] sm:$0xf]
    %v477 = vld [vmem:[%s466 + $0x28] sm:$0xf]
    %v478 = vld [vmem:[%s466 + $0x2c] sm:$0xf]
    %v479 = vld [vmem:[%s466 + $0x30] sm:$0xf]
    %v480 = vld [vmem:[%s466 + $0x34] sm:$0xf]
    %v481 = vld [vmem:[%s466 + $0x38] sm:$0xf]
    %v482 = vld [vmem:[%s466 + $0x3c] sm:$0xf]
    %v483 = vunpack.c.l.bf16 %v467
    %v484 = vunpack.c.l.bf16 %v468
    %v485 = vunpack.c.l.bf16 %v469
    %v486 = vunpack.c.l.bf16 %v470
    %v487 = vunpack.c.l.bf16 %v471
    %v488 = vunpack.c.l.bf16 %v472
    %v489 = vunpack.c.l.bf16 %v473
    %v490 = vunpack.c.l.bf16 %v474
    %v491 = vunpack.c.l.bf16 %v475
    %v492 = vunpack.c.l.bf16 %v476
    %v493 = vunpack.c.l.bf16 %v477
    %v494 = vunpack.c.l.bf16 %v478
    %v495 = vunpack.c.l.bf16 %v479
    %v496 = vunpack.c.l.bf16 %v480
    %v497 = vunpack.c.l.bf16 %v481
    %v498 = vunpack.c.l.bf16 %v482
    %v499 = vmul.f32 %v155, %v483
    %v500 = vmul.f32 %v155, %v484
    %v501 = vmul.f32 %v155, %v485
    %v502 = vmul.f32 %v155, %v486
    %v503 = vmul.f32 %v155, %v487
    %v504 = vmul.f32 %v155, %v488
    %v505 = vmul.f32 %v155, %v489
    %v506 = vmul.f32 %v155, %v490
    %v507 = vmul.f32 %v155, %v491
    %v508 = vmul.f32 %v155, %v492
    %v509 = vmul.f32 %v155, %v493
    %v510 = vmul.f32 %v155, %v494
    %v511 = vmul.f32 %v155, %v495
    %v512 = vmul.f32 %v155, %v496
    %v513 = vmul.f32 %v155, %v497
    %v514 = vmul.f32 %v155, %v498
    %s515 = scalar_lea.vmem [#allocation7], 320
    %v516 = vld [vmem:[%s515] sm:$0xf]
    %v517 = vld [vmem:[%s515 + $0x4] sm:$0xf]
    %v518 = vld [vmem:[%s515 + $0x8] sm:$0xf]
    %v519 = vld [vmem:[%s515 + $0xc] sm:$0xf]
    %v520 = vld [vmem:[%s515 + $0x10] sm:$0xf]
    %v521 = vld [vmem:[%s515 + $0x14] sm:$0xf]
    %v522 = vld [vmem:[%s515 + $0x18] sm:$0xf]
    %v523 = vld [vmem:[%s515 + $0x1c] sm:$0xf]
    %v524 = vld [vmem:[%s515 + $0x20] sm:$0xf]
    %v525 = vld [vmem:[%s515 + $0x24] sm:$0xf]
    %v526 = vld [vmem:[%s515 + $0x28] sm:$0xf]
    %v527 = vld [vmem:[%s515 + $0x2c] sm:$0xf]
    %v528 = vld [vmem:[%s515 + $0x30] sm:$0xf]
    %v529 = vld [vmem:[%s515 + $0x34] sm:$0xf]
    %v530 = vld [vmem:[%s515 + $0x38] sm:$0xf]
    %v531 = vld [vmem:[%s515 + $0x3c] sm:$0xf]
    %v532 = vunpack.c.l.bf16 %v516
    %v533 = vunpack.c.l.bf16 %v517
    %v534 = vunpack.c.l.bf16 %v518
    %v535 = vunpack.c.l.bf16 %v519
    %v536 = vunpack.c.l.bf16 %v520
    %v537 = vunpack.c.l.bf16 %v521
    %v538 = vunpack.c.l.bf16 %v522
    %v539 = vunpack.c.l.bf16 %v523
    %v540 = vunpack.c.l.bf16 %v524
    %v541 = vunpack.c.l.bf16 %v525
    %v542 = vunpack.c.l.bf16 %v526
    %v543 = vunpack.c.l.bf16 %v527
    %v544 = vunpack.c.l.bf16 %v528
    %v545 = vunpack.c.l.bf16 %v529
    %v546 = vunpack.c.l.bf16 %v530
    %v547 = vunpack.c.l.bf16 %v531
    %v548 = vmul.f32 %v205, %v532
    %v549 = vmul.f32 %v205, %v533
    %v550 = vmul.f32 %v205, %v534
    %v551 = vmul.f32 %v205, %v535
    %v552 = vmul.f32 %v205, %v536
    %v553 = vmul.f32 %v205, %v537
    %v554 = vmul.f32 %v205, %v538
    %v555 = vmul.f32 %v205, %v539
    %v556 = vmul.f32 %v205, %v540
    %v557 = vmul.f32 %v205, %v541
    %v558 = vmul.f32 %v205, %v542
    %v559 = vmul.f32 %v205, %v543
    %v560 = vmul.f32 %v205, %v544
    %v561 = vmul.f32 %v205, %v545
    %v562 = vmul.f32 %v205, %v546
    %v563 = vmul.f32 %v205, %v547
    %v564 = vadd.f32 %v499, %v548
    %v565 = vadd.f32 %v500, %v549
    %v566 = vadd.f32 %v501, %v550
    %v567 = vadd.f32 %v502, %v551
    %v568 = vadd.f32 %v503, %v552
    %v569 = vadd.f32 %v504, %v553
    %v570 = vadd.f32 %v505, %v554
    %v571 = vadd.f32 %v506, %v555
    %v572 = vadd.f32 %v507, %v556
    %v573 = vadd.f32 %v508, %v557
    %v574 = vadd.f32 %v509, %v558
    %v575 = vadd.f32 %v510, %v559
    %v576 = vadd.f32 %v511, %v560
    %v577 = vadd.f32 %v512, %v561
    %v578 = vadd.f32 %v513, %v562
    %v579 = vadd.f32 %v514, %v563
    %s580 = scalar_lea.vmem [#allocation7], 576
    %v581 = vld [vmem:[%s580] sm:$0xf]
    %v582 = vld [vmem:[%s580 + $0x4] sm:$0xf]
    %v583 = vld [vmem:[%s580 + $0x8] sm:$0xf]
    %v584 = vld [vmem:[%s580 + $0xc] sm:$0xf]
    %v585 = vld [vmem:[%s580 + $0x10] sm:$0xf]
    %v586 = vld [vmem:[%s580 + $0x14] sm:$0xf]
    %v587 = vld [vmem:[%s580 + $0x18] sm:$0xf]
    %v588 = vld [vmem:[%s580 + $0x1c] sm:$0xf]
    %v589 = vld [vmem:[%s580 + $0x20] sm:$0xf]
    %v590 = vld [vmem:[%s580 + $0x24] sm:$0xf]
    %v591 = vld [vmem:[%s580 + $0x28] sm:$0xf]
    %v592 = vld [vmem:[%s580 + $0x2c] sm:$0xf]
    %v593 = vld [vmem:[%s580 + $0x30] sm:$0xf]
    %v594 = vld [vmem:[%s580 + $0x34] sm:$0xf]
    %v595 = vld [vmem:[%s580 + $0x38] sm:$0xf]
    %v596 = vld [vmem:[%s580 + $0x3c] sm:$0xf]
    %v597 = vunpack.c.l.bf16 %v581
    %v598 = vunpack.c.l.bf16 %v582
    %v599 = vunpack.c.l.bf16 %v583
    %v600 = vunpack.c.l.bf16 %v584
    %v601 = vunpack.c.l.bf16 %v585
    %v602 = vunpack.c.l.bf16 %v586
    %v603 = vunpack.c.l.bf16 %v587
    %v604 = vunpack.c.l.bf16 %v588
    %v605 = vunpack.c.l.bf16 %v589
    %v606 = vunpack.c.l.bf16 %v590
    %v607 = vunpack.c.l.bf16 %v591
    %v608 = vunpack.c.l.bf16 %v592
    %v609 = vunpack.c.l.bf16 %v593
    %v610 = vunpack.c.l.bf16 %v594
    %v611 = vunpack.c.l.bf16 %v595
    %v612 = vunpack.c.l.bf16 %v596
    %v613 = vmul.f32 %v271, %v597
    %v614 = vmul.f32 %v271, %v598
    %v615 = vmul.f32 %v271, %v599
    %v616 = vmul.f32 %v271, %v600
    %v617 = vmul.f32 %v271, %v601
    %v618 = vmul.f32 %v271, %v602
    %v619 = vmul.f32 %v271, %v603
    %v620 = vmul.f32 %v271, %v604
    %v621 = vmul.f32 %v271, %v605
    %v622 = vmul.f32 %v271, %v606
    %v623 = vmul.f32 %v271, %v607
    %v624 = vmul.f32 %v271, %v608
    %v625 = vmul.f32 %v271, %v609
    %v626 = vmul.f32 %v271, %v610
    %v627 = vmul.f32 %v271, %v611
    %v628 = vmul.f32 %v271, %v612
    %v629 = vadd.f32 %v564, %v613
    %v630 = vadd.f32 %v565, %v614
    %v631 = vadd.f32 %v566, %v615
    %v632 = vadd.f32 %v567, %v616
    %v633 = vadd.f32 %v568, %v617
    %v634 = vadd.f32 %v569, %v618
    %v635 = vadd.f32 %v570, %v619
    %v636 = vadd.f32 %v571, %v620
    %v637 = vadd.f32 %v572, %v621
    %v638 = vadd.f32 %v573, %v622
    %v639 = vadd.f32 %v574, %v623
    %v640 = vadd.f32 %v575, %v624
    %v641 = vadd.f32 %v576, %v625
    %v642 = vadd.f32 %v577, %v626
    %v643 = vadd.f32 %v578, %v627
    %v644 = vadd.f32 %v579, %v628
    %s645 = scalar_lea.vmem [#allocation7], 832
    %v646 = vld [vmem:[%s645] sm:$0xf]
    %v647 = vld [vmem:[%s645 + $0x4] sm:$0xf]
    %v648 = vld [vmem:[%s645 + $0x8] sm:$0xf]
    %v649 = vld [vmem:[%s645 + $0xc] sm:$0xf]
    %v650 = vld [vmem:[%s645 + $0x10] sm:$0xf]
    %v651 = vld [vmem:[%s645 + $0x14] sm:$0xf]
    %v652 = vld [vmem:[%s645 + $0x18] sm:$0xf]
    %v653 = vld [vmem:[%s645 + $0x1c] sm:$0xf]
    %v654 = vld [vmem:[%s645 + $0x20] sm:$0xf]
    %v655 = vld [vmem:[%s645 + $0x24] sm:$0xf]
    %v656 = vld [vmem:[%s645 + $0x28] sm:$0xf]
    %v657 = vld [vmem:[%s645 + $0x2c] sm:$0xf]
    %v658 = vld [vmem:[%s645 + $0x30] sm:$0xf]
    %v659 = vld [vmem:[%s645 + $0x34] sm:$0xf]
    %v660 = vld [vmem:[%s645 + $0x38] sm:$0xf]
    %v661 = vld [vmem:[%s645 + $0x3c] sm:$0xf]
    %v662 = vunpack.c.l.bf16 %v646
    %v663 = vunpack.c.l.bf16 %v647
    %v664 = vunpack.c.l.bf16 %v648
    %v665 = vunpack.c.l.bf16 %v649
    %v666 = vunpack.c.l.bf16 %v650
    %v667 = vunpack.c.l.bf16 %v651
    %v668 = vunpack.c.l.bf16 %v652
    %v669 = vunpack.c.l.bf16 %v653
    %v670 = vunpack.c.l.bf16 %v654
    %v671 = vunpack.c.l.bf16 %v655
    %v672 = vunpack.c.l.bf16 %v656
    %v673 = vunpack.c.l.bf16 %v657
    %v674 = vunpack.c.l.bf16 %v658
    %v675 = vunpack.c.l.bf16 %v659
    %v676 = vunpack.c.l.bf16 %v660
    %v677 = vunpack.c.l.bf16 %v661
    %v678 = vmul.f32 %v337, %v662
    %v679 = vmul.f32 %v337, %v663
    %v680 = vmul.f32 %v337, %v664
    %v681 = vmul.f32 %v337, %v665
    %v682 = vmul.f32 %v337, %v666
    %v683 = vmul.f32 %v337, %v667
    %v684 = vmul.f32 %v337, %v668
    %v685 = vmul.f32 %v337, %v669
    %v686 = vmul.f32 %v337, %v670
    %v687 = vmul.f32 %v337, %v671
    %v688 = vmul.f32 %v337, %v672
    %v689 = vmul.f32 %v337, %v673
    %v690 = vmul.f32 %v337, %v674
    %v691 = vmul.f32 %v337, %v675
    %v692 = vmul.f32 %v337, %v676
    %v693 = vmul.f32 %v337, %v677
    %v694 = vadd.f32 %v629, %v678
    %v695 = vadd.f32 %v630, %v679
    %v696 = vadd.f32 %v631, %v680
    %v697 = vadd.f32 %v632, %v681
    %v698 = vadd.f32 %v633, %v682
    %v699 = vadd.f32 %v634, %v683
    %v700 = vadd.f32 %v635, %v684
    %v701 = vadd.f32 %v636, %v685
    %v702 = vadd.f32 %v637, %v686
    %v703 = vadd.f32 %v638, %v687
    %v704 = vadd.f32 %v639, %v688
    %v705 = vadd.f32 %v640, %v689
    %v706 = vadd.f32 %v641, %v690
    %v707 = vadd.f32 %v642, %v691
    %v708 = vadd.f32 %v643, %v692
    %v709 = vadd.f32 %v644, %v693
    %710 = vset.pattern.permute.xlu0 1
    %711 = vperm.xlu0 %710, %v107
    %v712 = vpop.permute.xlu0 %711
    %714 = vset.pattern.permute.xlu0 1
    %715 = vperm.xlu0 %714, %v108
    %v716 = vpop.permute.xlu0 %715
    %718 = vset.pattern.permute.xlu0 1
    %719 = vperm.xlu0 %718, %v109
    %v720 = vpop.permute.xlu0 %719
    %722 = vset.pattern.permute.xlu0 1
    %723 = vperm.xlu0 %722, %v110
    %v724 = vpop.permute.xlu0 %723
    %726 = vset.pattern.permute.xlu0 1
    %727 = vperm.xlu0 %726, %v111
    %v728 = vpop.permute.xlu0 %727
    %730 = vset.pattern.permute.xlu0 1
    %731 = vperm.xlu0 %730, %v112
    %v732 = vpop.permute.xlu0 %731
    %734 = vset.pattern.permute.xlu0 1
    %735 = vperm.xlu0 %734, %v113
    %v736 = vpop.permute.xlu0 %735
    %738 = vset.pattern.permute.xlu0 1
    %739 = vperm.xlu0 %738, %v114
    %v740 = vpop.permute.xlu0 %739
    %742 = vset.pattern.permute.xlu0 1
    %743 = vperm.xlu0 %742, %v115
    %v744 = vpop.permute.xlu0 %743
    %746 = vset.pattern.permute.xlu0 1
    %747 = vperm.xlu0 %746, %v116
    %v748 = vpop.permute.xlu0 %747
    %750 = vset.pattern.permute.xlu0 1
    %751 = vperm.xlu0 %750, %v117
    %v752 = vpop.permute.xlu0 %751
    %754 = vset.pattern.permute.xlu0 1
    %755 = vperm.xlu0 %754, %v118
    %v756 = vpop.permute.xlu0 %755
    %758 = vset.pattern.permute.xlu0 1
    %759 = vperm.xlu0 %758, %v119
    %v760 = vpop.permute.xlu0 %759
    %762 = vset.pattern.permute.xlu0 1
    %763 = vperm.xlu0 %762, %v120
    %v764 = vpop.permute.xlu0 %763
    %766 = vset.pattern.permute.xlu0 1
    %767 = vperm.xlu0 %766, %v121
    %v768 = vpop.permute.xlu0 %767
    %770 = vset.pattern.permute.xlu0 1
    %771 = vperm.xlu0 %770, %v122
    %v772 = vpop.permute.xlu0 %771
    %v774 = vmul.f32 %v694, %v712
    %v775 = vmul.f32 %v695, %v716
    %v776 = vmul.f32 %v696, %v720
    %v777 = vmul.f32 %v697, %v724
    %v778 = vmul.f32 %v698, %v728
    %v779 = vmul.f32 %v699, %v732
    %v780 = vmul.f32 %v700, %v736
    %v781 = vmul.f32 %v701, %v740
    %v782 = vmul.f32 %v702, %v744
    %v783 = vmul.f32 %v703, %v748
    %v784 = vmul.f32 %v704, %v752
    %v785 = vmul.f32 %v705, %v756
    %v786 = vmul.f32 %v706, %v760
    %v787 = vmul.f32 %v707, %v764
    %v788 = vmul.f32 %v708, %v768
    %v789 = vmul.f32 %v709, %v772
    %v790 = vadd.f32 %v450, %v774
    %v791 = vadd.f32 %v451, %v775
    %v792 = vadd.f32 %v452, %v776
    %v793 = vadd.f32 %v453, %v777
    %v794 = vadd.f32 %v454, %v778
    %v795 = vadd.f32 %v455, %v779
    %v796 = vadd.f32 %v456, %v780
    %v797 = vadd.f32 %v457, %v781
    %v798 = vadd.f32 %v458, %v782
    %v799 = vadd.f32 %v459, %v783
    %v800 = vadd.f32 %v460, %v784
    %v801 = vadd.f32 %v461, %v785
    %v802 = vadd.f32 %v462, %v786
    %v803 = vadd.f32 %v463, %v787
    %v804 = vadd.f32 %v464, %v788
    %v805 = vadd.f32 %v465, %v789
    %s806 = scalar_lea.vmem [#allocation7], 128
    %v807 = vld [vmem:[%s806] sm:$0xf]
    %v808 = vld [vmem:[%s806 + $0x4] sm:$0xf]
    %v809 = vld [vmem:[%s806 + $0x8] sm:$0xf]
    %v810 = vld [vmem:[%s806 + $0xc] sm:$0xf]
    %v811 = vld [vmem:[%s806 + $0x10] sm:$0xf]
    %v812 = vld [vmem:[%s806 + $0x14] sm:$0xf]
    %v813 = vld [vmem:[%s806 + $0x18] sm:$0xf]
    %v814 = vld [vmem:[%s806 + $0x1c] sm:$0xf]
    %v815 = vld [vmem:[%s806 + $0x20] sm:$0xf]
    %v816 = vld [vmem:[%s806 + $0x24] sm:$0xf]
    %v817 = vld [vmem:[%s806 + $0x28] sm:$0xf]
    %v818 = vld [vmem:[%s806 + $0x2c] sm:$0xf]
    %v819 = vld [vmem:[%s806 + $0x30] sm:$0xf]
    %v820 = vld [vmem:[%s806 + $0x34] sm:$0xf]
    %v821 = vld [vmem:[%s806 + $0x38] sm:$0xf]
    %v822 = vld [vmem:[%s806 + $0x3c] sm:$0xf]
    %v823 = vunpack.c.l.bf16 %v807
    %v824 = vunpack.c.l.bf16 %v808
    %v825 = vunpack.c.l.bf16 %v809
    %v826 = vunpack.c.l.bf16 %v810
    %v827 = vunpack.c.l.bf16 %v811
    %v828 = vunpack.c.l.bf16 %v812
    %v829 = vunpack.c.l.bf16 %v813
    %v830 = vunpack.c.l.bf16 %v814
    %v831 = vunpack.c.l.bf16 %v815
    %v832 = vunpack.c.l.bf16 %v816
    %v833 = vunpack.c.l.bf16 %v817
    %v834 = vunpack.c.l.bf16 %v818
    %v835 = vunpack.c.l.bf16 %v819
    %v836 = vunpack.c.l.bf16 %v820
    %v837 = vunpack.c.l.bf16 %v821
    %v838 = vunpack.c.l.bf16 %v822
    %v839 = vmul.f32 %v155, %v823
    %v840 = vmul.f32 %v155, %v824
    %v841 = vmul.f32 %v155, %v825
    %v842 = vmul.f32 %v155, %v826
    %v843 = vmul.f32 %v155, %v827
    %v844 = vmul.f32 %v155, %v828
    %v845 = vmul.f32 %v155, %v829
    %v846 = vmul.f32 %v155, %v830
    %v847 = vmul.f32 %v155, %v831
    %v848 = vmul.f32 %v155, %v832
    %v849 = vmul.f32 %v155, %v833
    %v850 = vmul.f32 %v155, %v834
    %v851 = vmul.f32 %v155, %v835
    %v852 = vmul.f32 %v155, %v836
    %v853 = vmul.f32 %v155, %v837
    %v854 = vmul.f32 %v155, %v838
    %s855 = scalar_lea.vmem [#allocation7], 384
    %v856 = vld [vmem:[%s855] sm:$0xf]
    %v857 = vld [vmem:[%s855 + $0x4] sm:$0xf]
    %v858 = vld [vmem:[%s855 + $0x8] sm:$0xf]
    %v859 = vld [vmem:[%s855 + $0xc] sm:$0xf]
    %v860 = vld [vmem:[%s855 + $0x10] sm:$0xf]
    %v861 = vld [vmem:[%s855 + $0x14] sm:$0xf]
    %v862 = vld [vmem:[%s855 + $0x18] sm:$0xf]
    %v863 = vld [vmem:[%s855 + $0x1c] sm:$0xf]
    %v864 = vld [vmem:[%s855 + $0x20] sm:$0xf]
    %v865 = vld [vmem:[%s855 + $0x24] sm:$0xf]
    %v866 = vld [vmem:[%s855 + $0x28] sm:$0xf]
    %v867 = vld [vmem:[%s855 + $0x2c] sm:$0xf]
    %v868 = vld [vmem:[%s855 + $0x30] sm:$0xf]
    %v869 = vld [vmem:[%s855 + $0x34] sm:$0xf]
    %v870 = vld [vmem:[%s855 + $0x38] sm:$0xf]
    %v871 = vld [vmem:[%s855 + $0x3c] sm:$0xf]
    %v872 = vunpack.c.l.bf16 %v856
    %v873 = vunpack.c.l.bf16 %v857
    %v874 = vunpack.c.l.bf16 %v858
    %v875 = vunpack.c.l.bf16 %v859
    %v876 = vunpack.c.l.bf16 %v860
    %v877 = vunpack.c.l.bf16 %v861
    %v878 = vunpack.c.l.bf16 %v862
    %v879 = vunpack.c.l.bf16 %v863
    %v880 = vunpack.c.l.bf16 %v864
    %v881 = vunpack.c.l.bf16 %v865
    %v882 = vunpack.c.l.bf16 %v866
    %v883 = vunpack.c.l.bf16 %v867
    %v884 = vunpack.c.l.bf16 %v868
    %v885 = vunpack.c.l.bf16 %v869
    %v886 = vunpack.c.l.bf16 %v870
    %v887 = vunpack.c.l.bf16 %v871
    %v888 = vmul.f32 %v205, %v872
    %v889 = vmul.f32 %v205, %v873
    %v890 = vmul.f32 %v205, %v874
    %v891 = vmul.f32 %v205, %v875
    %v892 = vmul.f32 %v205, %v876
    %v893 = vmul.f32 %v205, %v877
    %v894 = vmul.f32 %v205, %v878
    %v895 = vmul.f32 %v205, %v879
    %v896 = vmul.f32 %v205, %v880
    %v897 = vmul.f32 %v205, %v881
    %v898 = vmul.f32 %v205, %v882
    %v899 = vmul.f32 %v205, %v883
    %v900 = vmul.f32 %v205, %v884
    %v901 = vmul.f32 %v205, %v885
    %v902 = vmul.f32 %v205, %v886
    %v903 = vmul.f32 %v205, %v887
    %v904 = vadd.f32 %v839, %v888
    %v905 = vadd.f32 %v840, %v889
    %v906 = vadd.f32 %v841, %v890
    %v907 = vadd.f32 %v842, %v891
    %v908 = vadd.f32 %v843, %v892
    %v909 = vadd.f32 %v844, %v893
    %v910 = vadd.f32 %v845, %v894
    %v911 = vadd.f32 %v846, %v895
    %v912 = vadd.f32 %v847, %v896
    %v913 = vadd.f32 %v848, %v897
    %v914 = vadd.f32 %v849, %v898
    %v915 = vadd.f32 %v850, %v899
    %v916 = vadd.f32 %v851, %v900
    %v917 = vadd.f32 %v852, %v901
    %v918 = vadd.f32 %v853, %v902
    %v919 = vadd.f32 %v854, %v903
    %s920 = scalar_lea.vmem [#allocation7], 640
    %v921 = vld [vmem:[%s920] sm:$0xf]
    %v922 = vld [vmem:[%s920 + $0x4] sm:$0xf]
    %v923 = vld [vmem:[%s920 + $0x8] sm:$0xf]
    %v924 = vld [vmem:[%s920 + $0xc] sm:$0xf]
    %v925 = vld [vmem:[%s920 + $0x10] sm:$0xf]
    %v926 = vld [vmem:[%s920 + $0x14] sm:$0xf]
    %v927 = vld [vmem:[%s920 + $0x18] sm:$0xf]
    %v928 = vld [vmem:[%s920 + $0x1c] sm:$0xf]
    %v929 = vld [vmem:[%s920 + $0x20] sm:$0xf]
    %v930 = vld [vmem:[%s920 + $0x24] sm:$0xf]
    %v931 = vld [vmem:[%s920 + $0x28] sm:$0xf]
    %v932 = vld [vmem:[%s920 + $0x2c] sm:$0xf]
    %v933 = vld [vmem:[%s920 + $0x30] sm:$0xf]
    %v934 = vld [vmem:[%s920 + $0x34] sm:$0xf]
    %v935 = vld [vmem:[%s920 + $0x38] sm:$0xf]
    %v936 = vld [vmem:[%s920 + $0x3c] sm:$0xf]
    %v937 = vunpack.c.l.bf16 %v921
    %v938 = vunpack.c.l.bf16 %v922
    %v939 = vunpack.c.l.bf16 %v923
    %v940 = vunpack.c.l.bf16 %v924
    %v941 = vunpack.c.l.bf16 %v925
    %v942 = vunpack.c.l.bf16 %v926
    %v943 = vunpack.c.l.bf16 %v927
    %v944 = vunpack.c.l.bf16 %v928
    %v945 = vunpack.c.l.bf16 %v929
    %v946 = vunpack.c.l.bf16 %v930
    %v947 = vunpack.c.l.bf16 %v931
    %v948 = vunpack.c.l.bf16 %v932
    %v949 = vunpack.c.l.bf16 %v933
    %v950 = vunpack.c.l.bf16 %v934
    %v951 = vunpack.c.l.bf16 %v935
    %v952 = vunpack.c.l.bf16 %v936
    %v953 = vmul.f32 %v271, %v937
    %v954 = vmul.f32 %v271, %v938
    %v955 = vmul.f32 %v271, %v939
    %v956 = vmul.f32 %v271, %v940
    %v957 = vmul.f32 %v271, %v941
    %v958 = vmul.f32 %v271, %v942
    %v959 = vmul.f32 %v271, %v943
    %v960 = vmul.f32 %v271, %v944
    %v961 = vmul.f32 %v271, %v945
    %v962 = vmul.f32 %v271, %v946
    %v963 = vmul.f32 %v271, %v947
    %v964 = vmul.f32 %v271, %v948
    %v965 = vmul.f32 %v271, %v949
    %v966 = vmul.f32 %v271, %v950
    %v967 = vmul.f32 %v271, %v951
    %v968 = vmul.f32 %v271, %v952
    %v969 = vadd.f32 %v904, %v953
    %v970 = vadd.f32 %v905, %v954
    %v971 = vadd.f32 %v906, %v955
    %v972 = vadd.f32 %v907, %v956
    %v973 = vadd.f32 %v908, %v957
    %v974 = vadd.f32 %v909, %v958
    %v975 = vadd.f32 %v910, %v959
    %v976 = vadd.f32 %v911, %v960
    %v977 = vadd.f32 %v912, %v961
    %v978 = vadd.f32 %v913, %v962
    %v979 = vadd.f32 %v914, %v963
    %v980 = vadd.f32 %v915, %v964
    %v981 = vadd.f32 %v916, %v965
    %v982 = vadd.f32 %v917, %v966
    %v983 = vadd.f32 %v918, %v967
    %v984 = vadd.f32 %v919, %v968
    %s985 = scalar_lea.vmem [#allocation7], 896
    %v986 = vld [vmem:[%s985] sm:$0xf]
    %v987 = vld [vmem:[%s985 + $0x4] sm:$0xf]
    %v988 = vld [vmem:[%s985 + $0x8] sm:$0xf]
    %v989 = vld [vmem:[%s985 + $0xc] sm:$0xf]
    %v990 = vld [vmem:[%s985 + $0x10] sm:$0xf]
    %v991 = vld [vmem:[%s985 + $0x14] sm:$0xf]
    %v992 = vld [vmem:[%s985 + $0x18] sm:$0xf]
    %v993 = vld [vmem:[%s985 + $0x1c] sm:$0xf]
    %v994 = vld [vmem:[%s985 + $0x20] sm:$0xf]
    %v995 = vld [vmem:[%s985 + $0x24] sm:$0xf]
    %v996 = vld [vmem:[%s985 + $0x28] sm:$0xf]
    %v997 = vld [vmem:[%s985 + $0x2c] sm:$0xf]
    %v998 = vld [vmem:[%s985 + $0x30] sm:$0xf]
    %v999 = vld [vmem:[%s985 + $0x34] sm:$0xf]
    %v1000 = vld [vmem:[%s985 + $0x38] sm:$0xf]
    %v1001 = vld [vmem:[%s985 + $0x3c] sm:$0xf]
    %v1002 = vunpack.c.l.bf16 %v986
    %v1003 = vunpack.c.l.bf16 %v987
    %v1004 = vunpack.c.l.bf16 %v988
    %v1005 = vunpack.c.l.bf16 %v989
    %v1006 = vunpack.c.l.bf16 %v990
    %v1007 = vunpack.c.l.bf16 %v991
    %v1008 = vunpack.c.l.bf16 %v992
    %v1009 = vunpack.c.l.bf16 %v993
    %v1010 = vunpack.c.l.bf16 %v994
    %v1011 = vunpack.c.l.bf16 %v995
    %v1012 = vunpack.c.l.bf16 %v996
    %v1013 = vunpack.c.l.bf16 %v997
    %v1014 = vunpack.c.l.bf16 %v998
    %v1015 = vunpack.c.l.bf16 %v999
    %v1016 = vunpack.c.l.bf16 %v1000
    %v1017 = vunpack.c.l.bf16 %v1001
    %v1018 = vmul.f32 %v337, %v1002
    %v1019 = vmul.f32 %v337, %v1003
    %v1020 = vmul.f32 %v337, %v1004
    %v1021 = vmul.f32 %v337, %v1005
    %v1022 = vmul.f32 %v337, %v1006
    %v1023 = vmul.f32 %v337, %v1007
    %v1024 = vmul.f32 %v337, %v1008
    %v1025 = vmul.f32 %v337, %v1009
    %v1026 = vmul.f32 %v337, %v1010
    %v1027 = vmul.f32 %v337, %v1011
    %v1028 = vmul.f32 %v337, %v1012
    %v1029 = vmul.f32 %v337, %v1013
    %v1030 = vmul.f32 %v337, %v1014
    %v1031 = vmul.f32 %v337, %v1015
    %v1032 = vmul.f32 %v337, %v1016
    %v1033 = vmul.f32 %v337, %v1017
    %v1034 = vadd.f32 %v969, %v1018
    %v1035 = vadd.f32 %v970, %v1019
    %v1036 = vadd.f32 %v971, %v1020
    %v1037 = vadd.f32 %v972, %v1021
    %v1038 = vadd.f32 %v973, %v1022
    %v1039 = vadd.f32 %v974, %v1023
    %v1040 = vadd.f32 %v975, %v1024
    %v1041 = vadd.f32 %v976, %v1025
    %v1042 = vadd.f32 %v977, %v1026
    %v1043 = vadd.f32 %v978, %v1027
    %v1044 = vadd.f32 %v979, %v1028
    %v1045 = vadd.f32 %v980, %v1029
    %v1046 = vadd.f32 %v981, %v1030
    %v1047 = vadd.f32 %v982, %v1031
    %v1048 = vadd.f32 %v983, %v1032
    %v1049 = vadd.f32 %v984, %v1033
    %1050 = vset.pattern.permute.xlu0 2
    %1051 = vperm.xlu0 %1050, %v107
    %v1052 = vpop.permute.xlu0 %1051
    %1054 = vset.pattern.permute.xlu0 2
    %1055 = vperm.xlu0 %1054, %v108
    %v1056 = vpop.permute.xlu0 %1055
    %1058 = vset.pattern.permute.xlu0 2
    %1059 = vperm.xlu0 %1058, %v109
    %v1060 = vpop.permute.xlu0 %1059
    %1062 = vset.pattern.permute.xlu0 2
    %1063 = vperm.xlu0 %1062, %v110
    %v1064 = vpop.permute.xlu0 %1063
    %1066 = vset.pattern.permute.xlu0 2
    %1067 = vperm.xlu0 %1066, %v111
    %v1068 = vpop.permute.xlu0 %1067
    %1070 = vset.pattern.permute.xlu0 2
    %1071 = vperm.xlu0 %1070, %v112
    %v1072 = vpop.permute.xlu0 %1071
    %1074 = vset.pattern.permute.xlu0 2
    %1075 = vperm.xlu0 %1074, %v113
    %v1076 = vpop.permute.xlu0 %1075
    %1078 = vset.pattern.permute.xlu0 2
    %1079 = vperm.xlu0 %1078, %v114
    %v1080 = vpop.permute.xlu0 %1079
    %1082 = vset.pattern.permute.xlu0 2
    %1083 = vperm.xlu0 %1082, %v115
    %v1084 = vpop.permute.xlu0 %1083
    %1086 = vset.pattern.permute.xlu0 2
    %1087 = vperm.xlu0 %1086, %v116
    %v1088 = vpop.permute.xlu0 %1087
    %1090 = vset.pattern.permute.xlu0 2
    %1091 = vperm.xlu0 %1090, %v117
    %v1092 = vpop.permute.xlu0 %1091
    %1094 = vset.pattern.permute.xlu0 2
    %1095 = vperm.xlu0 %1094, %v118
    %v1096 = vpop.permute.xlu0 %1095
    %1098 = vset.pattern.permute.xlu0 2
    %1099 = vperm.xlu0 %1098, %v119
    %v1100 = vpop.permute.xlu0 %1099
    %1102 = vset.pattern.permute.xlu0 2
    %1103 = vperm.xlu0 %1102, %v120
    %v1104 = vpop.permute.xlu0 %1103
    %1106 = vset.pattern.permute.xlu0 2
    %1107 = vperm.xlu0 %1106, %v121
    %v1108 = vpop.permute.xlu0 %1107
    %1110 = vset.pattern.permute.xlu0 2
    %1111 = vperm.xlu0 %1110, %v122
    %v1112 = vpop.permute.xlu0 %1111
    %v1114 = vmul.f32 %v1034, %v1052
    %v1115 = vmul.f32 %v1035, %v1056
    %v1116 = vmul.f32 %v1036, %v1060
    %v1117 = vmul.f32 %v1037, %v1064
    %v1118 = vmul.f32 %v1038, %v1068
    %v1119 = vmul.f32 %v1039, %v1072
    %v1120 = vmul.f32 %v1040, %v1076
    %v1121 = vmul.f32 %v1041, %v1080
    %v1122 = vmul.f32 %v1042, %v1084
    %v1123 = vmul.f32 %v1043, %v1088
    %v1124 = vmul.f32 %v1044, %v1092
    %v1125 = vmul.f32 %v1045, %v1096
    %v1126 = vmul.f32 %v1046, %v1100
    %v1127 = vmul.f32 %v1047, %v1104
    %v1128 = vmul.f32 %v1048, %v1108
    %v1129 = vmul.f32 %v1049, %v1112
    %v1130 = vadd.f32 %v790, %v1114
    %v1131 = vadd.f32 %v791, %v1115
    %v1132 = vadd.f32 %v792, %v1116
    %v1133 = vadd.f32 %v793, %v1117
    %v1134 = vadd.f32 %v794, %v1118
    %v1135 = vadd.f32 %v795, %v1119
    %v1136 = vadd.f32 %v796, %v1120
    %v1137 = vadd.f32 %v797, %v1121
    %v1138 = vadd.f32 %v798, %v1122
    %v1139 = vadd.f32 %v799, %v1123
    %v1140 = vadd.f32 %v800, %v1124
    %v1141 = vadd.f32 %v801, %v1125
    %v1142 = vadd.f32 %v802, %v1126
    %v1143 = vadd.f32 %v803, %v1127
    %v1144 = vadd.f32 %v804, %v1128
    %v1145 = vadd.f32 %v805, %v1129
    %s1146 = scalar_lea.vmem [#allocation7], 192
    %v1147 = vld [vmem:[%s1146] sm:$0xf]
    %v1148 = vld [vmem:[%s1146 + $0x4] sm:$0xf]
    %v1149 = vld [vmem:[%s1146 + $0x8] sm:$0xf]
    %v1150 = vld [vmem:[%s1146 + $0xc] sm:$0xf]
    %v1151 = vld [vmem:[%s1146 + $0x10] sm:$0xf]
    %v1152 = vld [vmem:[%s1146 + $0x14] sm:$0xf]
    %v1153 = vld [vmem:[%s1146 + $0x18] sm:$0xf]
    %v1154 = vld [vmem:[%s1146 + $0x1c] sm:$0xf]
    %v1155 = vld [vmem:[%s1146 + $0x20] sm:$0xf]
    %v1156 = vld [vmem:[%s1146 + $0x24] sm:$0xf]
    %v1157 = vld [vmem:[%s1146 + $0x28] sm:$0xf]
    %v1158 = vld [vmem:[%s1146 + $0x2c] sm:$0xf]
    %v1159 = vld [vmem:[%s1146 + $0x30] sm:$0xf]
    %v1160 = vld [vmem:[%s1146 + $0x34] sm:$0xf]
    %v1161 = vld [vmem:[%s1146 + $0x38] sm:$0xf]
    %v1162 = vld [vmem:[%s1146 + $0x3c] sm:$0xf]
    %v1163 = vunpack.c.l.bf16 %v1147
    %v1164 = vunpack.c.l.bf16 %v1148
    %v1165 = vunpack.c.l.bf16 %v1149
    %v1166 = vunpack.c.l.bf16 %v1150
    %v1167 = vunpack.c.l.bf16 %v1151
    %v1168 = vunpack.c.l.bf16 %v1152
    %v1169 = vunpack.c.l.bf16 %v1153
    %v1170 = vunpack.c.l.bf16 %v1154
    %v1171 = vunpack.c.l.bf16 %v1155
    %v1172 = vunpack.c.l.bf16 %v1156
    %v1173 = vunpack.c.l.bf16 %v1157
    %v1174 = vunpack.c.l.bf16 %v1158
    %v1175 = vunpack.c.l.bf16 %v1159
    %v1176 = vunpack.c.l.bf16 %v1160
    %v1177 = vunpack.c.l.bf16 %v1161
    %v1178 = vunpack.c.l.bf16 %v1162
    %v1179 = vmul.f32 %v155, %v1163
    %v1180 = vmul.f32 %v155, %v1164
    %v1181 = vmul.f32 %v155, %v1165
    %v1182 = vmul.f32 %v155, %v1166
    %v1183 = vmul.f32 %v155, %v1167
    %v1184 = vmul.f32 %v155, %v1168
    %v1185 = vmul.f32 %v155, %v1169
    %v1186 = vmul.f32 %v155, %v1170
    %v1187 = vmul.f32 %v155, %v1171
    %v1188 = vmul.f32 %v155, %v1172
    %v1189 = vmul.f32 %v155, %v1173
    %v1190 = vmul.f32 %v155, %v1174
    %v1191 = vmul.f32 %v155, %v1175
    %v1192 = vmul.f32 %v155, %v1176
    %v1193 = vmul.f32 %v155, %v1177
    %v1194 = vmul.f32 %v155, %v1178
    %s1195 = scalar_lea.vmem [#allocation7], 448
    %v1196 = vld [vmem:[%s1195] sm:$0xf]
    %v1197 = vld [vmem:[%s1195 + $0x4] sm:$0xf]
    %v1198 = vld [vmem:[%s1195 + $0x8] sm:$0xf]
    %v1199 = vld [vmem:[%s1195 + $0xc] sm:$0xf]
    %v1200 = vld [vmem:[%s1195 + $0x10] sm:$0xf]
    %v1201 = vld [vmem:[%s1195 + $0x14] sm:$0xf]
    %v1202 = vld [vmem:[%s1195 + $0x18] sm:$0xf]
    %v1203 = vld [vmem:[%s1195 + $0x1c] sm:$0xf]
    %v1204 = vld [vmem:[%s1195 + $0x20] sm:$0xf]
    %v1205 = vld [vmem:[%s1195 + $0x24] sm:$0xf]
    %v1206 = vld [vmem:[%s1195 + $0x28] sm:$0xf]
    %v1207 = vld [vmem:[%s1195 + $0x2c] sm:$0xf]
    %v1208 = vld [vmem:[%s1195 + $0x30] sm:$0xf]
    %v1209 = vld [vmem:[%s1195 + $0x34] sm:$0xf]
    %v1210 = vld [vmem:[%s1195 + $0x38] sm:$0xf]
    %v1211 = vld [vmem:[%s1195 + $0x3c] sm:$0xf]
    %v1212 = vunpack.c.l.bf16 %v1196
    %v1213 = vunpack.c.l.bf16 %v1197
    %v1214 = vunpack.c.l.bf16 %v1198
    %v1215 = vunpack.c.l.bf16 %v1199
    %v1216 = vunpack.c.l.bf16 %v1200
    %v1217 = vunpack.c.l.bf16 %v1201
    %v1218 = vunpack.c.l.bf16 %v1202
    %v1219 = vunpack.c.l.bf16 %v1203
    %v1220 = vunpack.c.l.bf16 %v1204
    %v1221 = vunpack.c.l.bf16 %v1205
    %v1222 = vunpack.c.l.bf16 %v1206
    %v1223 = vunpack.c.l.bf16 %v1207
    %v1224 = vunpack.c.l.bf16 %v1208
    %v1225 = vunpack.c.l.bf16 %v1209
    %v1226 = vunpack.c.l.bf16 %v1210
    %v1227 = vunpack.c.l.bf16 %v1211
    %v1228 = vmul.f32 %v205, %v1212
    %v1229 = vmul.f32 %v205, %v1213
    %v1230 = vmul.f32 %v205, %v1214
    %v1231 = vmul.f32 %v205, %v1215
    %v1232 = vmul.f32 %v205, %v1216
    %v1233 = vmul.f32 %v205, %v1217
    %v1234 = vmul.f32 %v205, %v1218
    %v1235 = vmul.f32 %v205, %v1219
    %v1236 = vmul.f32 %v205, %v1220
    %v1237 = vmul.f32 %v205, %v1221
    %v1238 = vmul.f32 %v205, %v1222
    %v1239 = vmul.f32 %v205, %v1223
    %v1240 = vmul.f32 %v205, %v1224
    %v1241 = vmul.f32 %v205, %v1225
    %v1242 = vmul.f32 %v205, %v1226
    %v1243 = vmul.f32 %v205, %v1227
    %v1244 = vadd.f32 %v1179, %v1228
    %v1245 = vadd.f32 %v1180, %v1229
    %v1246 = vadd.f32 %v1181, %v1230
    %v1247 = vadd.f32 %v1182, %v1231
    %v1248 = vadd.f32 %v1183, %v1232
    %v1249 = vadd.f32 %v1184, %v1233
    %v1250 = vadd.f32 %v1185, %v1234
    %v1251 = vadd.f32 %v1186, %v1235
    %v1252 = vadd.f32 %v1187, %v1236
    %v1253 = vadd.f32 %v1188, %v1237
    %v1254 = vadd.f32 %v1189, %v1238
    %v1255 = vadd.f32 %v1190, %v1239
    %v1256 = vadd.f32 %v1191, %v1240
    %v1257 = vadd.f32 %v1192, %v1241
    %v1258 = vadd.f32 %v1193, %v1242
    %v1259 = vadd.f32 %v1194, %v1243
    %s1260 = scalar_lea.vmem [#allocation7], 704
    %v1261 = vld [vmem:[%s1260] sm:$0xf]
    %v1262 = vld [vmem:[%s1260 + $0x4] sm:$0xf]
    %v1263 = vld [vmem:[%s1260 + $0x8] sm:$0xf]
    %v1264 = vld [vmem:[%s1260 + $0xc] sm:$0xf]
    %v1265 = vld [vmem:[%s1260 + $0x10] sm:$0xf]
    %v1266 = vld [vmem:[%s1260 + $0x14] sm:$0xf]
    %v1267 = vld [vmem:[%s1260 + $0x18] sm:$0xf]
    %v1268 = vld [vmem:[%s1260 + $0x1c] sm:$0xf]
    %v1269 = vld [vmem:[%s1260 + $0x20] sm:$0xf]
    %v1270 = vld [vmem:[%s1260 + $0x24] sm:$0xf]
    %v1271 = vld [vmem:[%s1260 + $0x28] sm:$0xf]
    %v1272 = vld [vmem:[%s1260 + $0x2c] sm:$0xf]
    %v1273 = vld [vmem:[%s1260 + $0x30] sm:$0xf]
    %v1274 = vld [vmem:[%s1260 + $0x34] sm:$0xf]
    %v1275 = vld [vmem:[%s1260 + $0x38] sm:$0xf]
    %v1276 = vld [vmem:[%s1260 + $0x3c] sm:$0xf]
    %v1277 = vunpack.c.l.bf16 %v1261
    %v1278 = vunpack.c.l.bf16 %v1262
    %v1279 = vunpack.c.l.bf16 %v1263
    %v1280 = vunpack.c.l.bf16 %v1264
    %v1281 = vunpack.c.l.bf16 %v1265
    %v1282 = vunpack.c.l.bf16 %v1266
    %v1283 = vunpack.c.l.bf16 %v1267
    %v1284 = vunpack.c.l.bf16 %v1268
    %v1285 = vunpack.c.l.bf16 %v1269
    %v1286 = vunpack.c.l.bf16 %v1270
    %v1287 = vunpack.c.l.bf16 %v1271
    %v1288 = vunpack.c.l.bf16 %v1272
    %v1289 = vunpack.c.l.bf16 %v1273
    %v1290 = vunpack.c.l.bf16 %v1274
    %v1291 = vunpack.c.l.bf16 %v1275
    %v1292 = vunpack.c.l.bf16 %v1276
    %v1293 = vmul.f32 %v271, %v1277
    %v1294 = vmul.f32 %v271, %v1278
    %v1295 = vmul.f32 %v271, %v1279
    %v1296 = vmul.f32 %v271, %v1280
    %v1297 = vmul.f32 %v271, %v1281
    %v1298 = vmul.f32 %v271, %v1282
    %v1299 = vmul.f32 %v271, %v1283
    %v1300 = vmul.f32 %v271, %v1284
    %v1301 = vmul.f32 %v271, %v1285
    %v1302 = vmul.f32 %v271, %v1286
    %v1303 = vmul.f32 %v271, %v1287
    %v1304 = vmul.f32 %v271, %v1288
    %v1305 = vmul.f32 %v271, %v1289
    %v1306 = vmul.f32 %v271, %v1290
    %v1307 = vmul.f32 %v271, %v1291
    %v1308 = vmul.f32 %v271, %v1292
    %v1309 = vadd.f32 %v1244, %v1293
    %v1310 = vadd.f32 %v1245, %v1294
    %v1311 = vadd.f32 %v1246, %v1295
    %v1312 = vadd.f32 %v1247, %v1296
    %v1313 = vadd.f32 %v1248, %v1297
    %v1314 = vadd.f32 %v1249, %v1298
    %v1315 = vadd.f32 %v1250, %v1299
    %v1316 = vadd.f32 %v1251, %v1300
    %v1317 = vadd.f32 %v1252, %v1301
    %v1318 = vadd.f32 %v1253, %v1302
    %v1319 = vadd.f32 %v1254, %v1303
    %v1320 = vadd.f32 %v1255, %v1304
    %v1321 = vadd.f32 %v1256, %v1305
    %v1322 = vadd.f32 %v1257, %v1306
    %v1323 = vadd.f32 %v1258, %v1307
    %v1324 = vadd.f32 %v1259, %v1308
    %s1325 = scalar_lea.vmem [#allocation7], 960
    %v1326 = vld [vmem:[%s1325] sm:$0xf]
    %v1327 = vld [vmem:[%s1325 + $0x4] sm:$0xf]
    %v1328 = vld [vmem:[%s1325 + $0x8] sm:$0xf]
    %v1329 = vld [vmem:[%s1325 + $0xc] sm:$0xf]
    %v1330 = vld [vmem:[%s1325 + $0x10] sm:$0xf]
    %v1331 = vld [vmem:[%s1325 + $0x14] sm:$0xf]
    %v1332 = vld [vmem:[%s1325 + $0x18] sm:$0xf]
    %v1333 = vld [vmem:[%s1325 + $0x1c] sm:$0xf]
    %v1334 = vld [vmem:[%s1325 + $0x20] sm:$0xf]
    %v1335 = vld [vmem:[%s1325 + $0x24] sm:$0xf]
    %v1336 = vld [vmem:[%s1325 + $0x28] sm:$0xf]
    %v1337 = vld [vmem:[%s1325 + $0x2c] sm:$0xf]
    %v1338 = vld [vmem:[%s1325 + $0x30] sm:$0xf]
    %v1339 = vld [vmem:[%s1325 + $0x34] sm:$0xf]
    %v1340 = vld [vmem:[%s1325 + $0x38] sm:$0xf]
    %v1341 = vld [vmem:[%s1325 + $0x3c] sm:$0xf]
    %v1342 = vunpack.c.l.bf16 %v1326
    %v1343 = vunpack.c.l.bf16 %v1327
    %v1344 = vunpack.c.l.bf16 %v1328
    %v1345 = vunpack.c.l.bf16 %v1329
    %v1346 = vunpack.c.l.bf16 %v1330
    %v1347 = vunpack.c.l.bf16 %v1331
    %v1348 = vunpack.c.l.bf16 %v1332
    %v1349 = vunpack.c.l.bf16 %v1333
    %v1350 = vunpack.c.l.bf16 %v1334
    %v1351 = vunpack.c.l.bf16 %v1335
    %v1352 = vunpack.c.l.bf16 %v1336
    %v1353 = vunpack.c.l.bf16 %v1337
    %v1354 = vunpack.c.l.bf16 %v1338
    %v1355 = vunpack.c.l.bf16 %v1339
    %v1356 = vunpack.c.l.bf16 %v1340
    %v1357 = vunpack.c.l.bf16 %v1341
    %v1358 = vmul.f32 %v337, %v1342
    %v1359 = vmul.f32 %v337, %v1343
    %v1360 = vmul.f32 %v337, %v1344
    %v1361 = vmul.f32 %v337, %v1345
    %v1362 = vmul.f32 %v337, %v1346
    %v1363 = vmul.f32 %v337, %v1347
    %v1364 = vmul.f32 %v337, %v1348
    %v1365 = vmul.f32 %v337, %v1349
    %v1366 = vmul.f32 %v337, %v1350
    %v1367 = vmul.f32 %v337, %v1351
    %v1368 = vmul.f32 %v337, %v1352
    %v1369 = vmul.f32 %v337, %v1353
    %v1370 = vmul.f32 %v337, %v1354
    %v1371 = vmul.f32 %v337, %v1355
    %v1372 = vmul.f32 %v337, %v1356
    %v1373 = vmul.f32 %v337, %v1357
    %v1374 = vadd.f32 %v1309, %v1358
    %v1375 = vadd.f32 %v1310, %v1359
    %v1376 = vadd.f32 %v1311, %v1360
    %v1377 = vadd.f32 %v1312, %v1361
    %v1378 = vadd.f32 %v1313, %v1362
    %v1379 = vadd.f32 %v1314, %v1363
    %v1380 = vadd.f32 %v1315, %v1364
    %v1381 = vadd.f32 %v1316, %v1365
    %v1382 = vadd.f32 %v1317, %v1366
    %v1383 = vadd.f32 %v1318, %v1367
    %v1384 = vadd.f32 %v1319, %v1368
    %v1385 = vadd.f32 %v1320, %v1369
    %v1386 = vadd.f32 %v1321, %v1370
    %v1387 = vadd.f32 %v1322, %v1371
    %v1388 = vadd.f32 %v1323, %v1372
    %v1389 = vadd.f32 %v1324, %v1373
    %1390 = vset.pattern.permute.xlu0 3
    %1391 = vperm.xlu0 %1390, %v107
    %v1392 = vpop.permute.xlu0 %1391
    %1394 = vset.pattern.permute.xlu0 3
    %1395 = vperm.xlu0 %1394, %v108
    %v1396 = vpop.permute.xlu0 %1395
    %1398 = vset.pattern.permute.xlu0 3
    %1399 = vperm.xlu0 %1398, %v109
    %v1400 = vpop.permute.xlu0 %1399
    %1402 = vset.pattern.permute.xlu0 3
    %1403 = vperm.xlu0 %1402, %v110
    %v1404 = vpop.permute.xlu0 %1403
    %1406 = vset.pattern.permute.xlu0 3
    %1407 = vperm.xlu0 %1406, %v111
    %v1408 = vpop.permute.xlu0 %1407
    %1410 = vset.pattern.permute.xlu0 3
    %1411 = vperm.xlu0 %1410, %v112
    %v1412 = vpop.permute.xlu0 %1411
    %1414 = vset.pattern.permute.xlu0 3
    %1415 = vperm.xlu0 %1414, %v113
    %v1416 = vpop.permute.xlu0 %1415
    %1418 = vset.pattern.permute.xlu0 3
    %1419 = vperm.xlu0 %1418, %v114
    %v1420 = vpop.permute.xlu0 %1419
    %1422 = vset.pattern.permute.xlu0 3
    %1423 = vperm.xlu0 %1422, %v115
    %v1424 = vpop.permute.xlu0 %1423
    %1426 = vset.pattern.permute.xlu0 3
    %1427 = vperm.xlu0 %1426, %v116
    %v1428 = vpop.permute.xlu0 %1427
    %1430 = vset.pattern.permute.xlu0 3
    %1431 = vperm.xlu0 %1430, %v117
    %v1432 = vpop.permute.xlu0 %1431
    %1434 = vset.pattern.permute.xlu0 3
    %1435 = vperm.xlu0 %1434, %v118
    %v1436 = vpop.permute.xlu0 %1435
    %1438 = vset.pattern.permute.xlu0 3
    %1439 = vperm.xlu0 %1438, %v119
    %v1440 = vpop.permute.xlu0 %1439
    %1442 = vset.pattern.permute.xlu0 3
    %1443 = vperm.xlu0 %1442, %v120
    %v1444 = vpop.permute.xlu0 %1443
    %1446 = vset.pattern.permute.xlu0 3
    %1447 = vperm.xlu0 %1446, %v121
    %v1448 = vpop.permute.xlu0 %1447
    %1450 = vset.pattern.permute.xlu0 3
    %1451 = vperm.xlu0 %1450, %v122
    %v1452 = vpop.permute.xlu0 %1451
    %v1454 = vmul.f32 %v1374, %v1392
    %v1455 = vmul.f32 %v1375, %v1396
    %v1456 = vmul.f32 %v1376, %v1400
    %v1457 = vmul.f32 %v1377, %v1404
    %v1458 = vmul.f32 %v1378, %v1408
    %v1459 = vmul.f32 %v1379, %v1412
    %v1460 = vmul.f32 %v1380, %v1416
    %v1461 = vmul.f32 %v1381, %v1420
    %v1462 = vmul.f32 %v1382, %v1424
    %v1463 = vmul.f32 %v1383, %v1428
    %v1464 = vmul.f32 %v1384, %v1432
    %v1465 = vmul.f32 %v1385, %v1436
    %v1466 = vmul.f32 %v1386, %v1440
    %v1467 = vmul.f32 %v1387, %v1444
    %v1468 = vmul.f32 %v1388, %v1448
    %v1469 = vmul.f32 %v1389, %v1452
    %v1470 = vadd.f32 %v1130, %v1454
    %v1471 = vadd.f32 %v1131, %v1455
    %v1472 = vadd.f32 %v1132, %v1456
    %v1473 = vadd.f32 %v1133, %v1457
    %v1474 = vadd.f32 %v1134, %v1458
    %v1475 = vadd.f32 %v1135, %v1459
    %v1476 = vadd.f32 %v1136, %v1460
    %v1477 = vadd.f32 %v1137, %v1461
    %v1478 = vadd.f32 %v1138, %v1462
    %v1479 = vadd.f32 %v1139, %v1463
    %v1480 = vadd.f32 %v1140, %v1464
    %v1481 = vadd.f32 %v1141, %v1465
    %v1482 = vadd.f32 %v1142, %v1466
    %v1483 = vadd.f32 %v1143, %v1467
    %v1484 = vadd.f32 %v1144, %v1468
    %v1485 = vadd.f32 %v1145, %v1469
    %vm1486 = vcmask 31744
    %v1487 = vsel %vm1486, %v107, 0.0
    %1488 = vadd.xlane.f32.xlu0 %v1487
    %v1489 = vpop.xlane.xlu0 %1488
    %v1490 = vsel %vm1486, %v108, 0.0
    %1491 = vadd.xlane.f32.xlu0 %v1490
    %v1492 = vpop.xlane.xlu0 %1491
    %v1493 = vsel %vm1486, %v109, 0.0
    %1494 = vadd.xlane.f32.xlu0 %v1493
    %v1495 = vpop.xlane.xlu0 %1494
    %v1496 = vsel %vm1486, %v110, 0.0
    %1497 = vadd.xlane.f32.xlu0 %v1496
    %v1498 = vpop.xlane.xlu0 %1497
    %v1499 = vsel %vm1486, %v111, 0.0
    %1500 = vadd.xlane.f32.xlu0 %v1499
    %v1501 = vpop.xlane.xlu0 %1500
    %v1502 = vsel %vm1486, %v112, 0.0
    %1503 = vadd.xlane.f32.xlu0 %v1502
    %v1504 = vpop.xlane.xlu0 %1503
    %v1505 = vsel %vm1486, %v113, 0.0
    %1506 = vadd.xlane.f32.xlu0 %v1505
    %v1507 = vpop.xlane.xlu0 %1506
    %v1508 = vsel %vm1486, %v114, 0.0
    %1509 = vadd.xlane.f32.xlu0 %v1508
    %v1510 = vpop.xlane.xlu0 %1509
    %v1511 = vsel %vm1486, %v115, 0.0
    %1512 = vadd.xlane.f32.xlu0 %v1511
    %v1513 = vpop.xlane.xlu0 %1512
    %v1514 = vsel %vm1486, %v116, 0.0
    %1515 = vadd.xlane.f32.xlu0 %v1514
    %v1516 = vpop.xlane.xlu0 %1515
    %v1517 = vsel %vm1486, %v117, 0.0
    %1518 = vadd.xlane.f32.xlu0 %v1517
    %v1519 = vpop.xlane.xlu0 %1518
    %v1520 = vsel %vm1486, %v118, 0.0
    %1521 = vadd.xlane.f32.xlu0 %v1520
    %v1522 = vpop.xlane.xlu0 %1521
    %v1523 = vsel %vm1486, %v119, 0.0
    %1524 = vadd.xlane.f32.xlu0 %v1523
    %v1525 = vpop.xlane.xlu0 %1524
    %v1526 = vsel %vm1486, %v120, 0.0
    %1527 = vadd.xlane.f32.xlu0 %v1526
    %v1528 = vpop.xlane.xlu0 %1527
    %v1529 = vsel %vm1486, %v121, 0.0
    %1530 = vadd.xlane.f32.xlu0 %v1529
    %v1531 = vpop.xlane.xlu0 %1530
    %v1532 = vsel %vm1486, %v122, 0.0
    %1533 = vadd.xlane.f32.xlu0 %v1532
    %v1534 = vpop.xlane.xlu0 %1533
    %v1535 = vmax.f32 %v1489, 1.0
    %v1536 = vmax.f32 %v1492, 1.0
    %v1537 = vmax.f32 %v1495, 1.0
    %v1538 = vmax.f32 %v1498, 1.0
    %v1539 = vmax.f32 %v1501, 1.0
    %v1540 = vmax.f32 %v1504, 1.0
    %v1541 = vmax.f32 %v1507, 1.0
    %v1542 = vmax.f32 %v1510, 1.0
    %v1543 = vmax.f32 %v1513, 1.0
    %v1544 = vmax.f32 %v1516, 1.0
    %v1545 = vmax.f32 %v1519, 1.0
    %v1546 = vmax.f32 %v1522, 1.0
    %v1547 = vmax.f32 %v1525, 1.0
    %v1548 = vmax.f32 %v1528, 1.0
    %v1549 = vmax.f32 %v1531, 1.0
    %v1550 = vmax.f32 %v1534, 1.0
    %v1551 = vrcp.pop %v1535
    %v1552 = vrcp.pop %v1536
    %v1553 = vrcp.pop %v1537
    %v1554 = vrcp.pop %v1538
    %v1555 = vrcp.pop %v1539
    %v1556 = vrcp.pop %v1540
    %v1557 = vrcp.pop %v1541
    %v1558 = vrcp.pop %v1542
    %v1559 = vrcp.pop %v1543
    %v1560 = vrcp.pop %v1544
    %v1561 = vrcp.pop %v1545
    %v1562 = vrcp.pop %v1546
    %v1563 = vrcp.pop %v1547
    %v1564 = vrcp.pop %v1548
    %v1565 = vrcp.pop %v1549
    %v1566 = vrcp.pop %v1550
    %v1567 = vmul.f32 %v1470, %v1551
    %v1568 = vmul.f32 %v1471, %v1552
    %v1569 = vmul.f32 %v1472, %v1553
    %v1570 = vmul.f32 %v1473, %v1554
    %v1571 = vmul.f32 %v1474, %v1555
    %v1572 = vmul.f32 %v1475, %v1556
    %v1573 = vmul.f32 %v1476, %v1557
    %v1574 = vmul.f32 %v1477, %v1558
    %v1575 = vmul.f32 %v1478, %v1559
    %v1576 = vmul.f32 %v1479, %v1560
    %v1577 = vmul.f32 %v1480, %v1561
    %v1578 = vmul.f32 %v1481, %v1562
    %v1579 = vmul.f32 %v1482, %v1563
    %v1580 = vmul.f32 %v1483, %v1564
    %v1581 = vmul.f32 %v1484, %v1565
    %v1582 = vmul.f32 %v1485, %v1566
    %v1583 = vld [vmem:[#allocation9] sm:$0xff]
    %v1584 = vld [vmem:[#allocation9 + $0x8] sm:$0xff]
    %v1585 = vld [vmem:[#allocation9 + $0x10] sm:$0xff]
    %v1586 = vld [vmem:[#allocation9 + $0x18] sm:$0xff]
    %v1587 = vld [vmem:[#allocation9 + $0x20] sm:$0xff]
    %v1588 = vld [vmem:[#allocation9 + $0x28] sm:$0xff]
    %v1589 = vld [vmem:[#allocation9 + $0x30] sm:$0xff]
    %v1590 = vld [vmem:[#allocation9 + $0x38] sm:$0xff]
    %v1591 = vld [vmem:[#allocation9 + $0x40] sm:$0xff]
    %v1592 = vld [vmem:[#allocation9 + $0x48] sm:$0xff]
    %v1593 = vld [vmem:[#allocation9 + $0x50] sm:$0xff]
    %v1594 = vld [vmem:[#allocation9 + $0x58] sm:$0xff]
    %v1595 = vld [vmem:[#allocation9 + $0x60] sm:$0xff]
    %v1596 = vld [vmem:[#allocation9 + $0x68] sm:$0xff]
    %v1597 = vld [vmem:[#allocation9 + $0x70] sm:$0xff]
    %v1598 = vld [vmem:[#allocation9 + $0x78] sm:$0xff]
    %v1599 = vld [vmem:[#allocation6] sm:$0xf]
    %v1600 = vld [vmem:[#allocation6 + $0x4] sm:$0xf]
    %v1601 = vld [vmem:[#allocation6 + $0x8] sm:$0xf]
    %v1602 = vld [vmem:[#allocation6 + $0xc] sm:$0xf]
    %v1603 = vld [vmem:[#allocation6 + $0x10] sm:$0xf]
    %v1604 = vld [vmem:[#allocation6 + $0x14] sm:$0xf]
    %v1605 = vld [vmem:[#allocation6 + $0x18] sm:$0xf]
    %v1606 = vld [vmem:[#allocation6 + $0x1c] sm:$0xf]
    %v1607 = vld [vmem:[#allocation6 + $0x20] sm:$0xf]
    %v1608 = vld [vmem:[#allocation6 + $0x24] sm:$0xf]
    %v1609 = vld [vmem:[#allocation6 + $0x28] sm:$0xf]
    %v1610 = vld [vmem:[#allocation6 + $0x2c] sm:$0xf]
    %v1611 = vld [vmem:[#allocation6 + $0x30] sm:$0xf]
    %v1612 = vld [vmem:[#allocation6 + $0x34] sm:$0xf]
    %v1613 = vld [vmem:[#allocation6 + $0x38] sm:$0xf]
    %v1614 = vld [vmem:[#allocation6 + $0x3c] sm:$0xf]
    %v1615 = vunpack.c.l.bf16 %v1599
    %v1616 = vunpack.c.l.bf16 %v1600
    %v1617 = vunpack.c.l.bf16 %v1601
    %v1618 = vunpack.c.l.bf16 %v1602
    %v1619 = vunpack.c.l.bf16 %v1603
    %v1620 = vunpack.c.l.bf16 %v1604
    %v1621 = vunpack.c.l.bf16 %v1605
    %v1622 = vunpack.c.l.bf16 %v1606
    %v1623 = vunpack.c.l.bf16 %v1607
    %v1624 = vunpack.c.l.bf16 %v1608
    %v1625 = vunpack.c.l.bf16 %v1609
    %v1626 = vunpack.c.l.bf16 %v1610
    %v1627 = vunpack.c.l.bf16 %v1611
    %v1628 = vunpack.c.l.bf16 %v1612
    %v1629 = vunpack.c.l.bf16 %v1613
    %v1630 = vunpack.c.l.bf16 %v1614
    %v1631 = vmul.f32 %v155, %v1615
    %v1632 = vmul.f32 %v155, %v1616
    %v1633 = vmul.f32 %v155, %v1617
    %v1634 = vmul.f32 %v155, %v1618
    %v1635 = vmul.f32 %v155, %v1619
    %v1636 = vmul.f32 %v155, %v1620
    %v1637 = vmul.f32 %v155, %v1621
    %v1638 = vmul.f32 %v155, %v1622
    %v1639 = vmul.f32 %v155, %v1623
    %v1640 = vmul.f32 %v155, %v1624
    %v1641 = vmul.f32 %v155, %v1625
    %v1642 = vmul.f32 %v155, %v1626
    %v1643 = vmul.f32 %v155, %v1627
    %v1644 = vmul.f32 %v155, %v1628
    %v1645 = vmul.f32 %v155, %v1629
    %v1646 = vmul.f32 %v155, %v1630
    %s1647 = scalar_lea.vmem [#allocation6], 256
    %v1648 = vld [vmem:[%s1647] sm:$0xf]
    %v1649 = vld [vmem:[%s1647 + $0x4] sm:$0xf]
    %v1650 = vld [vmem:[%s1647 + $0x8] sm:$0xf]
    %v1651 = vld [vmem:[%s1647 + $0xc] sm:$0xf]
    %v1652 = vld [vmem:[%s1647 + $0x10] sm:$0xf]
    %v1653 = vld [vmem:[%s1647 + $0x14] sm:$0xf]
    %v1654 = vld [vmem:[%s1647 + $0x18] sm:$0xf]
    %v1655 = vld [vmem:[%s1647 + $0x1c] sm:$0xf]
    %v1656 = vld [vmem:[%s1647 + $0x20] sm:$0xf]
    %v1657 = vld [vmem:[%s1647 + $0x24] sm:$0xf]
    %v1658 = vld [vmem:[%s1647 + $0x28] sm:$0xf]
    %v1659 = vld [vmem:[%s1647 + $0x2c] sm:$0xf]
    %v1660 = vld [vmem:[%s1647 + $0x30] sm:$0xf]
    %v1661 = vld [vmem:[%s1647 + $0x34] sm:$0xf]
    %v1662 = vld [vmem:[%s1647 + $0x38] sm:$0xf]
    %v1663 = vld [vmem:[%s1647 + $0x3c] sm:$0xf]
    %v1664 = vunpack.c.l.bf16 %v1648
    %v1665 = vunpack.c.l.bf16 %v1649
    %v1666 = vunpack.c.l.bf16 %v1650
    %v1667 = vunpack.c.l.bf16 %v1651
    %v1668 = vunpack.c.l.bf16 %v1652
    %v1669 = vunpack.c.l.bf16 %v1653
    %v1670 = vunpack.c.l.bf16 %v1654
    %v1671 = vunpack.c.l.bf16 %v1655
    %v1672 = vunpack.c.l.bf16 %v1656
    %v1673 = vunpack.c.l.bf16 %v1657
    %v1674 = vunpack.c.l.bf16 %v1658
    %v1675 = vunpack.c.l.bf16 %v1659
    %v1676 = vunpack.c.l.bf16 %v1660
    %v1677 = vunpack.c.l.bf16 %v1661
    %v1678 = vunpack.c.l.bf16 %v1662
    %v1679 = vunpack.c.l.bf16 %v1663
    %v1680 = vmul.f32 %v205, %v1664
    %v1681 = vmul.f32 %v205, %v1665
    %v1682 = vmul.f32 %v205, %v1666
    %v1683 = vmul.f32 %v205, %v1667
    %v1684 = vmul.f32 %v205, %v1668
    %v1685 = vmul.f32 %v205, %v1669
    %v1686 = vmul.f32 %v205, %v1670
    %v1687 = vmul.f32 %v205, %v1671
    %v1688 = vmul.f32 %v205, %v1672
    %v1689 = vmul.f32 %v205, %v1673
    %v1690 = vmul.f32 %v205, %v1674
    %v1691 = vmul.f32 %v205, %v1675
    %v1692 = vmul.f32 %v205, %v1676
    %v1693 = vmul.f32 %v205, %v1677
    %v1694 = vmul.f32 %v205, %v1678
    %v1695 = vmul.f32 %v205, %v1679
    %v1696 = vadd.f32 %v1631, %v1680
    %v1697 = vadd.f32 %v1632, %v1681
    %v1698 = vadd.f32 %v1633, %v1682
    %v1699 = vadd.f32 %v1634, %v1683
    %v1700 = vadd.f32 %v1635, %v1684
    %v1701 = vadd.f32 %v1636, %v1685
    %v1702 = vadd.f32 %v1637, %v1686
    %v1703 = vadd.f32 %v1638, %v1687
    %v1704 = vadd.f32 %v1639, %v1688
    %v1705 = vadd.f32 %v1640, %v1689
    %v1706 = vadd.f32 %v1641, %v1690
    %v1707 = vadd.f32 %v1642, %v1691
    %v1708 = vadd.f32 %v1643, %v1692
    %v1709 = vadd.f32 %v1644, %v1693
    %v1710 = vadd.f32 %v1645, %v1694
    %v1711 = vadd.f32 %v1646, %v1695
    %s1712 = scalar_lea.vmem [#allocation6], 512
    %v1713 = vld [vmem:[%s1712] sm:$0xf]
    %v1714 = vld [vmem:[%s1712 + $0x4] sm:$0xf]
    %v1715 = vld [vmem:[%s1712 + $0x8] sm:$0xf]
    %v1716 = vld [vmem:[%s1712 + $0xc] sm:$0xf]
    %v1717 = vld [vmem:[%s1712 + $0x10] sm:$0xf]
    %v1718 = vld [vmem:[%s1712 + $0x14] sm:$0xf]
    %v1719 = vld [vmem:[%s1712 + $0x18] sm:$0xf]
    %v1720 = vld [vmem:[%s1712 + $0x1c] sm:$0xf]
    %v1721 = vld [vmem:[%s1712 + $0x20] sm:$0xf]
    %v1722 = vld [vmem:[%s1712 + $0x24] sm:$0xf]
    %v1723 = vld [vmem:[%s1712 + $0x28] sm:$0xf]
    %v1724 = vld [vmem:[%s1712 + $0x2c] sm:$0xf]
    %v1725 = vld [vmem:[%s1712 + $0x30] sm:$0xf]
    %v1726 = vld [vmem:[%s1712 + $0x34] sm:$0xf]
    %v1727 = vld [vmem:[%s1712 + $0x38] sm:$0xf]
    %v1728 = vld [vmem:[%s1712 + $0x3c] sm:$0xf]
    %v1729 = vunpack.c.l.bf16 %v1713
    %v1730 = vunpack.c.l.bf16 %v1714
    %v1731 = vunpack.c.l.bf16 %v1715
    %v1732 = vunpack.c.l.bf16 %v1716
    %v1733 = vunpack.c.l.bf16 %v1717
    %v1734 = vunpack.c.l.bf16 %v1718
    %v1735 = vunpack.c.l.bf16 %v1719
    %v1736 = vunpack.c.l.bf16 %v1720
    %v1737 = vunpack.c.l.bf16 %v1721
    %v1738 = vunpack.c.l.bf16 %v1722
    %v1739 = vunpack.c.l.bf16 %v1723
    %v1740 = vunpack.c.l.bf16 %v1724
    %v1741 = vunpack.c.l.bf16 %v1725
    %v1742 = vunpack.c.l.bf16 %v1726
    %v1743 = vunpack.c.l.bf16 %v1727
    %v1744 = vunpack.c.l.bf16 %v1728
    %v1745 = vmul.f32 %v271, %v1729
    %v1746 = vmul.f32 %v271, %v1730
    %v1747 = vmul.f32 %v271, %v1731
    %v1748 = vmul.f32 %v271, %v1732
    %v1749 = vmul.f32 %v271, %v1733
    %v1750 = vmul.f32 %v271, %v1734
    %v1751 = vmul.f32 %v271, %v1735
    %v1752 = vmul.f32 %v271, %v1736
    %v1753 = vmul.f32 %v271, %v1737
    %v1754 = vmul.f32 %v271, %v1738
    %v1755 = vmul.f32 %v271, %v1739
    %v1756 = vmul.f32 %v271, %v1740
    %v1757 = vmul.f32 %v271, %v1741
    %v1758 = vmul.f32 %v271, %v1742
    %v1759 = vmul.f32 %v271, %v1743
    %v1760 = vmul.f32 %v271, %v1744
    %v1761 = vadd.f32 %v1696, %v1745
    %v1762 = vadd.f32 %v1697, %v1746
    %v1763 = vadd.f32 %v1698, %v1747
    %v1764 = vadd.f32 %v1699, %v1748
    %v1765 = vadd.f32 %v1700, %v1749
    %v1766 = vadd.f32 %v1701, %v1750
    %v1767 = vadd.f32 %v1702, %v1751
    %v1768 = vadd.f32 %v1703, %v1752
    %v1769 = vadd.f32 %v1704, %v1753
    %v1770 = vadd.f32 %v1705, %v1754
    %v1771 = vadd.f32 %v1706, %v1755
    %v1772 = vadd.f32 %v1707, %v1756
    %v1773 = vadd.f32 %v1708, %v1757
    %v1774 = vadd.f32 %v1709, %v1758
    %v1775 = vadd.f32 %v1710, %v1759
    %v1776 = vadd.f32 %v1711, %v1760
    %s1777 = scalar_lea.vmem [#allocation6], 768
    %v1778 = vld [vmem:[%s1777] sm:$0xf]
    %v1779 = vld [vmem:[%s1777 + $0x4] sm:$0xf]
    %v1780 = vld [vmem:[%s1777 + $0x8] sm:$0xf]
    %v1781 = vld [vmem:[%s1777 + $0xc] sm:$0xf]
    %v1782 = vld [vmem:[%s1777 + $0x10] sm:$0xf]
    %v1783 = vld [vmem:[%s1777 + $0x14] sm:$0xf]
    %v1784 = vld [vmem:[%s1777 + $0x18] sm:$0xf]
    %v1785 = vld [vmem:[%s1777 + $0x1c] sm:$0xf]
    %v1786 = vld [vmem:[%s1777 + $0x20] sm:$0xf]
    %v1787 = vld [vmem:[%s1777 + $0x24] sm:$0xf]
    %v1788 = vld [vmem:[%s1777 + $0x28] sm:$0xf]
    %v1789 = vld [vmem:[%s1777 + $0x2c] sm:$0xf]
    %v1790 = vld [vmem:[%s1777 + $0x30] sm:$0xf]
    %v1791 = vld [vmem:[%s1777 + $0x34] sm:$0xf]
    %v1792 = vld [vmem:[%s1777 + $0x38] sm:$0xf]
    %v1793 = vld [vmem:[%s1777 + $0x3c] sm:$0xf]
    %v1794 = vunpack.c.l.bf16 %v1778
    %v1795 = vunpack.c.l.bf16 %v1779
    %v1796 = vunpack.c.l.bf16 %v1780
    %v1797 = vunpack.c.l.bf16 %v1781
    %v1798 = vunpack.c.l.bf16 %v1782
    %v1799 = vunpack.c.l.bf16 %v1783
    %v1800 = vunpack.c.l.bf16 %v1784
    %v1801 = vunpack.c.l.bf16 %v1785
    %v1802 = vunpack.c.l.bf16 %v1786
    %v1803 = vunpack.c.l.bf16 %v1787
    %v1804 = vunpack.c.l.bf16 %v1788
    %v1805 = vunpack.c.l.bf16 %v1789
    %v1806 = vunpack.c.l.bf16 %v1790
    %v1807 = vunpack.c.l.bf16 %v1791
    %v1808 = vunpack.c.l.bf16 %v1792
    %v1809 = vunpack.c.l.bf16 %v1793
    %v1810 = vmul.f32 %v337, %v1794
    %v1811 = vmul.f32 %v337, %v1795
    %v1812 = vmul.f32 %v337, %v1796
    %v1813 = vmul.f32 %v337, %v1797
    %v1814 = vmul.f32 %v337, %v1798
    %v1815 = vmul.f32 %v337, %v1799
    %v1816 = vmul.f32 %v337, %v1800
    %v1817 = vmul.f32 %v337, %v1801
    %v1818 = vmul.f32 %v337, %v1802
    %v1819 = vmul.f32 %v337, %v1803
    %v1820 = vmul.f32 %v337, %v1804
    %v1821 = vmul.f32 %v337, %v1805
    %v1822 = vmul.f32 %v337, %v1806
    %v1823 = vmul.f32 %v337, %v1807
    %v1824 = vmul.f32 %v337, %v1808
    %v1825 = vmul.f32 %v337, %v1809
    %v1826 = vadd.f32 %v1761, %v1810
    %v1827 = vadd.f32 %v1762, %v1811
    %v1828 = vadd.f32 %v1763, %v1812
    %v1829 = vadd.f32 %v1764, %v1813
    %v1830 = vadd.f32 %v1765, %v1814
    %v1831 = vadd.f32 %v1766, %v1815
    %v1832 = vadd.f32 %v1767, %v1816
    %v1833 = vadd.f32 %v1768, %v1817
    %v1834 = vadd.f32 %v1769, %v1818
    %v1835 = vadd.f32 %v1770, %v1819
    %v1836 = vadd.f32 %v1771, %v1820
    %v1837 = vadd.f32 %v1772, %v1821
    %v1838 = vadd.f32 %v1773, %v1822
    %v1839 = vadd.f32 %v1774, %v1823
    %v1840 = vadd.f32 %v1775, %v1824
    %v1841 = vadd.f32 %v1776, %v1825
    %1843 = vset.pattern.permute.xlu0 0
    %1844 = vperm.xlu0 %1843, %v1583
    %v1845 = vpop.permute.xlu0 %1844
    %1848 = vset.pattern.permute.xlu0 0
    %1849 = vperm.xlu0 %1848, %v1584
    %v1850 = vpop.permute.xlu0 %1849
    %1853 = vset.pattern.permute.xlu0 0
    %1854 = vperm.xlu0 %1853, %v1585
    %v1855 = vpop.permute.xlu0 %1854
    %1858 = vset.pattern.permute.xlu0 0
    %1859 = vperm.xlu0 %1858, %v1586
    %v1860 = vpop.permute.xlu0 %1859
    %1863 = vset.pattern.permute.xlu0 0
    %1864 = vperm.xlu0 %1863, %v1587
    %v1865 = vpop.permute.xlu0 %1864
    %1868 = vset.pattern.permute.xlu0 0
    %1869 = vperm.xlu0 %1868, %v1588
    %v1870 = vpop.permute.xlu0 %1869
    %1873 = vset.pattern.permute.xlu0 0
    %1874 = vperm.xlu0 %1873, %v1589
    %v1875 = vpop.permute.xlu0 %1874
    %1878 = vset.pattern.permute.xlu0 0
    %1879 = vperm.xlu0 %1878, %v1590
    %v1880 = vpop.permute.xlu0 %1879
    %1883 = vset.pattern.permute.xlu0 0
    %1884 = vperm.xlu0 %1883, %v1591
    %v1885 = vpop.permute.xlu0 %1884
    %1888 = vset.pattern.permute.xlu0 0
    %1889 = vperm.xlu0 %1888, %v1592
    %v1890 = vpop.permute.xlu0 %1889
    %1893 = vset.pattern.permute.xlu0 0
    %1894 = vperm.xlu0 %1893, %v1593
    %v1895 = vpop.permute.xlu0 %1894
    %1898 = vset.pattern.permute.xlu0 0
    %1899 = vperm.xlu0 %1898, %v1594
    %v1900 = vpop.permute.xlu0 %1899
    %1903 = vset.pattern.permute.xlu0 0
    %1904 = vperm.xlu0 %1903, %v1595
    %v1905 = vpop.permute.xlu0 %1904
    %1908 = vset.pattern.permute.xlu0 0
    %1909 = vperm.xlu0 %1908, %v1596
    %v1910 = vpop.permute.xlu0 %1909
    %1913 = vset.pattern.permute.xlu0 0
    %1914 = vperm.xlu0 %1913, %v1597
    %v1915 = vpop.permute.xlu0 %1914
    %1918 = vset.pattern.permute.xlu0 0
    %1919 = vperm.xlu0 %1918, %v1598
    %v1920 = vpop.permute.xlu0 %1919
    %v1922 = vmul.f32 %v1826, %v1845
    %v1923 = vmul.f32 %v1827, %v1850
    %v1924 = vmul.f32 %v1828, %v1855
    %v1925 = vmul.f32 %v1829, %v1860
    %v1926 = vmul.f32 %v1830, %v1865
    %v1927 = vmul.f32 %v1831, %v1870
    %v1928 = vmul.f32 %v1832, %v1875
    %v1929 = vmul.f32 %v1833, %v1880
    %v1930 = vmul.f32 %v1834, %v1885
    %v1931 = vmul.f32 %v1835, %v1890
    %v1932 = vmul.f32 %v1836, %v1895
    %v1933 = vmul.f32 %v1837, %v1900
    %v1934 = vmul.f32 %v1838, %v1905
    %v1935 = vmul.f32 %v1839, %v1910
    %v1936 = vmul.f32 %v1840, %v1915
    %v1937 = vmul.f32 %v1841, %v1920
    %s1938 = scalar_lea.vmem [#allocation6], 64
    %v1939 = vld [vmem:[%s1938] sm:$0xf]
    %v1940 = vld [vmem:[%s1938 + $0x4] sm:$0xf]
    %v1941 = vld [vmem:[%s1938 + $0x8] sm:$0xf]
    %v1942 = vld [vmem:[%s1938 + $0xc] sm:$0xf]
    %v1943 = vld [vmem:[%s1938 + $0x10] sm:$0xf]
    %v1944 = vld [vmem:[%s1938 + $0x14] sm:$0xf]
    %v1945 = vld [vmem:[%s1938 + $0x18] sm:$0xf]
    %v1946 = vld [vmem:[%s1938 + $0x1c] sm:$0xf]
    %v1947 = vld [vmem:[%s1938 + $0x20] sm:$0xf]
    %v1948 = vld [vmem:[%s1938 + $0x24] sm:$0xf]
    %v1949 = vld [vmem:[%s1938 + $0x28] sm:$0xf]
    %v1950 = vld [vmem:[%s1938 + $0x2c] sm:$0xf]
    %v1951 = vld [vmem:[%s1938 + $0x30] sm:$0xf]
    %v1952 = vld [vmem:[%s1938 + $0x34] sm:$0xf]
    %v1953 = vld [vmem:[%s1938 + $0x38] sm:$0xf]
    %v1954 = vld [vmem:[%s1938 + $0x3c] sm:$0xf]
    %v1955 = vunpack.c.l.bf16 %v1939
    %v1956 = vunpack.c.l.bf16 %v1940
    %v1957 = vunpack.c.l.bf16 %v1941
    %v1958 = vunpack.c.l.bf16 %v1942
    %v1959 = vunpack.c.l.bf16 %v1943
    %v1960 = vunpack.c.l.bf16 %v1944
    %v1961 = vunpack.c.l.bf16 %v1945
    %v1962 = vunpack.c.l.bf16 %v1946
    %v1963 = vunpack.c.l.bf16 %v1947
    %v1964 = vunpack.c.l.bf16 %v1948
    %v1965 = vunpack.c.l.bf16 %v1949
    %v1966 = vunpack.c.l.bf16 %v1950
    %v1967 = vunpack.c.l.bf16 %v1951
    %v1968 = vunpack.c.l.bf16 %v1952
    %v1969 = vunpack.c.l.bf16 %v1953
    %v1970 = vunpack.c.l.bf16 %v1954
    %v1971 = vmul.f32 %v155, %v1955
    %v1972 = vmul.f32 %v155, %v1956
    %v1973 = vmul.f32 %v155, %v1957
    %v1974 = vmul.f32 %v155, %v1958
    %v1975 = vmul.f32 %v155, %v1959
    %v1976 = vmul.f32 %v155, %v1960
    %v1977 = vmul.f32 %v155, %v1961
    %v1978 = vmul.f32 %v155, %v1962
    %v1979 = vmul.f32 %v155, %v1963
    %v1980 = vmul.f32 %v155, %v1964
    %v1981 = vmul.f32 %v155, %v1965
    %v1982 = vmul.f32 %v155, %v1966
    %v1983 = vmul.f32 %v155, %v1967
    %v1984 = vmul.f32 %v155, %v1968
    %v1985 = vmul.f32 %v155, %v1969
    %v1986 = vmul.f32 %v155, %v1970
    %s1987 = scalar_lea.vmem [#allocation6], 320
    %v1988 = vld [vmem:[%s1987] sm:$0xf]
    %v1989 = vld [vmem:[%s1987 + $0x4] sm:$0xf]
    %v1990 = vld [vmem:[%s1987 + $0x8] sm:$0xf]
    %v1991 = vld [vmem:[%s1987 + $0xc] sm:$0xf]
    %v1992 = vld [vmem:[%s1987 + $0x10] sm:$0xf]
    %v1993 = vld [vmem:[%s1987 + $0x14] sm:$0xf]
    %v1994 = vld [vmem:[%s1987 + $0x18] sm:$0xf]
    %v1995 = vld [vmem:[%s1987 + $0x1c] sm:$0xf]
    %v1996 = vld [vmem:[%s1987 + $0x20] sm:$0xf]
    %v1997 = vld [vmem:[%s1987 + $0x24] sm:$0xf]
    %v1998 = vld [vmem:[%s1987 + $0x28] sm:$0xf]
    %v1999 = vld [vmem:[%s1987 + $0x2c] sm:$0xf]
    %v2000 = vld [vmem:[%s1987 + $0x30] sm:$0xf]
    %v2001 = vld [vmem:[%s1987 + $0x34] sm:$0xf]
    %v2002 = vld [vmem:[%s1987 + $0x38] sm:$0xf]
    %v2003 = vld [vmem:[%s1987 + $0x3c] sm:$0xf]
    %v2004 = vunpack.c.l.bf16 %v1988
    %v2005 = vunpack.c.l.bf16 %v1989
    %v2006 = vunpack.c.l.bf16 %v1990
    %v2007 = vunpack.c.l.bf16 %v1991
    %v2008 = vunpack.c.l.bf16 %v1992
    %v2009 = vunpack.c.l.bf16 %v1993
    %v2010 = vunpack.c.l.bf16 %v1994
    %v2011 = vunpack.c.l.bf16 %v1995
    %v2012 = vunpack.c.l.bf16 %v1996
    %v2013 = vunpack.c.l.bf16 %v1997
    %v2014 = vunpack.c.l.bf16 %v1998
    %v2015 = vunpack.c.l.bf16 %v1999
    %v2016 = vunpack.c.l.bf16 %v2000
    %v2017 = vunpack.c.l.bf16 %v2001
    %v2018 = vunpack.c.l.bf16 %v2002
    %v2019 = vunpack.c.l.bf16 %v2003
    %v2020 = vmul.f32 %v205, %v2004
    %v2021 = vmul.f32 %v205, %v2005
    %v2022 = vmul.f32 %v205, %v2006
    %v2023 = vmul.f32 %v205, %v2007
    %v2024 = vmul.f32 %v205, %v2008
    %v2025 = vmul.f32 %v205, %v2009
    %v2026 = vmul.f32 %v205, %v2010
    %v2027 = vmul.f32 %v205, %v2011
    %v2028 = vmul.f32 %v205, %v2012
    %v2029 = vmul.f32 %v205, %v2013
    %v2030 = vmul.f32 %v205, %v2014
    %v2031 = vmul.f32 %v205, %v2015
    %v2032 = vmul.f32 %v205, %v2016
    %v2033 = vmul.f32 %v205, %v2017
    %v2034 = vmul.f32 %v205, %v2018
    %v2035 = vmul.f32 %v205, %v2019
    %v2036 = vadd.f32 %v1971, %v2020
    %v2037 = vadd.f32 %v1972, %v2021
    %v2038 = vadd.f32 %v1973, %v2022
    %v2039 = vadd.f32 %v1974, %v2023
    %v2040 = vadd.f32 %v1975, %v2024
    %v2041 = vadd.f32 %v1976, %v2025
    %v2042 = vadd.f32 %v1977, %v2026
    %v2043 = vadd.f32 %v1978, %v2027
    %v2044 = vadd.f32 %v1979, %v2028
    %v2045 = vadd.f32 %v1980, %v2029
    %v2046 = vadd.f32 %v1981, %v2030
    %v2047 = vadd.f32 %v1982, %v2031
    %v2048 = vadd.f32 %v1983, %v2032
    %v2049 = vadd.f32 %v1984, %v2033
    %v2050 = vadd.f32 %v1985, %v2034
    %v2051 = vadd.f32 %v1986, %v2035
    %s2052 = scalar_lea.vmem [#allocation6], 576
    %v2053 = vld [vmem:[%s2052] sm:$0xf]
    %v2054 = vld [vmem:[%s2052 + $0x4] sm:$0xf]
    %v2055 = vld [vmem:[%s2052 + $0x8] sm:$0xf]
    %v2056 = vld [vmem:[%s2052 + $0xc] sm:$0xf]
    %v2057 = vld [vmem:[%s2052 + $0x10] sm:$0xf]
    %v2058 = vld [vmem:[%s2052 + $0x14] sm:$0xf]
    %v2059 = vld [vmem:[%s2052 + $0x18] sm:$0xf]
    %v2060 = vld [vmem:[%s2052 + $0x1c] sm:$0xf]
    %v2061 = vld [vmem:[%s2052 + $0x20] sm:$0xf]
    %v2062 = vld [vmem:[%s2052 + $0x24] sm:$0xf]
    %v2063 = vld [vmem:[%s2052 + $0x28] sm:$0xf]
    %v2064 = vld [vmem:[%s2052 + $0x2c] sm:$0xf]
    %v2065 = vld [vmem:[%s2052 + $0x30] sm:$0xf]
    %v2066 = vld [vmem:[%s2052 + $0x34] sm:$0xf]
    %v2067 = vld [vmem:[%s2052 + $0x38] sm:$0xf]
    %v2068 = vld [vmem:[%s2052 + $0x3c] sm:$0xf]
    %v2069 = vunpack.c.l.bf16 %v2053
    %v2070 = vunpack.c.l.bf16 %v2054
    %v2071 = vunpack.c.l.bf16 %v2055
    %v2072 = vunpack.c.l.bf16 %v2056
    %v2073 = vunpack.c.l.bf16 %v2057
    %v2074 = vunpack.c.l.bf16 %v2058
    %v2075 = vunpack.c.l.bf16 %v2059
    %v2076 = vunpack.c.l.bf16 %v2060
    %v2077 = vunpack.c.l.bf16 %v2061
    %v2078 = vunpack.c.l.bf16 %v2062
    %v2079 = vunpack.c.l.bf16 %v2063
    %v2080 = vunpack.c.l.bf16 %v2064
    %v2081 = vunpack.c.l.bf16 %v2065
    %v2082 = vunpack.c.l.bf16 %v2066
    %v2083 = vunpack.c.l.bf16 %v2067
    %v2084 = vunpack.c.l.bf16 %v2068
    %v2085 = vmul.f32 %v271, %v2069
    %v2086 = vmul.f32 %v271, %v2070
    %v2087 = vmul.f32 %v271, %v2071
    %v2088 = vmul.f32 %v271, %v2072
    %v2089 = vmul.f32 %v271, %v2073
    %v2090 = vmul.f32 %v271, %v2074
    %v2091 = vmul.f32 %v271, %v2075
    %v2092 = vmul.f32 %v271, %v2076
    %v2093 = vmul.f32 %v271, %v2077
    %v2094 = vmul.f32 %v271, %v2078
    %v2095 = vmul.f32 %v271, %v2079
    %v2096 = vmul.f32 %v271, %v2080
    %v2097 = vmul.f32 %v271, %v2081
    %v2098 = vmul.f32 %v271, %v2082
    %v2099 = vmul.f32 %v271, %v2083
    %v2100 = vmul.f32 %v271, %v2084
    %v2101 = vadd.f32 %v2036, %v2085
    %v2102 = vadd.f32 %v2037, %v2086
    %v2103 = vadd.f32 %v2038, %v2087
    %v2104 = vadd.f32 %v2039, %v2088
    %v2105 = vadd.f32 %v2040, %v2089
    %v2106 = vadd.f32 %v2041, %v2090
    %v2107 = vadd.f32 %v2042, %v2091
    %v2108 = vadd.f32 %v2043, %v2092
    %v2109 = vadd.f32 %v2044, %v2093
    %v2110 = vadd.f32 %v2045, %v2094
    %v2111 = vadd.f32 %v2046, %v2095
    %v2112 = vadd.f32 %v2047, %v2096
    %v2113 = vadd.f32 %v2048, %v2097
    %v2114 = vadd.f32 %v2049, %v2098
    %v2115 = vadd.f32 %v2050, %v2099
    %v2116 = vadd.f32 %v2051, %v2100
    %s2117 = scalar_lea.vmem [#allocation6], 832
    %v2118 = vld [vmem:[%s2117] sm:$0xf]
    %v2119 = vld [vmem:[%s2117 + $0x4] sm:$0xf]
    %v2120 = vld [vmem:[%s2117 + $0x8] sm:$0xf]
    %v2121 = vld [vmem:[%s2117 + $0xc] sm:$0xf]
    %v2122 = vld [vmem:[%s2117 + $0x10] sm:$0xf]
    %v2123 = vld [vmem:[%s2117 + $0x14] sm:$0xf]
    %v2124 = vld [vmem:[%s2117 + $0x18] sm:$0xf]
    %v2125 = vld [vmem:[%s2117 + $0x1c] sm:$0xf]
    %v2126 = vld [vmem:[%s2117 + $0x20] sm:$0xf]
    %v2127 = vld [vmem:[%s2117 + $0x24] sm:$0xf]
    %v2128 = vld [vmem:[%s2117 + $0x28] sm:$0xf]
    %v2129 = vld [vmem:[%s2117 + $0x2c] sm:$0xf]
    %v2130 = vld [vmem:[%s2117 + $0x30] sm:$0xf]
    %v2131 = vld [vmem:[%s2117 + $0x34] sm:$0xf]
    %v2132 = vld [vmem:[%s2117 + $0x38] sm:$0xf]
    %v2133 = vld [vmem:[%s2117 + $0x3c] sm:$0xf]
    %v2134 = vunpack.c.l.bf16 %v2118
    %v2135 = vunpack.c.l.bf16 %v2119
    %v2136 = vunpack.c.l.bf16 %v2120
    %v2137 = vunpack.c.l.bf16 %v2121
    %v2138 = vunpack.c.l.bf16 %v2122
    %v2139 = vunpack.c.l.bf16 %v2123
    %v2140 = vunpack.c.l.bf16 %v2124
    %v2141 = vunpack.c.l.bf16 %v2125
    %v2142 = vunpack.c.l.bf16 %v2126
    %v2143 = vunpack.c.l.bf16 %v2127
    %v2144 = vunpack.c.l.bf16 %v2128
    %v2145 = vunpack.c.l.bf16 %v2129
    %v2146 = vunpack.c.l.bf16 %v2130
    %v2147 = vunpack.c.l.bf16 %v2131
    %v2148 = vunpack.c.l.bf16 %v2132
    %v2149 = vunpack.c.l.bf16 %v2133
    %v2150 = vmul.f32 %v337, %v2134
    %v2151 = vmul.f32 %v337, %v2135
    %v2152 = vmul.f32 %v337, %v2136
    %v2153 = vmul.f32 %v337, %v2137
    %v2154 = vmul.f32 %v337, %v2138
    %v2155 = vmul.f32 %v337, %v2139
    %v2156 = vmul.f32 %v337, %v2140
    %v2157 = vmul.f32 %v337, %v2141
    %v2158 = vmul.f32 %v337, %v2142
    %v2159 = vmul.f32 %v337, %v2143
    %v2160 = vmul.f32 %v337, %v2144
    %v2161 = vmul.f32 %v337, %v2145
    %v2162 = vmul.f32 %v337, %v2146
    %v2163 = vmul.f32 %v337, %v2147
    %v2164 = vmul.f32 %v337, %v2148
    %v2165 = vmul.f32 %v337, %v2149
    %v2166 = vadd.f32 %v2101, %v2150
    %v2167 = vadd.f32 %v2102, %v2151
    %v2168 = vadd.f32 %v2103, %v2152
    %v2169 = vadd.f32 %v2104, %v2153
    %v2170 = vadd.f32 %v2105, %v2154
    %v2171 = vadd.f32 %v2106, %v2155
    %v2172 = vadd.f32 %v2107, %v2156
    %v2173 = vadd.f32 %v2108, %v2157
    %v2174 = vadd.f32 %v2109, %v2158
    %v2175 = vadd.f32 %v2110, %v2159
    %v2176 = vadd.f32 %v2111, %v2160
    %v2177 = vadd.f32 %v2112, %v2161
    %v2178 = vadd.f32 %v2113, %v2162
    %v2179 = vadd.f32 %v2114, %v2163
    %v2180 = vadd.f32 %v2115, %v2164
    %v2181 = vadd.f32 %v2116, %v2165
    %2182 = vset.pattern.permute.xlu0 1
    %2183 = vperm.xlu0 %2182, %v1583
    %v2184 = vpop.permute.xlu0 %2183
    %2186 = vset.pattern.permute.xlu0 1
    %2187 = vperm.xlu0 %2186, %v1584
    %v2188 = vpop.permute.xlu0 %2187
    %2190 = vset.pattern.permute.xlu0 1
    %2191 = vperm.xlu0 %2190, %v1585
    %v2192 = vpop.permute.xlu0 %2191
    %2194 = vset.pattern.permute.xlu0 1
    %2195 = vperm.xlu0 %2194, %v1586
    %v2196 = vpop.permute.xlu0 %2195
    %2198 = vset.pattern.permute.xlu0 1
    %2199 = vperm.xlu0 %2198, %v1587
    %v2200 = vpop.permute.xlu0 %2199
    %2202 = vset.pattern.permute.xlu0 1
    %2203 = vperm.xlu0 %2202, %v1588
    %v2204 = vpop.permute.xlu0 %2203
    %2206 = vset.pattern.permute.xlu0 1
    %2207 = vperm.xlu0 %2206, %v1589
    %v2208 = vpop.permute.xlu0 %2207
    %2210 = vset.pattern.permute.xlu0 1
    %2211 = vperm.xlu0 %2210, %v1590
    %v2212 = vpop.permute.xlu0 %2211
    %2214 = vset.pattern.permute.xlu0 1
    %2215 = vperm.xlu0 %2214, %v1591
    %v2216 = vpop.permute.xlu0 %2215
    %2218 = vset.pattern.permute.xlu0 1
    %2219 = vperm.xlu0 %2218, %v1592
    %v2220 = vpop.permute.xlu0 %2219
    %2222 = vset.pattern.permute.xlu0 1
    %2223 = vperm.xlu0 %2222, %v1593
    %v2224 = vpop.permute.xlu0 %2223
    %2226 = vset.pattern.permute.xlu0 1
    %2227 = vperm.xlu0 %2226, %v1594
    %v2228 = vpop.permute.xlu0 %2227
    %2230 = vset.pattern.permute.xlu0 1
    %2231 = vperm.xlu0 %2230, %v1595
    %v2232 = vpop.permute.xlu0 %2231
    %2234 = vset.pattern.permute.xlu0 1
    %2235 = vperm.xlu0 %2234, %v1596
    %v2236 = vpop.permute.xlu0 %2235
    %2238 = vset.pattern.permute.xlu0 1
    %2239 = vperm.xlu0 %2238, %v1597
    %v2240 = vpop.permute.xlu0 %2239
    %2242 = vset.pattern.permute.xlu0 1
    %2243 = vperm.xlu0 %2242, %v1598
    %v2244 = vpop.permute.xlu0 %2243
    %v2246 = vmul.f32 %v2166, %v2184
    %v2247 = vmul.f32 %v2167, %v2188
    %v2248 = vmul.f32 %v2168, %v2192
    %v2249 = vmul.f32 %v2169, %v2196
    %v2250 = vmul.f32 %v2170, %v2200
    %v2251 = vmul.f32 %v2171, %v2204
    %v2252 = vmul.f32 %v2172, %v2208
    %v2253 = vmul.f32 %v2173, %v2212
    %v2254 = vmul.f32 %v2174, %v2216
    %v2255 = vmul.f32 %v2175, %v2220
    %v2256 = vmul.f32 %v2176, %v2224
    %v2257 = vmul.f32 %v2177, %v2228
    %v2258 = vmul.f32 %v2178, %v2232
    %v2259 = vmul.f32 %v2179, %v2236
    %v2260 = vmul.f32 %v2180, %v2240
    %v2261 = vmul.f32 %v2181, %v2244
    %v2262 = vadd.f32 %v1922, %v2246
    %v2263 = vadd.f32 %v1923, %v2247
    %v2264 = vadd.f32 %v1924, %v2248
    %v2265 = vadd.f32 %v1925, %v2249
    %v2266 = vadd.f32 %v1926, %v2250
    %v2267 = vadd.f32 %v1927, %v2251
    %v2268 = vadd.f32 %v1928, %v2252
    %v2269 = vadd.f32 %v1929, %v2253
    %v2270 = vadd.f32 %v1930, %v2254
    %v2271 = vadd.f32 %v1931, %v2255
    %v2272 = vadd.f32 %v1932, %v2256
    %v2273 = vadd.f32 %v1933, %v2257
    %v2274 = vadd.f32 %v1934, %v2258
    %v2275 = vadd.f32 %v1935, %v2259
    %v2276 = vadd.f32 %v1936, %v2260
    %v2277 = vadd.f32 %v1937, %v2261
    %s2278 = scalar_lea.vmem [#allocation6], 128
    %v2279 = vld [vmem:[%s2278] sm:$0xf]
    %v2280 = vld [vmem:[%s2278 + $0x4] sm:$0xf]
    %v2281 = vld [vmem:[%s2278 + $0x8] sm:$0xf]
    %v2282 = vld [vmem:[%s2278 + $0xc] sm:$0xf]
    %v2283 = vld [vmem:[%s2278 + $0x10] sm:$0xf]
    %v2284 = vld [vmem:[%s2278 + $0x14] sm:$0xf]
    %v2285 = vld [vmem:[%s2278 + $0x18] sm:$0xf]
    %v2286 = vld [vmem:[%s2278 + $0x1c] sm:$0xf]
    %v2287 = vld [vmem:[%s2278 + $0x20] sm:$0xf]
    %v2288 = vld [vmem:[%s2278 + $0x24] sm:$0xf]
    %v2289 = vld [vmem:[%s2278 + $0x28] sm:$0xf]
    %v2290 = vld [vmem:[%s2278 + $0x2c] sm:$0xf]
    %v2291 = vld [vmem:[%s2278 + $0x30] sm:$0xf]
    %v2292 = vld [vmem:[%s2278 + $0x34] sm:$0xf]
    %v2293 = vld [vmem:[%s2278 + $0x38] sm:$0xf]
    %v2294 = vld [vmem:[%s2278 + $0x3c] sm:$0xf]
    %v2295 = vunpack.c.l.bf16 %v2279
    %v2296 = vunpack.c.l.bf16 %v2280
    %v2297 = vunpack.c.l.bf16 %v2281
    %v2298 = vunpack.c.l.bf16 %v2282
    %v2299 = vunpack.c.l.bf16 %v2283
    %v2300 = vunpack.c.l.bf16 %v2284
    %v2301 = vunpack.c.l.bf16 %v2285
    %v2302 = vunpack.c.l.bf16 %v2286
    %v2303 = vunpack.c.l.bf16 %v2287
    %v2304 = vunpack.c.l.bf16 %v2288
    %v2305 = vunpack.c.l.bf16 %v2289
    %v2306 = vunpack.c.l.bf16 %v2290
    %v2307 = vunpack.c.l.bf16 %v2291
    %v2308 = vunpack.c.l.bf16 %v2292
    %v2309 = vunpack.c.l.bf16 %v2293
    %v2310 = vunpack.c.l.bf16 %v2294
    %v2311 = vmul.f32 %v155, %v2295
    %v2312 = vmul.f32 %v155, %v2296
    %v2313 = vmul.f32 %v155, %v2297
    %v2314 = vmul.f32 %v155, %v2298
    %v2315 = vmul.f32 %v155, %v2299
    %v2316 = vmul.f32 %v155, %v2300
    %v2317 = vmul.f32 %v155, %v2301
    %v2318 = vmul.f32 %v155, %v2302
    %v2319 = vmul.f32 %v155, %v2303
    %v2320 = vmul.f32 %v155, %v2304
    %v2321 = vmul.f32 %v155, %v2305
    %v2322 = vmul.f32 %v155, %v2306
    %v2323 = vmul.f32 %v155, %v2307
    %v2324 = vmul.f32 %v155, %v2308
    %v2325 = vmul.f32 %v155, %v2309
    %v2326 = vmul.f32 %v155, %v2310
    %s2327 = scalar_lea.vmem [#allocation6], 384
    %v2328 = vld [vmem:[%s2327] sm:$0xf]
    %v2329 = vld [vmem:[%s2327 + $0x4] sm:$0xf]
    %v2330 = vld [vmem:[%s2327 + $0x8] sm:$0xf]
    %v2331 = vld [vmem:[%s2327 + $0xc] sm:$0xf]
    %v2332 = vld [vmem:[%s2327 + $0x10] sm:$0xf]
    %v2333 = vld [vmem:[%s2327 + $0x14] sm:$0xf]
    %v2334 = vld [vmem:[%s2327 + $0x18] sm:$0xf]
    %v2335 = vld [vmem:[%s2327 + $0x1c] sm:$0xf]
    %v2336 = vld [vmem:[%s2327 + $0x20] sm:$0xf]
    %v2337 = vld [vmem:[%s2327 + $0x24] sm:$0xf]
    %v2338 = vld [vmem:[%s2327 + $0x28] sm:$0xf]
    %v2339 = vld [vmem:[%s2327 + $0x2c] sm:$0xf]
    %v2340 = vld [vmem:[%s2327 + $0x30] sm:$0xf]
    %v2341 = vld [vmem:[%s2327 + $0x34] sm:$0xf]
    %v2342 = vld [vmem:[%s2327 + $0x38] sm:$0xf]
    %v2343 = vld [vmem:[%s2327 + $0x3c] sm:$0xf]
    %v2344 = vunpack.c.l.bf16 %v2328
    %v2345 = vunpack.c.l.bf16 %v2329
    %v2346 = vunpack.c.l.bf16 %v2330
    %v2347 = vunpack.c.l.bf16 %v2331
    %v2348 = vunpack.c.l.bf16 %v2332
    %v2349 = vunpack.c.l.bf16 %v2333
    %v2350 = vunpack.c.l.bf16 %v2334
    %v2351 = vunpack.c.l.bf16 %v2335
    %v2352 = vunpack.c.l.bf16 %v2336
    %v2353 = vunpack.c.l.bf16 %v2337
    %v2354 = vunpack.c.l.bf16 %v2338
    %v2355 = vunpack.c.l.bf16 %v2339
    %v2356 = vunpack.c.l.bf16 %v2340
    %v2357 = vunpack.c.l.bf16 %v2341
    %v2358 = vunpack.c.l.bf16 %v2342
    %v2359 = vunpack.c.l.bf16 %v2343
    %v2360 = vmul.f32 %v205, %v2344
    %v2361 = vmul.f32 %v205, %v2345
    %v2362 = vmul.f32 %v205, %v2346
    %v2363 = vmul.f32 %v205, %v2347
    %v2364 = vmul.f32 %v205, %v2348
    %v2365 = vmul.f32 %v205, %v2349
    %v2366 = vmul.f32 %v205, %v2350
    %v2367 = vmul.f32 %v205, %v2351
    %v2368 = vmul.f32 %v205, %v2352
    %v2369 = vmul.f32 %v205, %v2353
    %v2370 = vmul.f32 %v205, %v2354
    %v2371 = vmul.f32 %v205, %v2355
    %v2372 = vmul.f32 %v205, %v2356
    %v2373 = vmul.f32 %v205, %v2357
    %v2374 = vmul.f32 %v205, %v2358
    %v2375 = vmul.f32 %v205, %v2359
    %v2376 = vadd.f32 %v2311, %v2360
    %v2377 = vadd.f32 %v2312, %v2361
    %v2378 = vadd.f32 %v2313, %v2362
    %v2379 = vadd.f32 %v2314, %v2363
    %v2380 = vadd.f32 %v2315, %v2364
    %v2381 = vadd.f32 %v2316, %v2365
    %v2382 = vadd.f32 %v2317, %v2366
    %v2383 = vadd.f32 %v2318, %v2367
    %v2384 = vadd.f32 %v2319, %v2368
    %v2385 = vadd.f32 %v2320, %v2369
    %v2386 = vadd.f32 %v2321, %v2370
    %v2387 = vadd.f32 %v2322, %v2371
    %v2388 = vadd.f32 %v2323, %v2372
    %v2389 = vadd.f32 %v2324, %v2373
    %v2390 = vadd.f32 %v2325, %v2374
    %v2391 = vadd.f32 %v2326, %v2375
    %s2392 = scalar_lea.vmem [#allocation6], 640
    %v2393 = vld [vmem:[%s2392] sm:$0xf]
    %v2394 = vld [vmem:[%s2392 + $0x4] sm:$0xf]
    %v2395 = vld [vmem:[%s2392 + $0x8] sm:$0xf]
    %v2396 = vld [vmem:[%s2392 + $0xc] sm:$0xf]
    %v2397 = vld [vmem:[%s2392 + $0x10] sm:$0xf]
    %v2398 = vld [vmem:[%s2392 + $0x14] sm:$0xf]
    %v2399 = vld [vmem:[%s2392 + $0x18] sm:$0xf]
    %v2400 = vld [vmem:[%s2392 + $0x1c] sm:$0xf]
    %v2401 = vld [vmem:[%s2392 + $0x20] sm:$0xf]
    %v2402 = vld [vmem:[%s2392 + $0x24] sm:$0xf]
    %v2403 = vld [vmem:[%s2392 + $0x28] sm:$0xf]
    %v2404 = vld [vmem:[%s2392 + $0x2c] sm:$0xf]
    %v2405 = vld [vmem:[%s2392 + $0x30] sm:$0xf]
    %v2406 = vld [vmem:[%s2392 + $0x34] sm:$0xf]
    %v2407 = vld [vmem:[%s2392 + $0x38] sm:$0xf]
    %v2408 = vld [vmem:[%s2392 + $0x3c] sm:$0xf]
    %v2409 = vunpack.c.l.bf16 %v2393
    %v2410 = vunpack.c.l.bf16 %v2394
    %v2411 = vunpack.c.l.bf16 %v2395
    %v2412 = vunpack.c.l.bf16 %v2396
    %v2413 = vunpack.c.l.bf16 %v2397
    %v2414 = vunpack.c.l.bf16 %v2398
    %v2415 = vunpack.c.l.bf16 %v2399
    %v2416 = vunpack.c.l.bf16 %v2400
    %v2417 = vunpack.c.l.bf16 %v2401
    %v2418 = vunpack.c.l.bf16 %v2402
    %v2419 = vunpack.c.l.bf16 %v2403
    %v2420 = vunpack.c.l.bf16 %v2404
    %v2421 = vunpack.c.l.bf16 %v2405
    %v2422 = vunpack.c.l.bf16 %v2406
    %v2423 = vunpack.c.l.bf16 %v2407
    %v2424 = vunpack.c.l.bf16 %v2408
    %v2425 = vmul.f32 %v271, %v2409
    %v2426 = vmul.f32 %v271, %v2410
    %v2427 = vmul.f32 %v271, %v2411
    %v2428 = vmul.f32 %v271, %v2412
    %v2429 = vmul.f32 %v271, %v2413
    %v2430 = vmul.f32 %v271, %v2414
    %v2431 = vmul.f32 %v271, %v2415
    %v2432 = vmul.f32 %v271, %v2416
    %v2433 = vmul.f32 %v271, %v2417
    %v2434 = vmul.f32 %v271, %v2418
    %v2435 = vmul.f32 %v271, %v2419
    %v2436 = vmul.f32 %v271, %v2420
    %v2437 = vmul.f32 %v271, %v2421
    %v2438 = vmul.f32 %v271, %v2422
    %v2439 = vmul.f32 %v271, %v2423
    %v2440 = vmul.f32 %v271, %v2424
    %v2441 = vadd.f32 %v2376, %v2425
    %v2442 = vadd.f32 %v2377, %v2426
    %v2443 = vadd.f32 %v2378, %v2427
    %v2444 = vadd.f32 %v2379, %v2428
    %v2445 = vadd.f32 %v2380, %v2429
    %v2446 = vadd.f32 %v2381, %v2430
    %v2447 = vadd.f32 %v2382, %v2431
    %v2448 = vadd.f32 %v2383, %v2432
    %v2449 = vadd.f32 %v2384, %v2433
    %v2450 = vadd.f32 %v2385, %v2434
    %v2451 = vadd.f32 %v2386, %v2435
    %v2452 = vadd.f32 %v2387, %v2436
    %v2453 = vadd.f32 %v2388, %v2437
    %v2454 = vadd.f32 %v2389, %v2438
    %v2455 = vadd.f32 %v2390, %v2439
    %v2456 = vadd.f32 %v2391, %v2440
    %s2457 = scalar_lea.vmem [#allocation6], 896
    %v2458 = vld [vmem:[%s2457] sm:$0xf]
    %v2459 = vld [vmem:[%s2457 + $0x4] sm:$0xf]
    %v2460 = vld [vmem:[%s2457 + $0x8] sm:$0xf]
    %v2461 = vld [vmem:[%s2457 + $0xc] sm:$0xf]
    %v2462 = vld [vmem:[%s2457 + $0x10] sm:$0xf]
    %v2463 = vld [vmem:[%s2457 + $0x14] sm:$0xf]
    %v2464 = vld [vmem:[%s2457 + $0x18] sm:$0xf]
    %v2465 = vld [vmem:[%s2457 + $0x1c] sm:$0xf]
    %v2466 = vld [vmem:[%s2457 + $0x20] sm:$0xf]
    %v2467 = vld [vmem:[%s2457 + $0x24] sm:$0xf]
    %v2468 = vld [vmem:[%s2457 + $0x28] sm:$0xf]
    %v2469 = vld [vmem:[%s2457 + $0x2c] sm:$0xf]
    %v2470 = vld [vmem:[%s2457 + $0x30] sm:$0xf]
    %v2471 = vld [vmem:[%s2457 + $0x34] sm:$0xf]
    %v2472 = vld [vmem:[%s2457 + $0x38] sm:$0xf]
    %v2473 = vld [vmem:[%s2457 + $0x3c] sm:$0xf]
    %v2474 = vunpack.c.l.bf16 %v2458
    %v2475 = vunpack.c.l.bf16 %v2459
    %v2476 = vunpack.c.l.bf16 %v2460
    %v2477 = vunpack.c.l.bf16 %v2461
    %v2478 = vunpack.c.l.bf16 %v2462
    %v2479 = vunpack.c.l.bf16 %v2463
    %v2480 = vunpack.c.l.bf16 %v2464
    %v2481 = vunpack.c.l.bf16 %v2465
    %v2482 = vunpack.c.l.bf16 %v2466
    %v2483 = vunpack.c.l.bf16 %v2467
    %v2484 = vunpack.c.l.bf16 %v2468
    %v2485 = vunpack.c.l.bf16 %v2469
    %v2486 = vunpack.c.l.bf16 %v2470
    %v2487 = vunpack.c.l.bf16 %v2471
    %v2488 = vunpack.c.l.bf16 %v2472
    %v2489 = vunpack.c.l.bf16 %v2473
    %v2490 = vmul.f32 %v337, %v2474
    %v2491 = vmul.f32 %v337, %v2475
    %v2492 = vmul.f32 %v337, %v2476
    %v2493 = vmul.f32 %v337, %v2477
    %v2494 = vmul.f32 %v337, %v2478
    %v2495 = vmul.f32 %v337, %v2479
    %v2496 = vmul.f32 %v337, %v2480
    %v2497 = vmul.f32 %v337, %v2481
    %v2498 = vmul.f32 %v337, %v2482
    %v2499 = vmul.f32 %v337, %v2483
    %v2500 = vmul.f32 %v337, %v2484
    %v2501 = vmul.f32 %v337, %v2485
    %v2502 = vmul.f32 %v337, %v2486
    %v2503 = vmul.f32 %v337, %v2487
    %v2504 = vmul.f32 %v337, %v2488
    %v2505 = vmul.f32 %v337, %v2489
    %v2506 = vadd.f32 %v2441, %v2490
    %v2507 = vadd.f32 %v2442, %v2491
    %v2508 = vadd.f32 %v2443, %v2492
    %v2509 = vadd.f32 %v2444, %v2493
    %v2510 = vadd.f32 %v2445, %v2494
    %v2511 = vadd.f32 %v2446, %v2495
    %v2512 = vadd.f32 %v2447, %v2496
    %v2513 = vadd.f32 %v2448, %v2497
    %v2514 = vadd.f32 %v2449, %v2498
    %v2515 = vadd.f32 %v2450, %v2499
    %v2516 = vadd.f32 %v2451, %v2500
    %v2517 = vadd.f32 %v2452, %v2501
    %v2518 = vadd.f32 %v2453, %v2502
    %v2519 = vadd.f32 %v2454, %v2503
    %v2520 = vadd.f32 %v2455, %v2504
    %v2521 = vadd.f32 %v2456, %v2505
    %2522 = vset.pattern.permute.xlu0 2
    %2523 = vperm.xlu0 %2522, %v1583
    %v2524 = vpop.permute.xlu0 %2523
    %2526 = vset.pattern.permute.xlu0 2
    %2527 = vperm.xlu0 %2526, %v1584
    %v2528 = vpop.permute.xlu0 %2527
    %2530 = vset.pattern.permute.xlu0 2
    %2531 = vperm.xlu0 %2530, %v1585
    %v2532 = vpop.permute.xlu0 %2531
    %2534 = vset.pattern.permute.xlu0 2
    %2535 = vperm.xlu0 %2534, %v1586
    %v2536 = vpop.permute.xlu0 %2535
    %2538 = vset.pattern.permute.xlu0 2
    %2539 = vperm.xlu0 %2538, %v1587
    %v2540 = vpop.permute.xlu0 %2539
    %2542 = vset.pattern.permute.xlu0 2
    %2543 = vperm.xlu0 %2542, %v1588
    %v2544 = vpop.permute.xlu0 %2543
    %2546 = vset.pattern.permute.xlu0 2
    %2547 = vperm.xlu0 %2546, %v1589
    %v2548 = vpop.permute.xlu0 %2547
    %2550 = vset.pattern.permute.xlu0 2
    %2551 = vperm.xlu0 %2550, %v1590
    %v2552 = vpop.permute.xlu0 %2551
    %2554 = vset.pattern.permute.xlu0 2
    %2555 = vperm.xlu0 %2554, %v1591
    %v2556 = vpop.permute.xlu0 %2555
    %2558 = vset.pattern.permute.xlu0 2
    %2559 = vperm.xlu0 %2558, %v1592
    %v2560 = vpop.permute.xlu0 %2559
    %2562 = vset.pattern.permute.xlu0 2
    %2563 = vperm.xlu0 %2562, %v1593
    %v2564 = vpop.permute.xlu0 %2563
    %2566 = vset.pattern.permute.xlu0 2
    %2567 = vperm.xlu0 %2566, %v1594
    %v2568 = vpop.permute.xlu0 %2567
    %2570 = vset.pattern.permute.xlu0 2
    %2571 = vperm.xlu0 %2570, %v1595
    %v2572 = vpop.permute.xlu0 %2571
    %2574 = vset.pattern.permute.xlu0 2
    %2575 = vperm.xlu0 %2574, %v1596
    %v2576 = vpop.permute.xlu0 %2575
    %2578 = vset.pattern.permute.xlu0 2
    %2579 = vperm.xlu0 %2578, %v1597
    %v2580 = vpop.permute.xlu0 %2579
    %2582 = vset.pattern.permute.xlu0 2
    %2583 = vperm.xlu0 %2582, %v1598
    %v2584 = vpop.permute.xlu0 %2583
    %v2586 = vmul.f32 %v2506, %v2524
    %v2587 = vmul.f32 %v2507, %v2528
    %v2588 = vmul.f32 %v2508, %v2532
    %v2589 = vmul.f32 %v2509, %v2536
    %v2590 = vmul.f32 %v2510, %v2540
    %v2591 = vmul.f32 %v2511, %v2544
    %v2592 = vmul.f32 %v2512, %v2548
    %v2593 = vmul.f32 %v2513, %v2552
    %v2594 = vmul.f32 %v2514, %v2556
    %v2595 = vmul.f32 %v2515, %v2560
    %v2596 = vmul.f32 %v2516, %v2564
    %v2597 = vmul.f32 %v2517, %v2568
    %v2598 = vmul.f32 %v2518, %v2572
    %v2599 = vmul.f32 %v2519, %v2576
    %v2600 = vmul.f32 %v2520, %v2580
    %v2601 = vmul.f32 %v2521, %v2584
    %v2602 = vadd.f32 %v2262, %v2586
    %v2603 = vadd.f32 %v2263, %v2587
    %v2604 = vadd.f32 %v2264, %v2588
    %v2605 = vadd.f32 %v2265, %v2589
    %v2606 = vadd.f32 %v2266, %v2590
    %v2607 = vadd.f32 %v2267, %v2591
    %v2608 = vadd.f32 %v2268, %v2592
    %v2609 = vadd.f32 %v2269, %v2593
    %v2610 = vadd.f32 %v2270, %v2594
    %v2611 = vadd.f32 %v2271, %v2595
    %v2612 = vadd.f32 %v2272, %v2596
    %v2613 = vadd.f32 %v2273, %v2597
    %v2614 = vadd.f32 %v2274, %v2598
    %v2615 = vadd.f32 %v2275, %v2599
    %v2616 = vadd.f32 %v2276, %v2600
    %v2617 = vadd.f32 %v2277, %v2601
    %s2618 = scalar_lea.vmem [#allocation6], 192
    %v2619 = vld [vmem:[%s2618] sm:$0xf]
    %v2620 = vld [vmem:[%s2618 + $0x4] sm:$0xf]
    %v2621 = vld [vmem:[%s2618 + $0x8] sm:$0xf]
    %v2622 = vld [vmem:[%s2618 + $0xc] sm:$0xf]
    %v2623 = vld [vmem:[%s2618 + $0x10] sm:$0xf]
    %v2624 = vld [vmem:[%s2618 + $0x14] sm:$0xf]
    %v2625 = vld [vmem:[%s2618 + $0x18] sm:$0xf]
    %v2626 = vld [vmem:[%s2618 + $0x1c] sm:$0xf]
    %v2627 = vld [vmem:[%s2618 + $0x20] sm:$0xf]
    %v2628 = vld [vmem:[%s2618 + $0x24] sm:$0xf]
    %v2629 = vld [vmem:[%s2618 + $0x28] sm:$0xf]
    %v2630 = vld [vmem:[%s2618 + $0x2c] sm:$0xf]
    %v2631 = vld [vmem:[%s2618 + $0x30] sm:$0xf]
    %v2632 = vld [vmem:[%s2618 + $0x34] sm:$0xf]
    %v2633 = vld [vmem:[%s2618 + $0x38] sm:$0xf]
    %v2634 = vld [vmem:[%s2618 + $0x3c] sm:$0xf]
    %v2635 = vunpack.c.l.bf16 %v2619
    %v2636 = vunpack.c.l.bf16 %v2620
    %v2637 = vunpack.c.l.bf16 %v2621
    %v2638 = vunpack.c.l.bf16 %v2622
    %v2639 = vunpack.c.l.bf16 %v2623
    %v2640 = vunpack.c.l.bf16 %v2624
    %v2641 = vunpack.c.l.bf16 %v2625
    %v2642 = vunpack.c.l.bf16 %v2626
    %v2643 = vunpack.c.l.bf16 %v2627
    %v2644 = vunpack.c.l.bf16 %v2628
    %v2645 = vunpack.c.l.bf16 %v2629
    %v2646 = vunpack.c.l.bf16 %v2630
    %v2647 = vunpack.c.l.bf16 %v2631
    %v2648 = vunpack.c.l.bf16 %v2632
    %v2649 = vunpack.c.l.bf16 %v2633
    %v2650 = vunpack.c.l.bf16 %v2634
    %v2651 = vmul.f32 %v155, %v2635
    %v2652 = vmul.f32 %v155, %v2636
    %v2653 = vmul.f32 %v155, %v2637
    %v2654 = vmul.f32 %v155, %v2638
    %v2655 = vmul.f32 %v155, %v2639
    %v2656 = vmul.f32 %v155, %v2640
    %v2657 = vmul.f32 %v155, %v2641
    %v2658 = vmul.f32 %v155, %v2642
    %v2659 = vmul.f32 %v155, %v2643
    %v2660 = vmul.f32 %v155, %v2644
    %v2661 = vmul.f32 %v155, %v2645
    %v2662 = vmul.f32 %v155, %v2646
    %v2663 = vmul.f32 %v155, %v2647
    %v2664 = vmul.f32 %v155, %v2648
    %v2665 = vmul.f32 %v155, %v2649
    %v2666 = vmul.f32 %v155, %v2650
    %s2667 = scalar_lea.vmem [#allocation6], 448
    %v2668 = vld [vmem:[%s2667] sm:$0xf]
    %v2669 = vld [vmem:[%s2667 + $0x4] sm:$0xf]
    %v2670 = vld [vmem:[%s2667 + $0x8] sm:$0xf]
    %v2671 = vld [vmem:[%s2667 + $0xc] sm:$0xf]
    %v2672 = vld [vmem:[%s2667 + $0x10] sm:$0xf]
    %v2673 = vld [vmem:[%s2667 + $0x14] sm:$0xf]
    %v2674 = vld [vmem:[%s2667 + $0x18] sm:$0xf]
    %v2675 = vld [vmem:[%s2667 + $0x1c] sm:$0xf]
    %v2676 = vld [vmem:[%s2667 + $0x20] sm:$0xf]
    %v2677 = vld [vmem:[%s2667 + $0x24] sm:$0xf]
    %v2678 = vld [vmem:[%s2667 + $0x28] sm:$0xf]
    %v2679 = vld [vmem:[%s2667 + $0x2c] sm:$0xf]
    %v2680 = vld [vmem:[%s2667 + $0x30] sm:$0xf]
    %v2681 = vld [vmem:[%s2667 + $0x34] sm:$0xf]
    %v2682 = vld [vmem:[%s2667 + $0x38] sm:$0xf]
    %v2683 = vld [vmem:[%s2667 + $0x3c] sm:$0xf]
    %v2684 = vunpack.c.l.bf16 %v2668
    %v2685 = vunpack.c.l.bf16 %v2669
    %v2686 = vunpack.c.l.bf16 %v2670
    %v2687 = vunpack.c.l.bf16 %v2671
    %v2688 = vunpack.c.l.bf16 %v2672
    %v2689 = vunpack.c.l.bf16 %v2673
    %v2690 = vunpack.c.l.bf16 %v2674
    %v2691 = vunpack.c.l.bf16 %v2675
    %v2692 = vunpack.c.l.bf16 %v2676
    %v2693 = vunpack.c.l.bf16 %v2677
    %v2694 = vunpack.c.l.bf16 %v2678
    %v2695 = vunpack.c.l.bf16 %v2679
    %v2696 = vunpack.c.l.bf16 %v2680
    %v2697 = vunpack.c.l.bf16 %v2681
    %v2698 = vunpack.c.l.bf16 %v2682
    %v2699 = vunpack.c.l.bf16 %v2683
    %v2700 = vmul.f32 %v205, %v2684
    %v2701 = vmul.f32 %v205, %v2685
    %v2702 = vmul.f32 %v205, %v2686
    %v2703 = vmul.f32 %v205, %v2687
    %v2704 = vmul.f32 %v205, %v2688
    %v2705 = vmul.f32 %v205, %v2689
    %v2706 = vmul.f32 %v205, %v2690
    %v2707 = vmul.f32 %v205, %v2691
    %v2708 = vmul.f32 %v205, %v2692
    %v2709 = vmul.f32 %v205, %v2693
    %v2710 = vmul.f32 %v205, %v2694
    %v2711 = vmul.f32 %v205, %v2695
    %v2712 = vmul.f32 %v205, %v2696
    %v2713 = vmul.f32 %v205, %v2697
    %v2714 = vmul.f32 %v205, %v2698
    %v2715 = vmul.f32 %v205, %v2699
    %v2716 = vadd.f32 %v2651, %v2700
    %v2717 = vadd.f32 %v2652, %v2701
    %v2718 = vadd.f32 %v2653, %v2702
    %v2719 = vadd.f32 %v2654, %v2703
    %v2720 = vadd.f32 %v2655, %v2704
    %v2721 = vadd.f32 %v2656, %v2705
    %v2722 = vadd.f32 %v2657, %v2706
    %v2723 = vadd.f32 %v2658, %v2707
    %v2724 = vadd.f32 %v2659, %v2708
    %v2725 = vadd.f32 %v2660, %v2709
    %v2726 = vadd.f32 %v2661, %v2710
    %v2727 = vadd.f32 %v2662, %v2711
    %v2728 = vadd.f32 %v2663, %v2712
    %v2729 = vadd.f32 %v2664, %v2713
    %v2730 = vadd.f32 %v2665, %v2714
    %v2731 = vadd.f32 %v2666, %v2715
    %s2732 = scalar_lea.vmem [#allocation6], 704
    %v2733 = vld [vmem:[%s2732] sm:$0xf]
    %v2734 = vld [vmem:[%s2732 + $0x4] sm:$0xf]
    %v2735 = vld [vmem:[%s2732 + $0x8] sm:$0xf]
    %v2736 = vld [vmem:[%s2732 + $0xc] sm:$0xf]
    %v2737 = vld [vmem:[%s2732 + $0x10] sm:$0xf]
    %v2738 = vld [vmem:[%s2732 + $0x14] sm:$0xf]
    %v2739 = vld [vmem:[%s2732 + $0x18] sm:$0xf]
    %v2740 = vld [vmem:[%s2732 + $0x1c] sm:$0xf]
    %v2741 = vld [vmem:[%s2732 + $0x20] sm:$0xf]
    %v2742 = vld [vmem:[%s2732 + $0x24] sm:$0xf]
    %v2743 = vld [vmem:[%s2732 + $0x28] sm:$0xf]
    %v2744 = vld [vmem:[%s2732 + $0x2c] sm:$0xf]
    %v2745 = vld [vmem:[%s2732 + $0x30] sm:$0xf]
    %v2746 = vld [vmem:[%s2732 + $0x34] sm:$0xf]
    %v2747 = vld [vmem:[%s2732 + $0x38] sm:$0xf]
    %v2748 = vld [vmem:[%s2732 + $0x3c] sm:$0xf]
    %v2749 = vunpack.c.l.bf16 %v2733
    %v2750 = vunpack.c.l.bf16 %v2734
    %v2751 = vunpack.c.l.bf16 %v2735
    %v2752 = vunpack.c.l.bf16 %v2736
    %v2753 = vunpack.c.l.bf16 %v2737
    %v2754 = vunpack.c.l.bf16 %v2738
    %v2755 = vunpack.c.l.bf16 %v2739
    %v2756 = vunpack.c.l.bf16 %v2740
    %v2757 = vunpack.c.l.bf16 %v2741
    %v2758 = vunpack.c.l.bf16 %v2742
    %v2759 = vunpack.c.l.bf16 %v2743
    %v2760 = vunpack.c.l.bf16 %v2744
    %v2761 = vunpack.c.l.bf16 %v2745
    %v2762 = vunpack.c.l.bf16 %v2746
    %v2763 = vunpack.c.l.bf16 %v2747
    %v2764 = vunpack.c.l.bf16 %v2748
    %v2765 = vmul.f32 %v271, %v2749
    %v2766 = vmul.f32 %v271, %v2750
    %v2767 = vmul.f32 %v271, %v2751
    %v2768 = vmul.f32 %v271, %v2752
    %v2769 = vmul.f32 %v271, %v2753
    %v2770 = vmul.f32 %v271, %v2754
    %v2771 = vmul.f32 %v271, %v2755
    %v2772 = vmul.f32 %v271, %v2756
    %v2773 = vmul.f32 %v271, %v2757
    %v2774 = vmul.f32 %v271, %v2758
    %v2775 = vmul.f32 %v271, %v2759
    %v2776 = vmul.f32 %v271, %v2760
    %v2777 = vmul.f32 %v271, %v2761
    %v2778 = vmul.f32 %v271, %v2762
    %v2779 = vmul.f32 %v271, %v2763
    %v2780 = vmul.f32 %v271, %v2764
    %v2781 = vadd.f32 %v2716, %v2765
    %v2782 = vadd.f32 %v2717, %v2766
    %v2783 = vadd.f32 %v2718, %v2767
    %v2784 = vadd.f32 %v2719, %v2768
    %v2785 = vadd.f32 %v2720, %v2769
    %v2786 = vadd.f32 %v2721, %v2770
    %v2787 = vadd.f32 %v2722, %v2771
    %v2788 = vadd.f32 %v2723, %v2772
    %v2789 = vadd.f32 %v2724, %v2773
    %v2790 = vadd.f32 %v2725, %v2774
    %v2791 = vadd.f32 %v2726, %v2775
    %v2792 = vadd.f32 %v2727, %v2776
    %v2793 = vadd.f32 %v2728, %v2777
    %v2794 = vadd.f32 %v2729, %v2778
    %v2795 = vadd.f32 %v2730, %v2779
    %v2796 = vadd.f32 %v2731, %v2780
    %s2797 = scalar_lea.vmem [#allocation6], 960
    %v2798 = vld [vmem:[%s2797] sm:$0xf]
    %v2799 = vld [vmem:[%s2797 + $0x4] sm:$0xf]
    %v2800 = vld [vmem:[%s2797 + $0x8] sm:$0xf]
    %v2801 = vld [vmem:[%s2797 + $0xc] sm:$0xf]
    %v2802 = vld [vmem:[%s2797 + $0x10] sm:$0xf]
    %v2803 = vld [vmem:[%s2797 + $0x14] sm:$0xf]
    %v2804 = vld [vmem:[%s2797 + $0x18] sm:$0xf]
    %v2805 = vld [vmem:[%s2797 + $0x1c] sm:$0xf]
    %v2806 = vld [vmem:[%s2797 + $0x20] sm:$0xf]
    %v2807 = vld [vmem:[%s2797 + $0x24] sm:$0xf]
    %v2808 = vld [vmem:[%s2797 + $0x28] sm:$0xf]
    %v2809 = vld [vmem:[%s2797 + $0x2c] sm:$0xf]
    %v2810 = vld [vmem:[%s2797 + $0x30] sm:$0xf]
    %v2811 = vld [vmem:[%s2797 + $0x34] sm:$0xf]
    %v2812 = vld [vmem:[%s2797 + $0x38] sm:$0xf]
    %v2813 = vld [vmem:[%s2797 + $0x3c] sm:$0xf]
    %v2814 = vunpack.c.l.bf16 %v2798
    %v2815 = vunpack.c.l.bf16 %v2799
    %v2816 = vunpack.c.l.bf16 %v2800
    %v2817 = vunpack.c.l.bf16 %v2801
    %v2818 = vunpack.c.l.bf16 %v2802
    %v2819 = vunpack.c.l.bf16 %v2803
    %v2820 = vunpack.c.l.bf16 %v2804
    %v2821 = vunpack.c.l.bf16 %v2805
    %v2822 = vunpack.c.l.bf16 %v2806
    %v2823 = vunpack.c.l.bf16 %v2807
    %v2824 = vunpack.c.l.bf16 %v2808
    %v2825 = vunpack.c.l.bf16 %v2809
    %v2826 = vunpack.c.l.bf16 %v2810
    %v2827 = vunpack.c.l.bf16 %v2811
    %v2828 = vunpack.c.l.bf16 %v2812
    %v2829 = vunpack.c.l.bf16 %v2813
    %v2830 = vmul.f32 %v337, %v2814
    %v2831 = vmul.f32 %v337, %v2815
    %v2832 = vmul.f32 %v337, %v2816
    %v2833 = vmul.f32 %v337, %v2817
    %v2834 = vmul.f32 %v337, %v2818
    %v2835 = vmul.f32 %v337, %v2819
    %v2836 = vmul.f32 %v337, %v2820
    %v2837 = vmul.f32 %v337, %v2821
    %v2838 = vmul.f32 %v337, %v2822
    %v2839 = vmul.f32 %v337, %v2823
    %v2840 = vmul.f32 %v337, %v2824
    %v2841 = vmul.f32 %v337, %v2825
    %v2842 = vmul.f32 %v337, %v2826
    %v2843 = vmul.f32 %v337, %v2827
    %v2844 = vmul.f32 %v337, %v2828
    %v2845 = vmul.f32 %v337, %v2829
    %v2846 = vadd.f32 %v2781, %v2830
    %v2847 = vadd.f32 %v2782, %v2831
    %v2848 = vadd.f32 %v2783, %v2832
    %v2849 = vadd.f32 %v2784, %v2833
    %v2850 = vadd.f32 %v2785, %v2834
    %v2851 = vadd.f32 %v2786, %v2835
    %v2852 = vadd.f32 %v2787, %v2836
    %v2853 = vadd.f32 %v2788, %v2837
    %v2854 = vadd.f32 %v2789, %v2838
    %v2855 = vadd.f32 %v2790, %v2839
    %v2856 = vadd.f32 %v2791, %v2840
    %v2857 = vadd.f32 %v2792, %v2841
    %v2858 = vadd.f32 %v2793, %v2842
    %v2859 = vadd.f32 %v2794, %v2843
    %v2860 = vadd.f32 %v2795, %v2844
    %v2861 = vadd.f32 %v2796, %v2845
    %2862 = vset.pattern.permute.xlu0 3
    %2863 = vperm.xlu0 %2862, %v1583
    %v2864 = vpop.permute.xlu0 %2863
    %2866 = vset.pattern.permute.xlu0 3
    %2867 = vperm.xlu0 %2866, %v1584
    %v2868 = vpop.permute.xlu0 %2867
    %2870 = vset.pattern.permute.xlu0 3
    %2871 = vperm.xlu0 %2870, %v1585
    %v2872 = vpop.permute.xlu0 %2871
    %2874 = vset.pattern.permute.xlu0 3
    %2875 = vperm.xlu0 %2874, %v1586
    %v2876 = vpop.permute.xlu0 %2875
    %2878 = vset.pattern.permute.xlu0 3
    %2879 = vperm.xlu0 %2878, %v1587
    %v2880 = vpop.permute.xlu0 %2879
    %2882 = vset.pattern.permute.xlu0 3
    %2883 = vperm.xlu0 %2882, %v1588
    %v2884 = vpop.permute.xlu0 %2883
    %2886 = vset.pattern.permute.xlu0 3
    %2887 = vperm.xlu0 %2886, %v1589
    %v2888 = vpop.permute.xlu0 %2887
    %2890 = vset.pattern.permute.xlu0 3
    %2891 = vperm.xlu0 %2890, %v1590
    %v2892 = vpop.permute.xlu0 %2891
    %2894 = vset.pattern.permute.xlu0 3
    %2895 = vperm.xlu0 %2894, %v1591
    %v2896 = vpop.permute.xlu0 %2895
    %2898 = vset.pattern.permute.xlu0 3
    %2899 = vperm.xlu0 %2898, %v1592
    %v2900 = vpop.permute.xlu0 %2899
    %2902 = vset.pattern.permute.xlu0 3
    %2903 = vperm.xlu0 %2902, %v1593
    %v2904 = vpop.permute.xlu0 %2903
    %2906 = vset.pattern.permute.xlu0 3
    %2907 = vperm.xlu0 %2906, %v1594
    %v2908 = vpop.permute.xlu0 %2907
    %2910 = vset.pattern.permute.xlu0 3
    %2911 = vperm.xlu0 %2910, %v1595
    %v2912 = vpop.permute.xlu0 %2911
    %2914 = vset.pattern.permute.xlu0 3
    %2915 = vperm.xlu0 %2914, %v1596
    %v2916 = vpop.permute.xlu0 %2915
    %2918 = vset.pattern.permute.xlu0 3
    %2919 = vperm.xlu0 %2918, %v1597
    %v2920 = vpop.permute.xlu0 %2919
    %2922 = vset.pattern.permute.xlu0 3
    %2923 = vperm.xlu0 %2922, %v1598
    %v2924 = vpop.permute.xlu0 %2923
    %v2926 = vmul.f32 %v2846, %v2864
    %v2927 = vmul.f32 %v2847, %v2868
    %v2928 = vmul.f32 %v2848, %v2872
    %v2929 = vmul.f32 %v2849, %v2876
    %v2930 = vmul.f32 %v2850, %v2880
    %v2931 = vmul.f32 %v2851, %v2884
    %v2932 = vmul.f32 %v2852, %v2888
    %v2933 = vmul.f32 %v2853, %v2892
    %v2934 = vmul.f32 %v2854, %v2896
    %v2935 = vmul.f32 %v2855, %v2900
    %v2936 = vmul.f32 %v2856, %v2904
    %v2937 = vmul.f32 %v2857, %v2908
    %v2938 = vmul.f32 %v2858, %v2912
    %v2939 = vmul.f32 %v2859, %v2916
    %v2940 = vmul.f32 %v2860, %v2920
    %v2941 = vmul.f32 %v2861, %v2924
    %v2942 = vadd.f32 %v2602, %v2926
    %v2943 = vadd.f32 %v2603, %v2927
    %v2944 = vadd.f32 %v2604, %v2928
    %v2945 = vadd.f32 %v2605, %v2929
    %v2946 = vadd.f32 %v2606, %v2930
    %v2947 = vadd.f32 %v2607, %v2931
    %v2948 = vadd.f32 %v2608, %v2932
    %v2949 = vadd.f32 %v2609, %v2933
    %v2950 = vadd.f32 %v2610, %v2934
    %v2951 = vadd.f32 %v2611, %v2935
    %v2952 = vadd.f32 %v2612, %v2936
    %v2953 = vadd.f32 %v2613, %v2937
    %v2954 = vadd.f32 %v2614, %v2938
    %v2955 = vadd.f32 %v2615, %v2939
    %v2956 = vadd.f32 %v2616, %v2940
    %v2957 = vadd.f32 %v2617, %v2941
    %v2958 = vsel %vm1486, %v1583, 0.0
    %2959 = vadd.xlane.f32.xlu0 %v2958
    %v2960 = vpop.xlane.xlu0 %2959
    %v2961 = vsel %vm1486, %v1584, 0.0
    %2962 = vadd.xlane.f32.xlu0 %v2961
    %v2963 = vpop.xlane.xlu0 %2962
    %v2964 = vsel %vm1486, %v1585, 0.0
    %2965 = vadd.xlane.f32.xlu0 %v2964
    %v2966 = vpop.xlane.xlu0 %2965
    %v2967 = vsel %vm1486, %v1586, 0.0
    %2968 = vadd.xlane.f32.xlu0 %v2967
    %v2969 = vpop.xlane.xlu0 %2968
    %v2970 = vsel %vm1486, %v1587, 0.0
    %2971 = vadd.xlane.f32.xlu0 %v2970
    %v2972 = vpop.xlane.xlu0 %2971
    %v2973 = vsel %vm1486, %v1588, 0.0
    %2974 = vadd.xlane.f32.xlu0 %v2973
    %v2975 = vpop.xlane.xlu0 %2974
    %v2976 = vsel %vm1486, %v1589, 0.0
    %2977 = vadd.xlane.f32.xlu0 %v2976
    %v2978 = vpop.xlane.xlu0 %2977
    %v2979 = vsel %vm1486, %v1590, 0.0
    %2980 = vadd.xlane.f32.xlu0 %v2979
    %v2981 = vpop.xlane.xlu0 %2980
    %v2982 = vsel %vm1486, %v1591, 0.0
    %2983 = vadd.xlane.f32.xlu0 %v2982
    %v2984 = vpop.xlane.xlu0 %2983
    %v2985 = vsel %vm1486, %v1592, 0.0
    %2986 = vadd.xlane.f32.xlu0 %v2985
    %v2987 = vpop.xlane.xlu0 %2986
    %v2988 = vsel %vm1486, %v1593, 0.0
    %2989 = vadd.xlane.f32.xlu0 %v2988
    %v2990 = vpop.xlane.xlu0 %2989
    %v2991 = vsel %vm1486, %v1594, 0.0
    %2992 = vadd.xlane.f32.xlu0 %v2991
    %v2993 = vpop.xlane.xlu0 %2992
    %v2994 = vsel %vm1486, %v1595, 0.0
    %2995 = vadd.xlane.f32.xlu0 %v2994
    %v2996 = vpop.xlane.xlu0 %2995
    %v2997 = vsel %vm1486, %v1596, 0.0
    %2998 = vadd.xlane.f32.xlu0 %v2997
    %v2999 = vpop.xlane.xlu0 %2998
    %v3000 = vsel %vm1486, %v1597, 0.0
    %3001 = vadd.xlane.f32.xlu0 %v3000
    %v3002 = vpop.xlane.xlu0 %3001
    %v3003 = vsel %vm1486, %v1598, 0.0
    %3004 = vadd.xlane.f32.xlu0 %v3003
    %v3005 = vpop.xlane.xlu0 %3004
    %v3006 = vmax.f32 %v2960, 1.0
    %v3007 = vmax.f32 %v2963, 1.0
    %v3008 = vmax.f32 %v2966, 1.0
    %v3009 = vmax.f32 %v2969, 1.0
    %v3010 = vmax.f32 %v2972, 1.0
    %v3011 = vmax.f32 %v2975, 1.0
    %v3012 = vmax.f32 %v2978, 1.0
    %v3013 = vmax.f32 %v2981, 1.0
    %v3014 = vmax.f32 %v2984, 1.0
    %v3015 = vmax.f32 %v2987, 1.0
    %v3016 = vmax.f32 %v2990, 1.0
    %v3017 = vmax.f32 %v2993, 1.0
    %v3018 = vmax.f32 %v2996, 1.0
    %v3019 = vmax.f32 %v2999, 1.0
    %v3020 = vmax.f32 %v3002, 1.0
    %v3021 = vmax.f32 %v3005, 1.0
    %v3022 = vrcp.pop %v3006
    %v3023 = vrcp.pop %v3007
    %v3024 = vrcp.pop %v3008
    %v3025 = vrcp.pop %v3009
    %v3026 = vrcp.pop %v3010
    %v3027 = vrcp.pop %v3011
    %v3028 = vrcp.pop %v3012
    %v3029 = vrcp.pop %v3013
    %v3030 = vrcp.pop %v3014
    %v3031 = vrcp.pop %v3015
    %v3032 = vrcp.pop %v3016
    %v3033 = vrcp.pop %v3017
    %v3034 = vrcp.pop %v3018
    %v3035 = vrcp.pop %v3019
    %v3036 = vrcp.pop %v3020
    %v3037 = vrcp.pop %v3021
    %v3038 = vmul.f32 %v2942, %v3022
    %v3039 = vmul.f32 %v2943, %v3023
    %v3040 = vmul.f32 %v2944, %v3024
    %v3041 = vmul.f32 %v2945, %v3025
    %v3042 = vmul.f32 %v2946, %v3026
    %v3043 = vmul.f32 %v2947, %v3027
    %v3044 = vmul.f32 %v2948, %v3028
    %v3045 = vmul.f32 %v2949, %v3029
    %v3046 = vmul.f32 %v2950, %v3030
    %v3047 = vmul.f32 %v2951, %v3031
    %v3048 = vmul.f32 %v2952, %v3032
    %v3049 = vmul.f32 %v2953, %v3033
    %v3050 = vmul.f32 %v2954, %v3034
    %v3051 = vmul.f32 %v2955, %v3035
    %v3052 = vmul.f32 %v2956, %v3036
    %v3053 = vmul.f32 %v2957, %v3037
    %v3054 = vsub.f32 %v1567, %v3038
    %v3055 = vsub.f32 %v1568, %v3039
    %v3056 = vsub.f32 %v1569, %v3040
    %v3057 = vsub.f32 %v1570, %v3041
    %v3058 = vsub.f32 %v1571, %v3042
    %v3059 = vsub.f32 %v1572, %v3043
    %v3060 = vsub.f32 %v1573, %v3044
    %v3061 = vsub.f32 %v1574, %v3045
    %v3062 = vsub.f32 %v1575, %v3046
    %v3063 = vsub.f32 %v1576, %v3047
    %v3064 = vsub.f32 %v1577, %v3048
    %v3065 = vsub.f32 %v1578, %v3049
    %v3066 = vsub.f32 %v1579, %v3050
    %v3067 = vsub.f32 %v1580, %v3051
    %v3068 = vsub.f32 %v1581, %v3052
    %v3069 = vsub.f32 %v1582, %v3053
    %v3070 = vld [vmem:[#allocation12] sm:$0xff]
    %v3071 = vld [vmem:[#allocation12 + $0x8] sm:$0xff]
    %v3072 = vld [vmem:[#allocation12 + $0x10] sm:$0xff]
    %v3073 = vld [vmem:[#allocation12 + $0x18] sm:$0xff]
    %vm3074 = vcmask 261120
    %v3076 = vsel %vm3074, %v3054, 0
    %v3079 = vsel %vm3074, %v3055, 0
    %v3082 = vsel %vm3074, %v3056, 0
    %v3085 = vsel %vm3074, %v3057, 0
    %v3088 = vsel %vm3074, %v3058, 0
    %v3091 = vsel %vm3074, %v3059, 0
    %v3094 = vsel %vm3074, %v3060, 0
    %v3097 = vsel %vm3074, %v3061, 0
    %v3100 = vsel %vm3074, %v3062, 0
    %v3103 = vsel %vm3074, %v3063, 0
    %v3106 = vsel %vm3074, %v3064, 0
    %v3109 = vsel %vm3074, %v3065, 0
    %v3112 = vsel %vm3074, %v3066, 0
    %v3115 = vsel %vm3074, %v3067, 0
    %v3118 = vsel %vm3074, %v3068, 0
    %v3121 = vsel %vm3074, %v3069, 0
    %3123 = vmatprep.subr.mxu0 0.0
    %3124 = vmatpush1.msra.mxu0 %v3070
    %3125 = vmatprep.subr.mxu0 0.0
    %3126 = vmatpush1.msra.mxu0 %v3071
    %3127 = vmatprep.subr.mxu0 0.0
    %3128 = vmatpush1.msra.mxu0 %v3072
    %3129 = vmatprep.subr.mxu0 0.0
    %3130 = vmatpush1.msra.mxu0 %v3073
    %3131 = vmatprep.subr.mxu0 0.0
    %3132 = vmatpush1.msra.mxu0 0.0
    %3133 = vmatprep.subr.mxu0 0.0
    %3134 = vmatpush1.msra.mxu0 0.0
    %3135 = vmatprep.subr.mxu0 0.0
    %3136 = vmatpush1.msra.mxu0 0.0
    %3137 = vmatprep.subr.mxu0 0.0
    %3138 = vmatpush1.msra.mxu0 0.0
    %3139 = vmatprep.subr.mxu0 0.0
    %3140 = vmatpush1.msra.mxu0 0.0
    %3141 = vmatprep.subr.mxu0 0.0
    %3142 = vmatpush1.msra.mxu0 0.0
    %3143 = vmatprep.subr.mxu0 0.0
    %3144 = vmatpush1.msra.mxu0 0.0
    %3145 = vmatprep.subr.mxu0 0.0
    %3146 = vmatpush1.msra.mxu0 0.0
    %3147 = vmatprep.subr.mxu0 0.0
    %3148 = vmatpush1.msra.mxu0 0.0
    %3149 = vmatprep.subr.mxu0 0.0
    %3150 = vmatpush1.msra.mxu0 0.0
    %3151 = vmatprep.subr.mxu0 0.0
    %3152 = vmatpush1.msra.mxu0 0.0
    %3153 = vmatprep.subr.mxu0 0.0
    %3154 = vmatpush1.msra.mxu0 0.0
    %3155 = vmatprep.subr.mxu0 0.0
    %3156 = vmatpush1.msra.mxu0 0.0
    %3157 = vmatprep.subr.mxu0 0.0
    %3158 = vmatpush1.msra.mxu0 0.0
    %3159 = vmatprep.subr.mxu0 0.0
    %3160 = vmatpush1.msra.mxu0 0.0
    %3161 = vmatprep.subr.mxu0 0.0
    %3162 = vmatpush1.msra.mxu0 0.0
    %3163 = vmatprep.subr.mxu0 0.0
    %3164 = vmatpush1.msra.mxu0 0.0
    %3165 = vmatprep.subr.mxu0 0.0
    %3166 = vmatpush1.msra.mxu0 0.0
    %3167 = vmatprep.subr.mxu0 0.0
    %3168 = vmatpush1.msra.mxu0 0.0
    %3169 = vmatprep.subr.mxu0 0.0
    %3170 = vmatpush1.msra.mxu0 0.0
    %3171 = vmatprep.subr.mxu0 0.0
    %3172 = vmatpush1.msra.mxu0 0.0
    %3173 = vmatprep.subr.mxu0 0.0
    %3174 = vmatpush1.msra.mxu0 0.0
    %3175 = vmatprep.subr.mxu0 0.0
    %3176 = vmatpush1.msra.mxu0 0.0
    %3177 = vmatprep.subr.mxu0 0.0
    %3178 = vmatpush1.msra.mxu0 0.0
    %3179 = vmatprep.subr.mxu0 0.0
    %3180 = vmatpush1.msra.mxu0 0.0
    %3181 = vmatprep.subr.mxu0 0.0
    %3182 = vmatpush1.msra.mxu0 0.0
    %3183 = vmatprep.subr.mxu0 0.0
    %3184 = vmatpush1.msra.mxu0 0.0
    %3185 = vmatprep.subr.mxu0 0.0
    %3186 = vmatpush1.msra.mxu0 0.0
    %3187 = vmatprep.mubr.f32.mxu0 0.0
    %3188 = vmatmul.mubr.f32.gmra.mrb[0].mxu0 %v3076
    %v3189 = vpop.f32.mrb[0].mxu0
    %v3190 = vadd.f32 0.0, %v3189
    %v3191 = vpop.f32.mrb[0].mxu0
    %3192 = vmatprep.mubr.f32.mxu0 0.0
    %3193 = vmatmul.mubr.f32.gmra.mrb[0].mxu0 %v3079
    %v3194 = vpop.f32.mrb[0].mxu0
    %v3195 = vadd.f32 0.0, %v3194
    %v3196 = vpop.f32.mrb[0].mxu0
    %3197 = vmatprep.mubr.f32.mxu0 0.0
    %3198 = vmatmul.mubr.f32.gmra.mrb[0].mxu0 %v3082
    %v3199 = vpop.f32.mrb[0].mxu0
    %v3200 = vadd.f32 0.0, %v3199
    %v3201 = vpop.f32.mrb[0].mxu0
    %3202 = vmatprep.mubr.f32.mxu0 0.0
    %3203 = vmatmul.mubr.f32.gmra.mrb[0].mxu0 %v3085
    %v3204 = vpop.f32.mrb[0].mxu0
    %v3205 = vadd.f32 0.0, %v3204
    %v3206 = vpop.f32.mrb[0].mxu0
    %3207 = vmatprep.mubr.f32.mxu0 0.0
    %3208 = vmatmul.mubr.f32.gmra.mrb[0].mxu0 %v3088
    %v3209 = vpop.f32.mrb[0].mxu0
    %v3210 = vadd.f32 0.0, %v3209
    %v3211 = vpop.f32.mrb[0].mxu0
    %3212 = vmatprep.mubr.f32.mxu0 0.0
    %3213 = vmatmul.mubr.f32.gmra.mrb[0].mxu0 %v3091
    %v3214 = vpop.f32.mrb[0].mxu0
    %v3215 = vadd.f32 0.0, %v3214
    %v3216 = vpop.f32.mrb[0].mxu0
    %3217 = vmatprep.mubr.f32.mxu0 0.0
    %3218 = vmatmul.mubr.f32.gmra.mrb[0].mxu0 %v3094
    %v3219 = vpop.f32.mrb[0].mxu0
    %v3220 = vadd.f32 0.0, %v3219
    %v3221 = vpop.f32.mrb[0].mxu0
    %3222 = vmatprep.mubr.f32.mxu0 0.0
    %3223 = vmatmul.mubr.f32.gmra.mrb[0].mxu0 %v3097
    %v3224 = vpop.f32.mrb[0].mxu0
    %v3225 = vadd.f32 0.0, %v3224
    %v3226 = vpop.f32.mrb[0].mxu0
    %3227 = vmatprep.mubr.f32.mxu0 0.0
    %3228 = vmatmul.mubr.f32.gmra.mrb[0].mxu0 %v3100
    %v3229 = vpop.f32.mrb[0].mxu0
    %v3230 = vadd.f32 0.0, %v3229
    %v3231 = vpop.f32.mrb[0].mxu0
    %3232 = vmatprep.mubr.f32.mxu0 0.0
    %3233 = vmatmul.mubr.f32.gmra.mrb[0].mxu0 %v3103
    %v3234 = vpop.f32.mrb[0].mxu0
    %v3235 = vadd.f32 0.0, %v3234
    %v3236 = vpop.f32.mrb[0].mxu0
    %3237 = vmatprep.mubr.f32.mxu0 0.0
    %3238 = vmatmul.mubr.f32.gmra.mrb[0].mxu0 %v3106
    %v3239 = vpop.f32.mrb[0].mxu0
    %v3240 = vadd.f32 0.0, %v3239
    %v3241 = vpop.f32.mrb[0].mxu0
    %3242 = vmatprep.mubr.f32.mxu0 0.0
    %3243 = vmatmul.mubr.f32.gmra.mrb[0].mxu0 %v3109
    %v3244 = vpop.f32.mrb[0].mxu0
    %v3245 = vadd.f32 0.0, %v3244
    %v3246 = vpop.f32.mrb[0].mxu0
    %3247 = vmatprep.mubr.f32.mxu0 0.0
    %3248 = vmatmul.mubr.f32.gmra.mrb[0].mxu0 %v3112
    %v3249 = vpop.f32.mrb[0].mxu0
    %v3250 = vadd.f32 0.0, %v3249
    %v3251 = vpop.f32.mrb[0].mxu0
    %3252 = vmatprep.mubr.f32.mxu0 0.0
    %3253 = vmatmul.mubr.f32.gmra.mrb[0].mxu0 %v3115
    %v3254 = vpop.f32.mrb[0].mxu0
    %v3255 = vadd.f32 0.0, %v3254
    %v3256 = vpop.f32.mrb[0].mxu0
    %3257 = vmatprep.mubr.f32.mxu0 0.0
    %3258 = vmatmul.mubr.f32.gmra.mrb[0].mxu0 %v3118
    %v3259 = vpop.f32.mrb[0].mxu0
    %v3260 = vadd.f32 0.0, %v3259
    %v3261 = vpop.f32.mrb[0].mxu0
    %3262 = vmatprep.mubr.f32.mxu0 0.0
    %3263 = vmatmul.mubr.f32.gmra.mrb[0].mxu0 %v3121
    %v3264 = vpop.f32.mrb[0].mxu0
    %v3265 = vadd.f32 0.0, %v3264
    %v3266 = vpop.f32.mrb[0].mxu0
    %3267 = vdwg.mxu0
    %3268 = vst [vmem:[#allocation13] sm:$0xff] %v3190
    %3269 = vst [vmem:[#allocation13 + $0x8] sm:$0xff] %v3195
    %3270 = vst [vmem:[#allocation13 + $0x10] sm:$0xff] %v3200
    %3271 = vst [vmem:[#allocation13 + $0x18] sm:$0xff] %v3205
    %3272 = vst [vmem:[#allocation13 + $0x20] sm:$0xff] %v3210
    %3273 = vst [vmem:[#allocation13 + $0x28] sm:$0xff] %v3215
    %3274 = vst [vmem:[#allocation13 + $0x30] sm:$0xff] %v3220
    %3275 = vst [vmem:[#allocation13 + $0x38] sm:$0xff] %v3225
    %3276 = vst [vmem:[#allocation13 + $0x40] sm:$0xff] %v3230
    %3277 = vst [vmem:[#allocation13 + $0x48] sm:$0xff] %v3235
    %3278 = vst [vmem:[#allocation13 + $0x50] sm:$0xff] %v3240
    %3279 = vst [vmem:[#allocation13 + $0x58] sm:$0xff] %v3245
    %3280 = vst [vmem:[#allocation13 + $0x60] sm:$0xff] %v3250
    %3281 = vst [vmem:[#allocation13 + $0x68] sm:$0xff] %v3255
    %3282 = vst [vmem:[#allocation13 + $0x70] sm:$0xff] %v3260
    %3283 = vst [vmem:[#allocation13 + $0x78] sm:$0xff] %v3265
    // Predicated region
    $region50: #{tpu_custom_call.1} parent=1 // pred_check
      _
    $region51: #{tpu_custom_call.1} parent=1 // pred_check_branch
      %3285 = sbr.rel (0) target = $region53
    $region52: #{tpu_custom_call.1} parent=1 // pred_region
      %s3287 = ssub.s32 2048, 2048
      %3288 = vsyncadd [#allocation4], %s3287
      %s3289 = sshll.u32 [#allocation13], 4
      %s3290 = int_to_ptr.vmem [resolvable:$true] %s3289
      %3295 = dma.vmem_to_hbm [thread:$0]  %s3290, 2048, %s6, [#allocation4], 128, 128, 8
    $region53: #{tpu_custom_call.1} parent=1 // pred_fallthru
      _
    // Predicated region
    $region54: #{tpu_custom_call.1} parent=1 // pred_check
      _
    $region55: #{tpu_custom_call.1} parent=1 // pred_check_branch
      %3297 = sbr.rel (0) target = $region57
    $region56: #{tpu_custom_call.1} parent=1 // pred_region
      %3298 = dma.done [#allocation4], 2048
    $region57: #{tpu_custom_call.1} parent=1 // pred_fallthru
      _
    %3299 = vsyncpa [#allocation3], 1
    %3300 = vsyncpa [#allocation8], 1
    %3301 = vsyncpa [#allocation11], 1
    %3302 = vsyncpa [#allocation4], 1
    %3303 = vsyncpa [#allocation5], 1

</llo_original>
